<compile_context>
chip_gen: v7x
topology: tpu7x:2x2x1
jax: 0.10.0
libtpu: 0.0.40
codegen_flags: <defaults>
</compile_context>

<pallas_src>
import functools

import jax
import jax.numpy as jnp
from jax import lax
from jax.experimental import pallas as pl
from jax.experimental.pallas import tpu as pltpu


def _round_up(a, b):
    return (a + b - 1) // b * b


# ----------------------------- fused Pallas kernel -----------------------------

def _spatial_attention_kernel(x_ref, w1_ref, b1_ref, w2_ref, b2_ref, o_ref, pad_ref,
                              *, Nb, C, H, W, K, pad, Wr):
    """Processes Nb batch elements per grid step.

    x_ref  : (Nb, C, H, W)    input block, native dtype (VMEM)
    w1_ref : (2*2*K*K,)       conv1 weight, OIHW flattened (SMEM)
    b1_ref : (2,)             conv1 bias (SMEM)
    w2_ref : (2,)             conv2 (1x1) weight, OIHW flattened (SMEM)
    b2_ref : (1,)             conv2 bias (SMEM)
    o_ref  : (Nb, 1, H, W)    output block, f32 (VMEM)
    pad_ref: (Nb, 2, Hp, Wr)  zero-halo scratch, f32 (VMEM), Wr = round_up(W+2*pad, 128)
    """
    Hp = H + 2 * pad
    KK = K * K

    # --- halo-only zeroing (every step: interior is overwritten below) -------------
    if pad > 0:
        pad_ref[:, :, 0:pad, :] = jnp.zeros((Nb, 2, pad, Wr), jnp.float32)
        pad_ref[:, :, pad + H:Hp, :] = jnp.zeros((Nb, 2, pad, Wr), jnp.float32)
        pad_ref[:, :, pad:pad + H, 0:pad] = jnp.zeros((Nb, 2, H, pad), jnp.float32)
        pad_ref[:, :, pad:pad + H, pad + W:pad + W + pad] = jnp.zeros(
            (Nb, 2, H, pad), jnp.float32)

    inv_c = jnp.float32(1.0 / C)
    CHUNK = 8                                  # sublane-aligned channel chunk
    n_chunks = C // CHUNK
    rem = C - n_chunks * CHUNK

    for b in range(Nb):                        # static unroll; Nb is kept small
        # --- single-pass channel max + sum (x read once from VMEM) -----------------
        def _reduce_chunk(c0, size, carry):
            m, s = carry
            v = x_ref[b, pl.ds(c0, size), :, :].astype(jnp.float32)   # (size, H, W)
            m = jnp.maximum(m, jnp.max(v, axis=0))
            s = s + jnp.sum(v, axis=0)
            return m, s

        carry = (jnp.full((H, W), -jnp.inf, jnp.float32),
                 jnp.zeros((H, W), jnp.float32))
        if n_chunks > 0:
            carry = lax.fori_loop(
                0, n_chunks,
                lambda i, c: _reduce_chunk(pl.multiple_of(i * CHUNK, CHUNK), CHUNK, c),
                carry, unroll=min(n_chunks, 4))
        if rem > 0:
            carry = _reduce_chunk(n_chunks * CHUNK, rem, carry)
        ch_max, ch_sum = carry
        ch_avg = ch_sum * inv_c

        # --- write interior of the zero-halo scratch (= torch.cat([max, avg], 1)) --
        pad_ref[b, 0, pad:pad + H, pad:pad + W] = ch_max
        pad_ref[b, 1, pad:pad + H, pad:pad + W] = ch_avg

        # --- conv1: 7x7, Cin=2, Cout=2 -> direct VPU conv ---------------------------
        # Row bands are loaded once per (ci, ky); lane windows are value slices
        # shared by both output-channel accumulators (two independent FMA chains).
        acc0 = jnp.zeros((H, W), jnp.float32)
        acc1 = jnp.zeros((H, W), jnp.float32)
        for ci in range(2):
            base0 = (0 * 2 + ci) * KK
            base1 = (1 * 2 + ci) * KK
            for ky in range(K):
                band = pad_ref[b, ci, ky:ky + H, :]        # (H, Wr) lane-dense load
                for kx in range(K):
                    win = band[:, kx:kx + W]               # (H, W)
                    idx = ky * K + kx
                    acc0 = acc0 + w1_ref[base0 + idx] * win
                    acc1 = acc1 + w1_ref[base1 + idx] * win

        # --- bias + ReLU, 1x1 conv + bias, sigmoid via single EUP tanh --------------
        h0 = jnp.maximum(acc0 + b1_ref[0], 0.0)
        h1 = jnp.maximum(acc1 + b1_ref[1], 0.0)
        z = w2_ref[0] * h0 + w2_ref[1] * h1 + b2_ref[0]
        o_ref[b, 0] = 0.5 * jnp.tanh(0.5 * z) + 0.5        # == sigmoid(z), exact


# -------------------------- block-size / VMEM budgeting --------------------------

def _choose_block_n(N, in_bytes_per_n, out_bytes_per_n, scratch_bytes_per_n):
    """How many batch elements to process per grid step."""
    target = 1 << 20                              # aim for ~1 MiB input blocks
    nb = max(1, min(N, target // max(1, in_bytes_per_n)))
    nb = min(nb, 8)                               # cap the static unroll / code size
    if N >= 2:
        nb = min(nb, max(1, N // 2))              # keep grid length >= 2 (v7x megacore)
    # Budget: 2x double-buffered in/out blocks + scratch, with headroom under the
    # smallest default scoped VMEM limit across generations (v7x: 32 MiB).
    budget = 24 << 20

    def need(nb_):
        return (2 * nb_ * in_bytes_per_n + 2 * nb_ * out_bytes_per_n
                + nb_ * scratch_bytes_per_n)

    while nb > 1 and need(nb) > budget:
        nb -= 1
    while N % nb:
        nb -= 1
    return nb, need(nb)


# ----------------------------------- wrapper -------------------------------------

def spatial_attention_forward(x, params):
    """x: (N, C, H, W), float dtype (NCHW, like the PyTorch module). Returns (N,1,H,W) f32."""
    N, C, H, W = x.shape
    K = int(params['conv1_w'].shape[-1])          # 7
    pad = K // 2
    Hp = H + 2 * pad
    Wr = _round_up(W + 2 * pad, 128)              # lane-aligned halo scratch width

    w1 = params['conv1_w'].astype(jnp.float32).reshape(-1)   # (2*2*K*K,)
    b1 = params['conv1_b'].astype(jnp.float32)               # (2,)
    w2 = params['conv2_w'].astype(jnp.float32).reshape(-1)   # (2,)
    b2 = params['conv2_b'].astype(jnp.float32)               # (1,)

    itemsize = jnp.dtype(x.dtype).itemsize
    in_bytes_per_n = C * H * W * itemsize
    out_bytes_per_n = H * W * 4
    scratch_bytes_per_n = 2 * Hp * Wr * 4
    Nb, vmem_need = _choose_block_n(N, in_bytes_per_n, out_bytes_per_n,
                                    scratch_bytes_per_n)
    grid = (N // Nb,)
    vmem_limit = int(min(32 << 20, max(2 * vmem_need, 16 << 20)))

    flops_per_n = (2 * C * H * W                  # fused channel max + sum
                   + 2 * 2 * 2 * K * K * H * W    # conv1 (mul+add, 2 Cout, 2 Cin)
                   + 4 * H * W                    # bias + relu
                   + 6 * H * W                    # conv2 (1x1) + bias
                   + 4 * H * W)                   # sigmoid arithmetic
    cost = pl.CostEstimate(
        flops=int(N * flops_per_n),
        transcendentals=int(N * H * W),
        bytes_accessed=int(N * in_bytes_per_n + N * out_bytes_per_n
                           + (w1.size + b1.size + w2.size + b2.size) * 4),
    )

    kernel = functools.partial(_spatial_attention_kernel, Nb=Nb, C=C, H=H, W=W,
                               K=K, pad=pad, Wr=Wr)
    return pl.pallas_call(
        kernel,
        out_shape=jax.ShapeDtypeStruct((N, 1, H, W), jnp.float32),
        grid=grid,
        in_specs=[
            pl.BlockSpec((Nb, C, H, W), lambda n: (n, 0, 0, 0)),
            pl.BlockSpec(memory_space=pltpu.MemorySpace.SMEM),   # w1
            pl.BlockSpec(memory_space=pltpu.MemorySpace.SMEM),   # b1
            pl.BlockSpec(memory_space=pltpu.MemorySpace.SMEM),   # w2
            pl.BlockSpec(memory_space=pltpu.MemorySpace.SMEM),   # b2
        ],
        out_specs=pl.BlockSpec((Nb, 1, H, W), lambda n: (n, 0, 0, 0)),
        scratch_shapes=[pltpu.VMEM((Nb, 2, Hp, Wr), jnp.float32)],
        compiler_params=pltpu.CompilerParams(
            dimension_semantics=("parallel",),
            vmem_limit_bytes=vmem_limit),
        cost_estimate=cost,
    )(x, w1, b1, w2, b2)          # x stays in its native dtype; upcast in-kernel


# --------------------------- pure-JAX reference (check) -------------------------

def spatial_attention_ref(x, params):
    mx = jnp.max(x, axis=1, keepdims=True)
    av = jnp.mean(x, axis=1, keepdims=True)
    r = jnp.concatenate([mx, av], axis=1)
    y = jax.lax.conv_general_dilated(
        r, params['conv1_w'], (1, 1), ((3, 3), (3, 3)),
        dimension_numbers=('NCHW', 'OIHW', 'NCHW'),
        precision=jax.lax.Precision.HIGHEST)
    y = jnp.maximum(y + params['conv1_b'].reshape(1, -1, 1, 1), 0.0)
    z = jax.lax.conv_general_dilated(
        y, params['conv2_w'], (1, 1), ((0, 0), (0, 0)),
        dimension_numbers=('NCHW', 'OIHW', 'NCHW'),
        precision=jax.lax.Precision.HIGHEST)
    z = z + params['conv2_b'].reshape(1, -1, 1, 1)
    return jax.nn.sigmoid(z)


# ------------------------------ parameter init ----------------------------------

def xavier_uniform(key, cout, cin, k):
    # matches nn.init.xavier_uniform_ on a (cout, cin, k, k) conv weight
    fan_in = cin * k * k
    fan_out = cout * k * k
    bound = (6.0 / (fan_in + fan_out)) ** 0.5
    return jax.random.uniform(key, (cout, cin, k, k), jnp.float32, -bound, bound)


def init_spatial_attention_params(key):
    k1, k2 = jax.random.split(key)
    return {
        'conv1_w': xavier_uniform(k1, 2, 2, 7),            # MetaConv2dLayer(2,2,7,pad=3)
        'conv1_b': jnp.zeros((2,), jnp.float32),
        'conv2_w': xavier_uniform(k2, 1, 2, 1),            # MetaConv2dLayer(2,1,1,pad=0)
        'conv2_b': jnp.zeros((1,), jnp.float32),
    }


# ----------------------------------- main ---------------------------------------

if __name__ == "__main__":
    N, C, H, W = 2, 4, 16, 16
    key = jax.random.PRNGKey(0)
    k_x, k_p = jax.random.split(key)
    x = jax.random.normal(k_x, (N, C, H, W), jnp.float32)   # NCHW, like PyTorch
    params = init_spatial_attention_params(k_p)

    fwd = jax.jit(spatial_attention_forward)
    out = jax.block_until_ready(fwd(x, params))

    assert out.shape == (N, 1, H, W), out.shape
    assert out.dtype == jnp.float32

    ref = spatial_attention_ref(x, params)
    max_err = float(jnp.max(jnp.abs(out - ref)))
    assert max_err < 1e-4, f"mismatch vs reference: {max_err}"

    print("KERNEL_OK")
</pallas_src>

<mosaic_0001>
module attributes {stable_mosaic.version = 11 : i64} {
  func.func @_spatial_attention_kernel(%arg0: i32, %arg1: memref<1x4x16x16xf32, #tpu.memory_space<vmem>>, %arg2: memref<196xf32, #tpu.memory_space<smem>>, %arg3: memref<2xf32, #tpu.memory_space<smem>>, %arg4: memref<2xf32, #tpu.memory_space<smem>>, %arg5: memref<1xf32, #tpu.memory_space<smem>>, %arg6: memref<1x1x16x16xf32, #tpu.memory_space<vmem>>, %arg7: memref<1x2x22x128xf32, #tpu.memory_space<vmem>>) attributes {dimension_semantics = [#tpu.dimension_semantics<parallel>], iteration_bounds = array<i64: 2>, scalar_prefetch = 0 : i64, scratch_operands = 1 : i64, tpu.core_type = #tpu.core_type<tc>, window_params = [{transform_indices = @transform_0, window_bounds = array<i64: 1, 4, 16, 16>}, {transform_indices = @transform_1, window_bounds = array<i64: 196>}, {transform_indices = @transform_2, window_bounds = array<i64: 2>}, {transform_indices = @transform_3, window_bounds = array<i64: 2>}, {transform_indices = @transform_4, window_bounds = array<i64: 1>}, {transform_indices = @transform_5, window_bounds = array<i64: 1, 1, 16, 16>}]} {
    %cst = arith.constant 0.000000e+00 : f32
    %0 = vector.broadcast %cst : f32 to vector<1x2x3x128xf32>
    %c0 = arith.constant 0 : index
    %c0_0 = arith.constant 0 : index
    %c0_1 = arith.constant 0 : index
    %c0_2 = arith.constant 0 : index
    %1 = vector.load %arg7[%c0, %c0_0, %c0_1, %c0_2] : memref<1x2x22x128xf32, #tpu.memory_space<vmem>>, vector<1x2x3x128xf32>
    tpu.vector_store %arg7[%c0, %c0_0, %c0_1, %c0_2], %0 {strides = array<i32>} : memref<1x2x22x128xf32, #tpu.memory_space<vmem>>, vector<1x2x3x128xf32>,
    %cst_3 = arith.constant 0.000000e+00 : f32
    %2 = vector.broadcast %cst_3 : f32 to vector<1x2x3x128xf32>
    %c0_4 = arith.constant 0 : index
    %c0_5 = arith.constant 0 : index
    %c19 = arith.constant 19 : index
    %c0_6 = arith.constant 0 : index
    %3 = vector.load %arg7[%c0_4, %c0_5, %c19, %c0_6] : memref<1x2x22x128xf32, #tpu.memory_space<vmem>>, vector<1x2x3x128xf32>
    tpu.vector_store %arg7[%c0_4, %c0_5, %c19, %c0_6], %2 {strides = array<i32>} : memref<1x2x22x128xf32, #tpu.memory_space<vmem>>, vector<1x2x3x128xf32>,
    %cst_7 = arith.constant 0.000000e+00 : f32
    %4 = vector.broadcast %cst_7 : f32 to vector<1x2x16x3xf32>
    %c0_8 = arith.constant 0 : index
    %c0_9 = arith.constant 0 : index
    %c3 = arith.constant 3 : index
    %c0_10 = arith.constant 0 : index
    %5 = vector.load %arg7[%c0_8, %c0_9, %c3, %c0_10] : memref<1x2x22x128xf32, #tpu.memory_space<vmem>>, vector<1x2x16x3xf32>
    tpu.vector_store %arg7[%c0_8, %c0_9, %c3, %c0_10], %4 {strides = array<i32>} : memref<1x2x22x128xf32, #tpu.memory_space<vmem>>, vector<1x2x16x3xf32>,
    %cst_11 = arith.constant 0.000000e+00 : f32
    %6 = vector.broadcast %cst_11 : f32 to vector<1x2x16x3xf32>
    %c0_12 = arith.constant 0 : index
    %c0_13 = arith.constant 0 : index
    %c3_14 = arith.constant 3 : index
    %c19_15 = arith.constant 19 : index
    %7 = vector.load %arg7[%c0_12, %c0_13, %c3_14, %c19_15] : memref<1x2x22x128xf32, #tpu.memory_space<vmem>>, vector<1x2x16x3xf32>
    tpu.vector_store %arg7[%c0_12, %c0_13, %c3_14, %c19_15], %6 {strides = array<i32>} : memref<1x2x22x128xf32, #tpu.memory_space<vmem>>, vector<1x2x16x3xf32>,
    %cst_16 = arith.constant 0xFF800000 : f32
    %8 = vector.broadcast %cst_16 : f32 to vector<16x16xf32>
    %cst_17 = arith.constant 0.000000e+00 : f32
    %9 = vector.broadcast %cst_17 : f32 to vector<16x16xf32>
    %c0_18 = arith.constant 0 : index
    %c0_19 = arith.constant 0 : index
    %c0_20 = arith.constant 0 : index
    %c0_21 = arith.constant 0 : index
    %10 = vector.load %arg1[%c0_18, %c0_19, %c0_20, %c0_21] : memref<1x4x16x16xf32, #tpu.memory_space<vmem>>, vector<1x4x16x16xf32>
    %11 = vector.shape_cast %10 : vector<1x4x16x16xf32> to vector<4x16x16xf32>
    %cst_22 = arith.constant dense<0xFF800000> : vector<16x16xf32>
    %12 = vector.multi_reduction <maximumf>, %11, %cst_22 [0] : vector<4x16x16xf32> to vector<16x16xf32>
    %13 = arith.maximumf %8, %12 : vector<16x16xf32>
    %cst_23 = arith.constant dense<0.000000e+00> : vector<16x16xf32>
    %14 = vector.multi_reduction <add>, %11, %cst_23 [0] : vector<4x16x16xf32> to vector<16x16xf32>
    %15 = arith.addf %9, %14 : vector<16x16xf32>
    %cst_24 = arith.constant 2.500000e-01 : f32
    %16 = vector.broadcast %cst_24 : f32 to vector<16x16xf32>
    %17 = arith.mulf %15, %16 : vector<16x16xf32>
    %c0_25 = arith.constant 0 : index
    %c0_26 = arith.constant 0 : index
    %c3_27 = arith.constant 3 : index
    %c3_28 = arith.constant 3 : index
    %18 = vector.load %arg7[%c0_25, %c0_26, %c3_27, %c3_28] : memref<1x2x22x128xf32, #tpu.memory_space<vmem>>, vector<1x1x16x16xf32>
    %19 = vector.shape_cast %18 : vector<1x1x16x16xf32> to vector<16x16xf32>
    %20 = vector.shape_cast %13 : vector<16x16xf32> to vector<1x1x16x16xf32>
    tpu.vector_store %arg7[%c0_25, %c0_26, %c3_27, %c3_28], %20 {strides = array<i32>} : memref<1x2x22x128xf32, #tpu.memory_space<vmem>>, vector<1x1x16x16xf32>,
    %c0_29 = arith.constant 0 : index
    %c1 = arith.constant 1 : index
    %c3_30 = arith.constant 3 : index
    %c3_31 = arith.constant 3 : index
    %21 = vector.load %arg7[%c0_29, %c1, %c3_30, %c3_31] : memref<1x2x22x128xf32, #tpu.memory_space<vmem>>, vector<1x1x16x16xf32>
    %22 = vector.shape_cast %21 : vector<1x1x16x16xf32> to vector<16x16xf32>
    %23 = vector.shape_cast %17 : vector<16x16xf32> to vector<1x1x16x16xf32>
    tpu.vector_store %arg7[%c0_29, %c1, %c3_30, %c3_31], %23 {strides = array<i32>} : memref<1x2x22x128xf32, #tpu.memory_space<vmem>>, vector<1x1x16x16xf32>,
    %cst_32 = arith.constant 0.000000e+00 : f32
    %24 = vector.broadcast %cst_32 : f32 to vector<16x16xf32>
    %cst_33 = arith.constant 0.000000e+00 : f32
    %25 = vector.broadcast %cst_33 : f32 to vector<16x16xf32>
    %c0_34 = arith.constant 0 : index
    %c0_35 = arith.constant 0 : index
    %c0_36 = arith.constant 0 : index
    %c0_37 = arith.constant 0 : index
    %26 = vector.load %arg7[%c0_34, %c0_35, %c0_36, %c0_37] : memref<1x2x22x128xf32, #tpu.memory_space<vmem>>, vector<1x1x16x128xf32>
    %27 = vector.shape_cast %26 : vector<1x1x16x128xf32> to vector<16x128xf32>
    %28 = vector.extract_strided_slice %27 {offsets = [0, 0], sizes = [16, 16], strides = [1, 1]} : vector<16x128xf32> to vector<16x16xf32>
    %c0_38 = arith.constant 0 : index
    %29 = memref.load %arg2[%c0_38] : memref<196xf32, #tpu.memory_space<smem>>
    %30 = vector.broadcast %29 : f32 to vector<16x16xf32>
    %31 = arith.mulf %30, %28 : vector<16x16xf32>
    %32 = arith.addf %24, %31 : vector<16x16xf32>
    %c98 = arith.constant 98 : index
    %33 = memref.load %arg2[%c98] : memref<196xf32, #tpu.memory_space<smem>>
    %34 = vector.broadcast %33 : f32 to vector<16x16xf32>
    %35 = arith.mulf %34, %28 : vector<16x16xf32>
    %36 = arith.addf %25, %35 : vector<16x16xf32>
    %37 = vector.extract_strided_slice %27 {offsets = [0, 1], sizes = [16, 16], strides = [1, 1]} : vector<16x128xf32> to vector<16x16xf32>
    %c1_39 = arith.constant 1 : index
    %38 = memref.load %arg2[%c1_39] : memref<196xf32, #tpu.memory_space<smem>>
    %39 = vector.broadcast %38 : f32 to vector<16x16xf32>
    %40 = arith.mulf %39, %37 : vector<16x16xf32>
    %41 = arith.addf %32, %40 : vector<16x16xf32>
    %c99 = arith.constant 99 : index
    %42 = memref.load %arg2[%c99] : memref<196xf32, #tpu.memory_space<smem>>
    %43 = vector.broadcast %42 : f32 to vector<16x16xf32>
    %44 = arith.mulf %43, %37 : vector<16x16xf32>
    %45 = arith.addf %36, %44 : vector<16x16xf32>
    %46 = vector.extract_strided_slice %27 {offsets = [0, 2], sizes = [16, 16], strides = [1, 1]} : vector<16x128xf32> to vector<16x16xf32>
    %c2 = arith.constant 2 : index
    %47 = memref.load %arg2[%c2] : memref<196xf32, #tpu.memory_space<smem>>
    %48 = vector.broadcast %47 : f32 to vector<16x16xf32>
    %49 = arith.mulf %48, %46 : vector<16x16xf32>
    %50 = arith.addf %41, %49 : vector<16x16xf32>
    %c100 = arith.constant 100 : index
    %51 = memref.load %arg2[%c100] : memref<196xf32, #tpu.memory_space<smem>>
    %52 = vector.broadcast %51 : f32 to vector<16x16xf32>
    %53 = arith.mulf %52, %46 : vector<16x16xf32>
    %54 = arith.addf %45, %53 : vector<16x16xf32>
    %55 = vector.extract_strided_slice %27 {offsets = [0, 3], sizes = [16, 16], strides = [1, 1]} : vector<16x128xf32> to vector<16x16xf32>
    %c3_40 = arith.constant 3 : index
    %56 = memref.load %arg2[%c3_40] : memref<196xf32, #tpu.memory_space<smem>>
    %57 = vector.broadcast %56 : f32 to vector<16x16xf32>
    %58 = arith.mulf %57, %55 : vector<16x16xf32>
    %59 = arith.addf %50, %58 : vector<16x16xf32>
    %c101 = arith.constant 101 : index
    %60 = memref.load %arg2[%c101] : memref<196xf32, #tpu.memory_space<smem>>
    %61 = vector.broadcast %60 : f32 to vector<16x16xf32>
    %62 = arith.mulf %61, %55 : vector<16x16xf32>
    %63 = arith.addf %54, %62 : vector<16x16xf32>
    %64 = vector.extract_strided_slice %27 {offsets = [0, 4], sizes = [16, 16], strides = [1, 1]} : vector<16x128xf32> to vector<16x16xf32>
    %c4 = arith.constant 4 : index
    %65 = memref.load %arg2[%c4] : memref<196xf32, #tpu.memory_space<smem>>
    %66 = vector.broadcast %65 : f32 to vector<16x16xf32>
    %67 = arith.mulf %66, %64 : vector<16x16xf32>
    %68 = arith.addf %59, %67 : vector<16x16xf32>
    %c102 = arith.constant 102 : index
    %69 = memref.load %arg2[%c102] : memref<196xf32, #tpu.memory_space<smem>>
    %70 = vector.broadcast %69 : f32 to vector<16x16xf32>
    %71 = arith.mulf %70, %64 : vector<16x16xf32>
    %72 = arith.addf %63, %71 : vector<16x16xf32>
    %73 = vector.extract_strided_slice %27 {offsets = [0, 5], sizes = [16, 16], strides = [1, 1]} : vector<16x128xf32> to vector<16x16xf32>
    %c5 = arith.constant 5 : index
    %74 = memref.load %arg2[%c5] : memref<196xf32, #tpu.memory_space<smem>>
    %75 = vector.broadcast %74 : f32 to vector<16x16xf32>
    %76 = arith.mulf %75, %73 : vector<16x16xf32>
    %77 = arith.addf %68, %76 : vector<16x16xf32>
    %c103 = arith.constant 103 : index
    %78 = memref.load %arg2[%c103] : memref<196xf32, #tpu.memory_space<smem>>
    %79 = vector.broadcast %78 : f32 to vector<16x16xf32>
    %80 = arith.mulf %79, %73 : vector<16x16xf32>
    %81 = arith.addf %72, %80 : vector<16x16xf32>
    %82 = vector.extract_strided_slice %27 {offsets = [0, 6], sizes = [16, 16], strides = [1, 1]} : vector<16x128xf32> to vector<16x16xf32>
    %c6 = arith.constant 6 : index
    %83 = memref.load %arg2[%c6] : memref<196xf32, #tpu.memory_space<smem>>
    %84 = vector.broadcast %83 : f32 to vector<16x16xf32>
    %85 = arith.mulf %84, %82 : vector<16x16xf32>
    %86 = arith.addf %77, %85 : vector<16x16xf32>
    %c104 = arith.constant 104 : index
    %87 = memref.load %arg2[%c104] : memref<196xf32, #tpu.memory_space<smem>>
    %88 = vector.broadcast %87 : f32 to vector<16x16xf32>
    %89 = arith.mulf %88, %82 : vector<16x16xf32>
    %90 = arith.addf %81, %89 : vector<16x16xf32>
    %c0_41 = arith.constant 0 : index
    %c0_42 = arith.constant 0 : index
    %c1_43 = arith.constant 1 : index
    %c0_44 = arith.constant 0 : index
    %91 = vector.load %arg7[%c0_41, %c0_42, %c1_43, %c0_44] : memref<1x2x22x128xf32, #tpu.memory_space<vmem>>, vector<1x1x16x128xf32>
    %92 = vector.shape_cast %91 : vector<1x1x16x128xf32> to vector<16x128xf32>
    %93 = vector.extract_strided_slice %92 {offsets = [0, 0], sizes = [16, 16], strides = [1, 1]} : vector<16x128xf32> to vector<16x16xf32>
    %c7 = arith.constant 7 : index
    %94 = memref.load %arg2[%c7] : memref<196xf32, #tpu.memory_space<smem>>
    %95 = vector.broadcast %94 : f32 to vector<16x16xf32>
    %96 = arith.mulf %95, %93 : vector<16x16xf32>
    %97 = arith.addf %86, %96 : vector<16x16xf32>
    %c105 = arith.constant 105 : index
    %98 = memref.load %arg2[%c105] : memref<196xf32, #tpu.memory_space<smem>>
    %99 = vector.broadcast %98 : f32 to vector<16x16xf32>
    %100 = arith.mulf %99, %93 : vector<16x16xf32>
    %101 = arith.addf %90, %100 : vector<16x16xf32>
    %102 = vector.extract_strided_slice %92 {offsets = [0, 1], sizes = [16, 16], strides = [1, 1]} : vector<16x128xf32> to vector<16x16xf32>
    %c8 = arith.constant 8 : index
    %103 = memref.load %arg2[%c8] : memref<196xf32, #tpu.memory_space<smem>>
    %104 = vector.broadcast %103 : f32 to vector<16x16xf32>
    %105 = arith.mulf %104, %102 : vector<16x16xf32>
    %106 = arith.addf %97, %105 : vector<16x16xf32>
    %c106 = arith.constant 106 : index
    %107 = memref.load %arg2[%c106] : memref<196xf32, #tpu.memory_space<smem>>
    %108 = vector.broadcast %107 : f32 to vector<16x16xf32>
    %109 = arith.mulf %108, %102 : vector<16x16xf32>
    %110 = arith.addf %101, %109 : vector<16x16xf32>
    %111 = vector.extract_strided_slice %92 {offsets = [0, 2], sizes = [16, 16], strides = [1, 1]} : vector<16x128xf32> to vector<16x16xf32>
    %c9 = arith.constant 9 : index
    %112 = memref.load %arg2[%c9] : memref<196xf32, #tpu.memory_space<smem>>
    %113 = vector.broadcast %112 : f32 to vector<16x16xf32>
    %114 = arith.mulf %113, %111 : vector<16x16xf32>
    %115 = arith.addf %106, %114 : vector<16x16xf32>
    %c107 = arith.constant 107 : index
    %116 = memref.load %arg2[%c107] : memref<196xf32, #tpu.memory_space<smem>>
    %117 = vector.broadcast %116 : f32 to vector<16x16xf32>
    %118 = arith.mulf %117, %111 : vector<16x16xf32>
    %119 = arith.addf %110, %118 : vector<16x16xf32>
    %120 = vector.extract_strided_slice %92 {offsets = [0, 3], sizes = [16, 16], strides = [1, 1]} : vector<16x128xf32> to vector<16x16xf32>
    %c10 = arith.constant 10 : index
    %121 = memref.load %arg2[%c10] : memref<196xf32, #tpu.memory_space<smem>>
    %122 = vector.broadcast %121 : f32 to vector<16x16xf32>
    %123 = arith.mulf %122, %120 : vector<16x16xf32>
    %124 = arith.addf %115, %123 : vector<16x16xf32>
    %c108 = arith.constant 108 : index
    %125 = memref.load %arg2[%c108] : memref<196xf32, #tpu.memory_space<smem>>
    %126 = vector.broadcast %125 : f32 to vector<16x16xf32>
    %127 = arith.mulf %126, %120 : vector<16x16xf32>
    %128 = arith.addf %119, %127 : vector<16x16xf32>
    %129 = vector.extract_strided_slice %92 {offsets = [0, 4], sizes = [16, 16], strides = [1, 1]} : vector<16x128xf32> to vector<16x16xf32>
    %c11 = arith.constant 11 : index
    %130 = memref.load %arg2[%c11] : memref<196xf32, #tpu.memory_space<smem>>
    %131 = vector.broadcast %130 : f32 to vector<16x16xf32>
    %132 = arith.mulf %131, %129 : vector<16x16xf32>
    %133 = arith.addf %124, %132 : vector<16x16xf32>
    %c109 = arith.constant 109 : index
    %134 = memref.load %arg2[%c109] : memref<196xf32, #tpu.memory_space<smem>>
    %135 = vector.broadcast %134 : f32 to vector<16x16xf32>
    %136 = arith.mulf %135, %129 : vector<16x16xf32>
    %137 = arith.addf %128, %136 : vector<16x16xf32>
    %138 = vector.extract_strided_slice %92 {offsets = [0, 5], sizes = [16, 16], strides = [1, 1]} : vector<16x128xf32> to vector<16x16xf32>
    %c12 = arith.constant 12 : index
    %139 = memref.load %arg2[%c12] : memref<196xf32, #tpu.memory_space<smem>>
    %140 = vector.broadcast %139 : f32 to vector<16x16xf32>
    %141 = arith.mulf %140, %138 : vector<16x16xf32>
    %142 = arith.addf %133, %141 : vector<16x16xf32>
    %c110 = arith.constant 110 : index
    %143 = memref.load %arg2[%c110] : memref<196xf32, #tpu.memory_space<smem>>
    %144 = vector.broadcast %143 : f32 to vector<16x16xf32>
    %145 = arith.mulf %144, %138 : vector<16x16xf32>
    %146 = arith.addf %137, %145 : vector<16x16xf32>
    %147 = vector.extract_strided_slice %92 {offsets = [0, 6], sizes = [16, 16], strides = [1, 1]} : vector<16x128xf32> to vector<16x16xf32>
    %c13 = arith.constant 13 : index
    %148 = memref.load %arg2[%c13] : memref<196xf32, #tpu.memory_space<smem>>
    %149 = vector.broadcast %148 : f32 to vector<16x16xf32>
    %150 = arith.mulf %149, %147 : vector<16x16xf32>
    %151 = arith.addf %142, %150 : vector<16x16xf32>
    %c111 = arith.constant 111 : index
    %152 = memref.load %arg2[%c111] : memref<196xf32, #tpu.memory_space<smem>>
    %153 = vector.broadcast %152 : f32 to vector<16x16xf32>
    %154 = arith.mulf %153, %147 : vector<16x16xf32>
    %155 = arith.addf %146, %154 : vector<16x16xf32>
    %c0_45 = arith.constant 0 : index
    %c0_46 = arith.constant 0 : index
    %c2_47 = arith.constant 2 : index
    %c0_48 = arith.constant 0 : index
    %156 = vector.load %arg7[%c0_45, %c0_46, %c2_47, %c0_48] : memref<1x2x22x128xf32, #tpu.memory_space<vmem>>, vector<1x1x16x128xf32>
    %157 = vector.shape_cast %156 : vector<1x1x16x128xf32> to vector<16x128xf32>
    %158 = vector.extract_strided_slice %157 {offsets = [0, 0], sizes = [16, 16], strides = [1, 1]} : vector<16x128xf32> to vector<16x16xf32>
    %c14 = arith.constant 14 : index
    %159 = memref.load %arg2[%c14] : memref<196xf32, #tpu.memory_space<smem>>
    %160 = vector.broadcast %159 : f32 to vector<16x16xf32>
    %161 = arith.mulf %160, %158 : vector<16x16xf32>
    %162 = arith.addf %151, %161 : vector<16x16xf32>
    %c112 = arith.constant 112 : index
    %163 = memref.load %arg2[%c112] : memref<196xf32, #tpu.memory_space<smem>>
    %164 = vector.broadcast %163 : f32 to vector<16x16xf32>
    %165 = arith.mulf %164, %158 : vector<16x16xf32>
    %166 = arith.addf %155, %165 : vector<16x16xf32>
    %167 = vector.extract_strided_slice %157 {offsets = [0, 1], sizes = [16, 16], strides = [1, 1]} : vector<16x128xf32> to vector<16x16xf32>
    %c15 = arith.constant 15 : index
    %168 = memref.load %arg2[%c15] : memref<196xf32, #tpu.memory_space<smem>>
    %169 = vector.broadcast %168 : f32 to vector<16x16xf32>
    %170 = arith.mulf %169, %167 : vector<16x16xf32>
    %171 = arith.addf %162, %170 : vector<16x16xf32>
    %c113 = arith.constant 113 : index
    %172 = memref.load %arg2[%c113] : memref<196xf32, #tpu.memory_space<smem>>
    %173 = vector.broadcast %172 : f32 to vector<16x16xf32>
    %174 = arith.mulf %173, %167 : vector<16x16xf32>
    %175 = arith.addf %166, %174 : vector<16x16xf32>
    %176 = vector.extract_strided_slice %157 {offsets = [0, 2], sizes = [16, 16], strides = [1, 1]} : vector<16x128xf32> to vector<16x16xf32>
    %c16 = arith.constant 16 : index
    %177 = memref.load %arg2[%c16] : memref<196xf32, #tpu.memory_space<smem>>
    %178 = vector.broadcast %177 : f32 to vector<16x16xf32>
    %179 = arith.mulf %178, %176 : vector<16x16xf32>
    %180 = arith.addf %171, %179 : vector<16x16xf32>
    %c114 = arith.constant 114 : index
    %181 = memref.load %arg2[%c114] : memref<196xf32, #tpu.memory_space<smem>>
    %182 = vector.broadcast %181 : f32 to vector<16x16xf32>
    %183 = arith.mulf %182, %176 : vector<16x16xf32>
    %184 = arith.addf %175, %183 : vector<16x16xf32>
    %185 = vector.extract_strided_slice %157 {offsets = [0, 3], sizes = [16, 16], strides = [1, 1]} : vector<16x128xf32> to vector<16x16xf32>
    %c17 = arith.constant 17 : index
    %186 = memref.load %arg2[%c17] : memref<196xf32, #tpu.memory_space<smem>>
    %187 = vector.broadcast %186 : f32 to vector<16x16xf32>
    %188 = arith.mulf %187, %185 : vector<16x16xf32>
    %189 = arith.addf %180, %188 : vector<16x16xf32>
    %c115 = arith.constant 115 : index
    %190 = memref.load %arg2[%c115] : memref<196xf32, #tpu.memory_space<smem>>
    %191 = vector.broadcast %190 : f32 to vector<16x16xf32>
    %192 = arith.mulf %191, %185 : vector<16x16xf32>
    %193 = arith.addf %184, %192 : vector<16x16xf32>
    %194 = vector.extract_strided_slice %157 {offsets = [0, 4], sizes = [16, 16], strides = [1, 1]} : vector<16x128xf32> to vector<16x16xf32>
    %c18 = arith.constant 18 : index
    %195 = memref.load %arg2[%c18] : memref<196xf32, #tpu.memory_space<smem>>
    %196 = vector.broadcast %195 : f32 to vector<16x16xf32>
    %197 = arith.mulf %196, %194 : vector<16x16xf32>
    %198 = arith.addf %189, %197 : vector<16x16xf32>
    %c116 = arith.constant 116 : index
    %199 = memref.load %arg2[%c116] : memref<196xf32, #tpu.memory_space<smem>>
    %200 = vector.broadcast %199 : f32 to vector<16x16xf32>
    %201 = arith.mulf %200, %194 : vector<16x16xf32>
    %202 = arith.addf %193, %201 : vector<16x16xf32>
    %203 = vector.extract_strided_slice %157 {offsets = [0, 5], sizes = [16, 16], strides = [1, 1]} : vector<16x128xf32> to vector<16x16xf32>
    %c19_49 = arith.constant 19 : index
    %204 = memref.load %arg2[%c19_49] : memref<196xf32, #tpu.memory_space<smem>>
    %205 = vector.broadcast %204 : f32 to vector<16x16xf32>
    %206 = arith.mulf %205, %203 : vector<16x16xf32>
    %207 = arith.addf %198, %206 : vector<16x16xf32>
    %c117 = arith.constant 117 : index
    %208 = memref.load %arg2[%c117] : memref<196xf32, #tpu.memory_space<smem>>
    %209 = vector.broadcast %208 : f32 to vector<16x16xf32>
    %210 = arith.mulf %209, %203 : vector<16x16xf32>
    %211 = arith.addf %202, %210 : vector<16x16xf32>
    %212 = vector.extract_strided_slice %157 {offsets = [0, 6], sizes = [16, 16], strides = [1, 1]} : vector<16x128xf32> to vector<16x16xf32>
    %c20 = arith.constant 20 : index
    %213 = memref.load %arg2[%c20] : memref<196xf32, #tpu.memory_space<smem>>
    %214 = vector.broadcast %213 : f32 to vector<16x16xf32>
    %215 = arith.mulf %214, %212 : vector<16x16xf32>
    %216 = arith.addf %207, %215 : vector<16x16xf32>
    %c118 = arith.constant 118 : index
    %217 = memref.load %arg2[%c118] : memref<196xf32, #tpu.memory_space<smem>>
    %218 = vector.broadcast %217 : f32 to vector<16x16xf32>
    %219 = arith.mulf %218, %212 : vector<16x16xf32>
    %220 = arith.addf %211, %219 : vector<16x16xf32>
    %c0_50 = arith.constant 0 : index
    %c0_51 = arith.constant 0 : index
    %c3_52 = arith.constant 3 : index
    %c0_53 = arith.constant 0 : index
    %221 = vector.load %arg7[%c0_50, %c0_51, %c3_52, %c0_53] : memref<1x2x22x128xf32, #tpu.memory_space<vmem>>, vector<1x1x16x128xf32>
    %222 = vector.shape_cast %221 : vector<1x1x16x128xf32> to vector<16x128xf32>
    %223 = vector.extract_strided_slice %222 {offsets = [0, 0], sizes = [16, 16], strides = [1, 1]} : vector<16x128xf32> to vector<16x16xf32>
    %c21 = arith.constant 21 : index
    %224 = memref.load %arg2[%c21] : memref<196xf32, #tpu.memory_space<smem>>
    %225 = vector.broadcast %224 : f32 to vector<16x16xf32>
    %226 = arith.mulf %225, %223 : vector<16x16xf32>
    %227 = arith.addf %216, %226 : vector<16x16xf32>
    %c119 = arith.constant 119 : index
    %228 = memref.load %arg2[%c119] : memref<196xf32, #tpu.memory_space<smem>>
    %229 = vector.broadcast %228 : f32 to vector<16x16xf32>
    %230 = arith.mulf %229, %223 : vector<16x16xf32>
    %231 = arith.addf %220, %230 : vector<16x16xf32>
    %232 = vector.extract_strided_slice %222 {offsets = [0, 1], sizes = [16, 16], strides = [1, 1]} : vector<16x128xf32> to vector<16x16xf32>
    %c22 = arith.constant 22 : index
    %233 = memref.load %arg2[%c22] : memref<196xf32, #tpu.memory_space<smem>>
    %234 = vector.broadcast %233 : f32 to vector<16x16xf32>
    %235 = arith.mulf %234, %232 : vector<16x16xf32>
    %236 = arith.addf %227, %235 : vector<16x16xf32>
    %c120 = arith.constant 120 : index
    %237 = memref.load %arg2[%c120] : memref<196xf32, #tpu.memory_space<smem>>
    %238 = vector.broadcast %237 : f32 to vector<16x16xf32>
    %239 = arith.mulf %238, %232 : vector<16x16xf32>
    %240 = arith.addf %231, %239 : vector<16x16xf32>
    %241 = vector.extract_strided_slice %222 {offsets = [0, 2], sizes = [16, 16], strides = [1, 1]} : vector<16x128xf32> to vector<16x16xf32>
    %c23 = arith.constant 23 : index
    %242 = memref.load %arg2[%c23] : memref<196xf32, #tpu.memory_space<smem>>
    %243 = vector.broadcast %242 : f32 to vector<16x16xf32>
    %244 = arith.mulf %243, %241 : vector<16x16xf32>
    %245 = arith.addf %236, %244 : vector<16x16xf32>
    %c121 = arith.constant 121 : index
    %246 = memref.load %arg2[%c121] : memref<196xf32, #tpu.memory_space<smem>>
    %247 = vector.broadcast %246 : f32 to vector<16x16xf32>
    %248 = arith.mulf %247, %241 : vector<16x16xf32>
    %249 = arith.addf %240, %248 : vector<16x16xf32>
    %250 = vector.extract_strided_slice %222 {offsets = [0, 3], sizes = [16, 16], strides = [1, 1]} : vector<16x128xf32> to vector<16x16xf32>
    %c24 = arith.constant 24 : index
    %251 = memref.load %arg2[%c24] : memref<196xf32, #tpu.memory_space<smem>>
    %252 = vector.broadcast %251 : f32 to vector<16x16xf32>
    %253 = arith.mulf %252, %250 : vector<16x16xf32>
    %254 = arith.addf %245, %253 : vector<16x16xf32>
    %c122 = arith.constant 122 : index
    %255 = memref.load %arg2[%c122] : memref<196xf32, #tpu.memory_space<smem>>
    %256 = vector.broadcast %255 : f32 to vector<16x16xf32>
    %257 = arith.mulf %256, %250 : vector<16x16xf32>
    %258 = arith.addf %249, %257 : vector<16x16xf32>
    %259 = vector.extract_strided_slice %222 {offsets = [0, 4], sizes = [16, 16], strides = [1, 1]} : vector<16x128xf32> to vector<16x16xf32>
    %c25 = arith.constant 25 : index
    %260 = memref.load %arg2[%c25] : memref<196xf32, #tpu.memory_space<smem>>
    %261 = vector.broadcast %260 : f32 to vector<16x16xf32>
    %262 = arith.mulf %261, %259 : vector<16x16xf32>
    %263 = arith.addf %254, %262 : vector<16x16xf32>
    %c123 = arith.constant 123 : index
    %264 = memref.load %arg2[%c123] : memref<196xf32, #tpu.memory_space<smem>>
    %265 = vector.broadcast %264 : f32 to vector<16x16xf32>
    %266 = arith.mulf %265, %259 : vector<16x16xf32>
    %267 = arith.addf %258, %266 : vector<16x16xf32>
    %268 = vector.extract_strided_slice %222 {offsets = [0, 5], sizes = [16, 16], strides = [1, 1]} : vector<16x128xf32> to vector<16x16xf32>
    %c26 = arith.constant 26 : index
    %269 = memref.load %arg2[%c26] : memref<196xf32, #tpu.memory_space<smem>>
    %270 = vector.broadcast %269 : f32 to vector<16x16xf32>
    %271 = arith.mulf %270, %268 : vector<16x16xf32>
    %272 = arith.addf %263, %271 : vector<16x16xf32>
    %c124 = arith.constant 124 : index
    %273 = memref.load %arg2[%c124] : memref<196xf32, #tpu.memory_space<smem>>
    %274 = vector.broadcast %273 : f32 to vector<16x16xf32>
    %275 = arith.mulf %274, %268 : vector<16x16xf32>
    %276 = arith.addf %267, %275 : vector<16x16xf32>
    %277 = vector.extract_strided_slice %222 {offsets = [0, 6], sizes = [16, 16], strides = [1, 1]} : vector<16x128xf32> to vector<16x16xf32>
    %c27 = arith.constant 27 : index
    %278 = memref.load %arg2[%c27] : memref<196xf32, #tpu.memory_space<smem>>
    %279 = vector.broadcast %278 : f32 to vector<16x16xf32>
    %280 = arith.mulf %279, %277 : vector<16x16xf32>
    %281 = arith.addf %272, %280 : vector<16x16xf32>
    %c125 = arith.constant 125 : index
    %282 = memref.load %arg2[%c125] : memref<196xf32, #tpu.memory_space<smem>>
    %283 = vector.broadcast %282 : f32 to vector<16x16xf32>
    %284 = arith.mulf %283, %277 : vector<16x16xf32>
    %285 = arith.addf %276, %284 : vector<16x16xf32>
    %c0_54 = arith.constant 0 : index
    %c0_55 = arith.constant 0 : index
    %c4_56 = arith.constant 4 : index
    %c0_57 = arith.constant 0 : index
    %286 = vector.load %arg7[%c0_54, %c0_55, %c4_56, %c0_57] : memref<1x2x22x128xf32, #tpu.memory_space<vmem>>, vector<1x1x16x128xf32>
    %287 = vector.shape_cast %286 : vector<1x1x16x128xf32> to vector<16x128xf32>
    %288 = vector.extract_strided_slice %287 {offsets = [0, 0], sizes = [16, 16], strides = [1, 1]} : vector<16x128xf32> to vector<16x16xf32>
    %c28 = arith.constant 28 : index
    %289 = memref.load %arg2[%c28] : memref<196xf32, #tpu.memory_space<smem>>
    %290 = vector.broadcast %289 : f32 to vector<16x16xf32>
    %291 = arith.mulf %290, %288 : vector<16x16xf32>
    %292 = arith.addf %281, %291 : vector<16x16xf32>
    %c126 = arith.constant 126 : index
    %293 = memref.load %arg2[%c126] : memref<196xf32, #tpu.memory_space<smem>>
    %294 = vector.broadcast %293 : f32 to vector<16x16xf32>
    %295 = arith.mulf %294, %288 : vector<16x16xf32>
    %296 = arith.addf %285, %295 : vector<16x16xf32>
    %297 = vector.extract_strided_slice %287 {offsets = [0, 1], sizes = [16, 16], strides = [1, 1]} : vector<16x128xf32> to vector<16x16xf32>
    %c29 = arith.constant 29 : index
    %298 = memref.load %arg2[%c29] : memref<196xf32, #tpu.memory_space<smem>>
    %299 = vector.broadcast %298 : f32 to vector<16x16xf32>
    %300 = arith.mulf %299, %297 : vector<16x16xf32>
    %301 = arith.addf %292, %300 : vector<16x16xf32>
    %c127 = arith.constant 127 : index
    %302 = memref.load %arg2[%c127] : memref<196xf32, #tpu.memory_space<smem>>
    %303 = vector.broadcast %302 : f32 to vector<16x16xf32>
    %304 = arith.mulf %303, %297 : vector<16x16xf32>
    %305 = arith.addf %296, %304 : vector<16x16xf32>
    %306 = vector.extract_strided_slice %287 {offsets = [0, 2], sizes = [16, 16], strides = [1, 1]} : vector<16x128xf32> to vector<16x16xf32>
    %c30 = arith.constant 30 : index
    %307 = memref.load %arg2[%c30] : memref<196xf32, #tpu.memory_space<smem>>
    %308 = vector.broadcast %307 : f32 to vector<16x16xf32>
    %309 = arith.mulf %308, %306 : vector<16x16xf32>
    %310 = arith.addf %301, %309 : vector<16x16xf32>
    %c128 = arith.constant 128 : index
    %311 = memref.load %arg2[%c128] : memref<196xf32, #tpu.memory_space<smem>>
    %312 = vector.broadcast %311 : f32 to vector<16x16xf32>
    %313 = arith.mulf %312, %306 : vector<16x16xf32>
    %314 = arith.addf %305, %313 : vector<16x16xf32>
    %315 = vector.extract_strided_slice %287 {offsets = [0, 3], sizes = [16, 16], strides = [1, 1]} : vector<16x128xf32> to vector<16x16xf32>
    %c31 = arith.constant 31 : index
    %316 = memref.load %arg2[%c31] : memref<196xf32, #tpu.memory_space<smem>>
    %317 = vector.broadcast %316 : f32 to vector<16x16xf32>
    %318 = arith.mulf %317, %315 : vector<16x16xf32>
    %319 = arith.addf %310, %318 : vector<16x16xf32>
    %c129 = arith.constant 129 : index
    %320 = memref.load %arg2[%c129] : memref<196xf32, #tpu.memory_space<smem>>
    %321 = vector.broadcast %320 : f32 to vector<16x16xf32>
    %322 = arith.mulf %321, %315 : vector<16x16xf32>
    %323 = arith.addf %314, %322 : vector<16x16xf32>
    %324 = vector.extract_strided_slice %287 {offsets = [0, 4], sizes = [16, 16], strides = [1, 1]} : vector<16x128xf32> to vector<16x16xf32>
    %c32 = arith.constant 32 : index
    %325 = memref.load %arg2[%c32] : memref<196xf32, #tpu.memory_space<smem>>
    %326 = vector.broadcast %325 : f32 to vector<16x16xf32>
    %327 = arith.mulf %326, %324 : vector<16x16xf32>
    %328 = arith.addf %319, %327 : vector<16x16xf32>
    %c130 = arith.constant 130 : index
    %329 = memref.load %arg2[%c130] : memref<196xf32, #tpu.memory_space<smem>>
    %330 = vector.broadcast %329 : f32 to vector<16x16xf32>
    %331 = arith.mulf %330, %324 : vector<16x16xf32>
    %332 = arith.addf %323, %331 : vector<16x16xf32>
    %333 = vector.extract_strided_slice %287 {offsets = [0, 5], sizes = [16, 16], strides = [1, 1]} : vector<16x128xf32> to vector<16x16xf32>
    %c33 = arith.constant 33 : index
    %334 = memref.load %arg2[%c33] : memref<196xf32, #tpu.memory_space<smem>>
    %335 = vector.broadcast %334 : f32 to vector<16x16xf32>
    %336 = arith.mulf %335, %333 : vector<16x16xf32>
    %337 = arith.addf %328, %336 : vector<16x16xf32>
    %c131 = arith.constant 131 : index
    %338 = memref.load %arg2[%c131] : memref<196xf32, #tpu.memory_space<smem>>
    %339 = vector.broadcast %338 : f32 to vector<16x16xf32>
    %340 = arith.mulf %339, %333 : vector<16x16xf32>
    %341 = arith.addf %332, %340 : vector<16x16xf32>
    %342 = vector.extract_strided_slice %287 {offsets = [0, 6], sizes = [16, 16], strides = [1, 1]} : vector<16x128xf32> to vector<16x16xf32>
    %c34 = arith.constant 34 : index
    %343 = memref.load %arg2[%c34] : memref<196xf32, #tpu.memory_space<smem>>
    %344 = vector.broadcast %343 : f32 to vector<16x16xf32>
    %345 = arith.mulf %344, %342 : vector<16x16xf32>
    %346 = arith.addf %337, %345 : vector<16x16xf32>
    %c132 = arith.constant 132 : index
    %347 = memref.load %arg2[%c132] : memref<196xf32, #tpu.memory_space<smem>>
    %348 = vector.broadcast %347 : f32 to vector<16x16xf32>
    %349 = arith.mulf %348, %342 : vector<16x16xf32>
    %350 = arith.addf %341, %349 : vector<16x16xf32>
    %c0_58 = arith.constant 0 : index
    %c0_59 = arith.constant 0 : index
    %c5_60 = arith.constant 5 : index
    %c0_61 = arith.constant 0 : index
    %351 = vector.load %arg7[%c0_58, %c0_59, %c5_60, %c0_61] : memref<1x2x22x128xf32, #tpu.memory_space<vmem>>, vector<1x1x16x128xf32>
    %352 = vector.shape_cast %351 : vector<1x1x16x128xf32> to vector<16x128xf32>
    %353 = vector.extract_strided_slice %352 {offsets = [0, 0], sizes = [16, 16], strides = [1, 1]} : vector<16x128xf32> to vector<16x16xf32>
    %c35 = arith.constant 35 : index
    %354 = memref.load %arg2[%c35] : memref<196xf32, #tpu.memory_space<smem>>
    %355 = vector.broadcast %354 : f32 to vector<16x16xf32>
    %356 = arith.mulf %355, %353 : vector<16x16xf32>
    %357 = arith.addf %346, %356 : vector<16x16xf32>
    %c133 = arith.constant 133 : index
    %358 = memref.load %arg2[%c133] : memref<196xf32, #tpu.memory_space<smem>>
    %359 = vector.broadcast %358 : f32 to vector<16x16xf32>
    %360 = arith.mulf %359, %353 : vector<16x16xf32>
    %361 = arith.addf %350, %360 : vector<16x16xf32>
    %362 = vector.extract_strided_slice %352 {offsets = [0, 1], sizes = [16, 16], strides = [1, 1]} : vector<16x128xf32> to vector<16x16xf32>
    %c36 = arith.constant 36 : index
    %363 = memref.load %arg2[%c36] : memref<196xf32, #tpu.memory_space<smem>>
    %364 = vector.broadcast %363 : f32 to vector<16x16xf32>
    %365 = arith.mulf %364, %362 : vector<16x16xf32>
    %366 = arith.addf %357, %365 : vector<16x16xf32>
    %c134 = arith.constant 134 : index
    %367 = memref.load %arg2[%c134] : memref<196xf32, #tpu.memory_space<smem>>
    %368 = vector.broadcast %367 : f32 to vector<16x16xf32>
    %369 = arith.mulf %368, %362 : vector<16x16xf32>
    %370 = arith.addf %361, %369 : vector<16x16xf32>
    %371 = vector.extract_strided_slice %352 {offsets = [0, 2], sizes = [16, 16], strides = [1, 1]} : vector<16x128xf32> to vector<16x16xf32>
    %c37 = arith.constant 37 : index
    %372 = memref.load %arg2[%c37] : memref<196xf32, #tpu.memory_space<smem>>
    %373 = vector.broadcast %372 : f32 to vector<16x16xf32>
    %374 = arith.mulf %373, %371 : vector<16x16xf32>
    %375 = arith.addf %366, %374 : vector<16x16xf32>
    %c135 = arith.constant 135 : index
    %376 = memref.load %arg2[%c135] : memref<196xf32, #tpu.memory_space<smem>>
    %377 = vector.broadcast %376 : f32 to vector<16x16xf32>
    %378 = arith.mulf %377, %371 : vector<16x16xf32>
    %379 = arith.addf %370, %378 : vector<16x16xf32>
    %380 = vector.extract_strided_slice %352 {offsets = [0, 3], sizes = [16, 16], strides = [1, 1]} : vector<16x128xf32> to vector<16x16xf32>
    %c38 = arith.constant 38 : index
    %381 = memref.load %arg2[%c38] : memref<196xf32, #tpu.memory_space<smem>>
    %382 = vector.broadcast %381 : f32 to vector<16x16xf32>
    %383 = arith.mulf %382, %380 : vector<16x16xf32>
    %384 = arith.addf %375, %383 : vector<16x16xf32>
    %c136 = arith.constant 136 : index
    %385 = memref.load %arg2[%c136] : memref<196xf32, #tpu.memory_space<smem>>
    %386 = vector.broadcast %385 : f32 to vector<16x16xf32>
    %387 = arith.mulf %386, %380 : vector<16x16xf32>
    %388 = arith.addf %379, %387 : vector<16x16xf32>
    %389 = vector.extract_strided_slice %352 {offsets = [0, 4], sizes = [16, 16], strides = [1, 1]} : vector<16x128xf32> to vector<16x16xf32>
    %c39 = arith.constant 39 : index
    %390 = memref.load %arg2[%c39] : memref<196xf32, #tpu.memory_space<smem>>
    %391 = vector.broadcast %390 : f32 to vector<16x16xf32>
    %392 = arith.mulf %391, %389 : vector<16x16xf32>
    %393 = arith.addf %384, %392 : vector<16x16xf32>
    %c137 = arith.constant 137 : index
    %394 = memref.load %arg2[%c137] : memref<196xf32, #tpu.memory_space<smem>>
    %395 = vector.broadcast %394 : f32 to vector<16x16xf32>
    %396 = arith.mulf %395, %389 : vector<16x16xf32>
    %397 = arith.addf %388, %396 : vector<16x16xf32>
    %398 = vector.extract_strided_slice %352 {offsets = [0, 5], sizes = [16, 16], strides = [1, 1]} : vector<16x128xf32> to vector<16x16xf32>
    %c40 = arith.constant 40 : index
    %399 = memref.load %arg2[%c40] : memref<196xf32, #tpu.memory_space<smem>>
    %400 = vector.broadcast %399 : f32 to vector<16x16xf32>
    %401 = arith.mulf %400, %398 : vector<16x16xf32>
    %402 = arith.addf %393, %401 : vector<16x16xf32>
    %c138 = arith.constant 138 : index
    %403 = memref.load %arg2[%c138] : memref<196xf32, #tpu.memory_space<smem>>
    %404 = vector.broadcast %403 : f32 to vector<16x16xf32>
    %405 = arith.mulf %404, %398 : vector<16x16xf32>
    %406 = arith.addf %397, %405 : vector<16x16xf32>
    %407 = vector.extract_strided_slice %352 {offsets = [0, 6], sizes = [16, 16], strides = [1, 1]} : vector<16x128xf32> to vector<16x16xf32>
    %c41 = arith.constant 41 : index
    %408 = memref.load %arg2[%c41] : memref<196xf32, #tpu.memory_space<smem>>
    %409 = vector.broadcast %408 : f32 to vector<16x16xf32>
    %410 = arith.mulf %409, %407 : vector<16x16xf32>
    %411 = arith.addf %402, %410 : vector<16x16xf32>
    %c139 = arith.constant 139 : index
    %412 = memref.load %arg2[%c139] : memref<196xf32, #tpu.memory_space<smem>>
    %413 = vector.broadcast %412 : f32 to vector<16x16xf32>
    %414 = arith.mulf %413, %407 : vector<16x16xf32>
    %415 = arith.addf %406, %414 : vector<16x16xf32>
    %c0_62 = arith.constant 0 : index
    %c0_63 = arith.constant 0 : index
    %c6_64 = arith.constant 6 : index
    %c0_65 = arith.constant 0 : index
    %416 = vector.load %arg7[%c0_62, %c0_63, %c6_64, %c0_65] : memref<1x2x22x128xf32, #tpu.memory_space<vmem>>, vector<1x1x16x128xf32>
    %417 = vector.shape_cast %416 : vector<1x1x16x128xf32> to vector<16x128xf32>
    %418 = vector.extract_strided_slice %417 {offsets = [0, 0], sizes = [16, 16], strides = [1, 1]} : vector<16x128xf32> to vector<16x16xf32>
    %c42 = arith.constant 42 : index
    %419 = memref.load %arg2[%c42] : memref<196xf32, #tpu.memory_space<smem>>
    %420 = vector.broadcast %419 : f32 to vector<16x16xf32>
    %421 = arith.mulf %420, %418 : vector<16x16xf32>
    %422 = arith.addf %411, %421 : vector<16x16xf32>
    %c140 = arith.constant 140 : index
    %423 = memref.load %arg2[%c140] : memref<196xf32, #tpu.memory_space<smem>>
    %424 = vector.broadcast %423 : f32 to vector<16x16xf32>
    %425 = arith.mulf %424, %418 : vector<16x16xf32>
    %426 = arith.addf %415, %425 : vector<16x16xf32>
    %427 = vector.extract_strided_slice %417 {offsets = [0, 1], sizes = [16, 16], strides = [1, 1]} : vector<16x128xf32> to vector<16x16xf32>
    %c43 = arith.constant 43 : index
    %428 = memref.load %arg2[%c43] : memref<196xf32, #tpu.memory_space<smem>>
    %429 = vector.broadcast %428 : f32 to vector<16x16xf32>
    %430 = arith.mulf %429, %427 : vector<16x16xf32>
    %431 = arith.addf %422, %430 : vector<16x16xf32>
    %c141 = arith.constant 141 : index
    %432 = memref.load %arg2[%c141] : memref<196xf32, #tpu.memory_space<smem>>
    %433 = vector.broadcast %432 : f32 to vector<16x16xf32>
    %434 = arith.mulf %433, %427 : vector<16x16xf32>
    %435 = arith.addf %426, %434 : vector<16x16xf32>
    %436 = vector.extract_strided_slice %417 {offsets = [0, 2], sizes = [16, 16], strides = [1, 1]} : vector<16x128xf32> to vector<16x16xf32>
    %c44 = arith.constant 44 : index
    %437 = memref.load %arg2[%c44] : memref<196xf32, #tpu.memory_space<smem>>
    %438 = vector.broadcast %437 : f32 to vector<16x16xf32>
    %439 = arith.mulf %438, %436 : vector<16x16xf32>
    %440 = arith.addf %431, %439 : vector<16x16xf32>
    %c142 = arith.constant 142 : index
    %441 = memref.load %arg2[%c142] : memref<196xf32, #tpu.memory_space<smem>>
    %442 = vector.broadcast %441 : f32 to vector<16x16xf32>
    %443 = arith.mulf %442, %436 : vector<16x16xf32>
    %444 = arith.addf %435, %443 : vector<16x16xf32>
    %445 = vector.extract_strided_slice %417 {offsets = [0, 3], sizes = [16, 16], strides = [1, 1]} : vector<16x128xf32> to vector<16x16xf32>
    %c45 = arith.constant 45 : index
    %446 = memref.load %arg2[%c45] : memref<196xf32, #tpu.memory_space<smem>>
    %447 = vector.broadcast %446 : f32 to vector<16x16xf32>
    %448 = arith.mulf %447, %445 : vector<16x16xf32>
    %449 = arith.addf %440, %448 : vector<16x16xf32>
    %c143 = arith.constant 143 : index
    %450 = memref.load %arg2[%c143] : memref<196xf32, #tpu.memory_space<smem>>
    %451 = vector.broadcast %450 : f32 to vector<16x16xf32>
    %452 = arith.mulf %451, %445 : vector<16x16xf32>
    %453 = arith.addf %444, %452 : vector<16x16xf32>
    %454 = vector.extract_strided_slice %417 {offsets = [0, 4], sizes = [16, 16], strides = [1, 1]} : vector<16x128xf32> to vector<16x16xf32>
    %c46 = arith.constant 46 : index
    %455 = memref.load %arg2[%c46] : memref<196xf32, #tpu.memory_space<smem>>
    %456 = vector.broadcast %455 : f32 to vector<16x16xf32>
    %457 = arith.mulf %456, %454 : vector<16x16xf32>
    %458 = arith.addf %449, %457 : vector<16x16xf32>
    %c144 = arith.constant 144 : index
    %459 = memref.load %arg2[%c144] : memref<196xf32, #tpu.memory_space<smem>>
    %460 = vector.broadcast %459 : f32 to vector<16x16xf32>
    %461 = arith.mulf %460, %454 : vector<16x16xf32>
    %462 = arith.addf %453, %461 : vector<16x16xf32>
    %463 = vector.extract_strided_slice %417 {offsets = [0, 5], sizes = [16, 16], strides = [1, 1]} : vector<16x128xf32> to vector<16x16xf32>
    %c47 = arith.constant 47 : index
    %464 = memref.load %arg2[%c47] : memref<196xf32, #tpu.memory_space<smem>>
    %465 = vector.broadcast %464 : f32 to vector<16x16xf32>
    %466 = arith.mulf %465, %463 : vector<16x16xf32>
    %467 = arith.addf %458, %466 : vector<16x16xf32>
    %c145 = arith.constant 145 : index
    %468 = memref.load %arg2[%c145] : memref<196xf32, #tpu.memory_space<smem>>
    %469 = vector.broadcast %468 : f32 to vector<16x16xf32>
    %470 = arith.mulf %469, %463 : vector<16x16xf32>
    %471 = arith.addf %462, %470 : vector<16x16xf32>
    %472 = vector.extract_strided_slice %417 {offsets = [0, 6], sizes = [16, 16], strides = [1, 1]} : vector<16x128xf32> to vector<16x16xf32>
    %c48 = arith.constant 48 : index
    %473 = memref.load %arg2[%c48] : memref<196xf32, #tpu.memory_space<smem>>
    %474 = vector.broadcast %473 : f32 to vector<16x16xf32>
    %475 = arith.mulf %474, %472 : vector<16x16xf32>
    %476 = arith.addf %467, %475 : vector<16x16xf32>
    %c146 = arith.constant 146 : index
    %477 = memref.load %arg2[%c146] : memref<196xf32, #tpu.memory_space<smem>>
    %478 = vector.broadcast %477 : f32 to vector<16x16xf32>
    %479 = arith.mulf %478, %472 : vector<16x16xf32>
    %480 = arith.addf %471, %479 : vector<16x16xf32>
    %c0_66 = arith.constant 0 : index
    %c1_67 = arith.constant 1 : index
    %c0_68 = arith.constant 0 : index
    %c0_69 = arith.constant 0 : index
    %481 = vector.load %arg7[%c0_66, %c1_67, %c0_68, %c0_69] : memref<1x2x22x128xf32, #tpu.memory_space<vmem>>, vector<1x1x16x128xf32>
    %482 = vector.shape_cast %481 : vector<1x1x16x128xf32> to vector<16x128xf32>
    %483 = vector.extract_strided_slice %482 {offsets = [0, 0], sizes = [16, 16], strides = [1, 1]} : vector<16x128xf32> to vector<16x16xf32>
    %c49 = arith.constant 49 : index
    %484 = memref.load %arg2[%c49] : memref<196xf32, #tpu.memory_space<smem>>
    %485 = vector.broadcast %484 : f32 to vector<16x16xf32>
    %486 = arith.mulf %485, %483 : vector<16x16xf32>
    %487 = arith.addf %476, %486 : vector<16x16xf32>
    %c147 = arith.constant 147 : index
    %488 = memref.load %arg2[%c147] : memref<196xf32, #tpu.memory_space<smem>>
    %489 = vector.broadcast %488 : f32 to vector<16x16xf32>
    %490 = arith.mulf %489, %483 : vector<16x16xf32>
    %491 = arith.addf %480, %490 : vector<16x16xf32>
    %492 = vector.extract_strided_slice %482 {offsets = [0, 1], sizes = [16, 16], strides = [1, 1]} : vector<16x128xf32> to vector<16x16xf32>
    %c50 = arith.constant 50 : index
    %493 = memref.load %arg2[%c50] : memref<196xf32, #tpu.memory_space<smem>>
    %494 = vector.broadcast %493 : f32 to vector<16x16xf32>
    %495 = arith.mulf %494, %492 : vector<16x16xf32>
    %496 = arith.addf %487, %495 : vector<16x16xf32>
    %c148 = arith.constant 148 : index
    %497 = memref.load %arg2[%c148] : memref<196xf32, #tpu.memory_space<smem>>
    %498 = vector.broadcast %497 : f32 to vector<16x16xf32>
    %499 = arith.mulf %498, %492 : vector<16x16xf32>
    %500 = arith.addf %491, %499 : vector<16x16xf32>
    %501 = vector.extract_strided_slice %482 {offsets = [0, 2], sizes = [16, 16], strides = [1, 1]} : vector<16x128xf32> to vector<16x16xf32>
    %c51 = arith.constant 51 : index
    %502 = memref.load %arg2[%c51] : memref<196xf32, #tpu.memory_space<smem>>
    %503 = vector.broadcast %502 : f32 to vector<16x16xf32>
    %504 = arith.mulf %503, %501 : vector<16x16xf32>
    %505 = arith.addf %496, %504 : vector<16x16xf32>
    %c149 = arith.constant 149 : index
    %506 = memref.load %arg2[%c149] : memref<196xf32, #tpu.memory_space<smem>>
    %507 = vector.broadcast %506 : f32 to vector<16x16xf32>
    %508 = arith.mulf %507, %501 : vector<16x16xf32>
    %509 = arith.addf %500, %508 : vector<16x16xf32>
    %510 = vector.extract_strided_slice %482 {offsets = [0, 3], sizes = [16, 16], strides = [1, 1]} : vector<16x128xf32> to vector<16x16xf32>
    %c52 = arith.constant 52 : index
    %511 = memref.load %arg2[%c52] : memref<196xf32, #tpu.memory_space<smem>>
    %512 = vector.broadcast %511 : f32 to vector<16x16xf32>
    %513 = arith.mulf %512, %510 : vector<16x16xf32>
    %514 = arith.addf %505, %513 : vector<16x16xf32>
    %c150 = arith.constant 150 : index
    %515 = memref.load %arg2[%c150] : memref<196xf32, #tpu.memory_space<smem>>
    %516 = vector.broadcast %515 : f32 to vector<16x16xf32>
    %517 = arith.mulf %516, %510 : vector<16x16xf32>
    %518 = arith.addf %509, %517 : vector<16x16xf32>
    %519 = vector.extract_strided_slice %482 {offsets = [0, 4], sizes = [16, 16], strides = [1, 1]} : vector<16x128xf32> to vector<16x16xf32>
    %c53 = arith.constant 53 : index
    %520 = memref.load %arg2[%c53] : memref<196xf32, #tpu.memory_space<smem>>
    %521 = vector.broadcast %520 : f32 to vector<16x16xf32>
    %522 = arith.mulf %521, %519 : vector<16x16xf32>
    %523 = arith.addf %514, %522 : vector<16x16xf32>
    %c151 = arith.constant 151 : index
    %524 = memref.load %arg2[%c151] : memref<196xf32, #tpu.memory_space<smem>>
    %525 = vector.broadcast %524 : f32 to vector<16x16xf32>
    %526 = arith.mulf %525, %519 : vector<16x16xf32>
    %527 = arith.addf %518, %526 : vector<16x16xf32>
    %528 = vector.extract_strided_slice %482 {offsets = [0, 5], sizes = [16, 16], strides = [1, 1]} : vector<16x128xf32> to vector<16x16xf32>
    %c54 = arith.constant 54 : index
    %529 = memref.load %arg2[%c54] : memref<196xf32, #tpu.memory_space<smem>>
    %530 = vector.broadcast %529 : f32 to vector<16x16xf32>
    %531 = arith.mulf %530, %528 : vector<16x16xf32>
    %532 = arith.addf %523, %531 : vector<16x16xf32>
    %c152 = arith.constant 152 : index
    %533 = memref.load %arg2[%c152] : memref<196xf32, #tpu.memory_space<smem>>
    %534 = vector.broadcast %533 : f32 to vector<16x16xf32>
    %535 = arith.mulf %534, %528 : vector<16x16xf32>
    %536 = arith.addf %527, %535 : vector<16x16xf32>
    %537 = vector.extract_strided_slice %482 {offsets = [0, 6], sizes = [16, 16], strides = [1, 1]} : vector<16x128xf32> to vector<16x16xf32>
    %c55 = arith.constant 55 : index
    %538 = memref.load %arg2[%c55] : memref<196xf32, #tpu.memory_space<smem>>
    %539 = vector.broadcast %538 : f32 to vector<16x16xf32>
    %540 = arith.mulf %539, %537 : vector<16x16xf32>
    %541 = arith.addf %532, %540 : vector<16x16xf32>
    %c153 = arith.constant 153 : index
    %542 = memref.load %arg2[%c153] : memref<196xf32, #tpu.memory_space<smem>>
    %543 = vector.broadcast %542 : f32 to vector<16x16xf32>
    %544 = arith.mulf %543, %537 : vector<16x16xf32>
    %545 = arith.addf %536, %544 : vector<16x16xf32>
    %c0_70 = arith.constant 0 : index
    %c1_71 = arith.constant 1 : index
    %c1_72 = arith.constant 1 : index
    %c0_73 = arith.constant 0 : index
    %546 = vector.load %arg7[%c0_70, %c1_71, %c1_72, %c0_73] : memref<1x2x22x128xf32, #tpu.memory_space<vmem>>, vector<1x1x16x128xf32>
    %547 = vector.shape_cast %546 : vector<1x1x16x128xf32> to vector<16x128xf32>
    %548 = vector.extract_strided_slice %547 {offsets = [0, 0], sizes = [16, 16], strides = [1, 1]} : vector<16x128xf32> to vector<16x16xf32>
    %c56 = arith.constant 56 : index
    %549 = memref.load %arg2[%c56] : memref<196xf32, #tpu.memory_space<smem>>
    %550 = vector.broadcast %549 : f32 to vector<16x16xf32>
    %551 = arith.mulf %550, %548 : vector<16x16xf32>
    %552 = arith.addf %541, %551 : vector<16x16xf32>
    %c154 = arith.constant 154 : index
    %553 = memref.load %arg2[%c154] : memref<196xf32, #tpu.memory_space<smem>>
    %554 = vector.broadcast %553 : f32 to vector<16x16xf32>
    %555 = arith.mulf %554, %548 : vector<16x16xf32>
    %556 = arith.addf %545, %555 : vector<16x16xf32>
    %557 = vector.extract_strided_slice %547 {offsets = [0, 1], sizes = [16, 16], strides = [1, 1]} : vector<16x128xf32> to vector<16x16xf32>
    %c57 = arith.constant 57 : index
    %558 = memref.load %arg2[%c57] : memref<196xf32, #tpu.memory_space<smem>>
    %559 = vector.broadcast %558 : f32 to vector<16x16xf32>
    %560 = arith.mulf %559, %557 : vector<16x16xf32>
    %561 = arith.addf %552, %560 : vector<16x16xf32>
    %c155 = arith.constant 155 : index
    %562 = memref.load %arg2[%c155] : memref<196xf32, #tpu.memory_space<smem>>
    %563 = vector.broadcast %562 : f32 to vector<16x16xf32>
    %564 = arith.mulf %563, %557 : vector<16x16xf32>
    %565 = arith.addf %556, %564 : vector<16x16xf32>
    %566 = vector.extract_strided_slice %547 {offsets = [0, 2], sizes = [16, 16], strides = [1, 1]} : vector<16x128xf32> to vector<16x16xf32>
    %c58 = arith.constant 58 : index
    %567 = memref.load %arg2[%c58] : memref<196xf32, #tpu.memory_space<smem>>
    %568 = vector.broadcast %567 : f32 to vector<16x16xf32>
    %569 = arith.mulf %568, %566 : vector<16x16xf32>
    %570 = arith.addf %561, %569 : vector<16x16xf32>
    %c156 = arith.constant 156 : index
    %571 = memref.load %arg2[%c156] : memref<196xf32, #tpu.memory_space<smem>>
    %572 = vector.broadcast %571 : f32 to vector<16x16xf32>
    %573 = arith.mulf %572, %566 : vector<16x16xf32>
    %574 = arith.addf %565, %573 : vector<16x16xf32>
    %575 = vector.extract_strided_slice %547 {offsets = [0, 3], sizes = [16, 16], strides = [1, 1]} : vector<16x128xf32> to vector<16x16xf32>
    %c59 = arith.constant 59 : index
    %576 = memref.load %arg2[%c59] : memref<196xf32, #tpu.memory_space<smem>>
    %577 = vector.broadcast %576 : f32 to vector<16x16xf32>
    %578 = arith.mulf %577, %575 : vector<16x16xf32>
    %579 = arith.addf %570, %578 : vector<16x16xf32>
    %c157 = arith.constant 157 : index
    %580 = memref.load %arg2[%c157] : memref<196xf32, #tpu.memory_space<smem>>
    %581 = vector.broadcast %580 : f32 to vector<16x16xf32>
    %582 = arith.mulf %581, %575 : vector<16x16xf32>
    %583 = arith.addf %574, %582 : vector<16x16xf32>
    %584 = vector.extract_strided_slice %547 {offsets = [0, 4], sizes = [16, 16], strides = [1, 1]} : vector<16x128xf32> to vector<16x16xf32>
    %c60 = arith.constant 60 : index
    %585 = memref.load %arg2[%c60] : memref<196xf32, #tpu.memory_space<smem>>
    %586 = vector.broadcast %585 : f32 to vector<16x16xf32>
    %587 = arith.mulf %586, %584 : vector<16x16xf32>
    %588 = arith.addf %579, %587 : vector<16x16xf32>
    %c158 = arith.constant 158 : index
    %589 = memref.load %arg2[%c158] : memref<196xf32, #tpu.memory_space<smem>>
    %590 = vector.broadcast %589 : f32 to vector<16x16xf32>
    %591 = arith.mulf %590, %584 : vector<16x16xf32>
    %592 = arith.addf %583, %591 : vector<16x16xf32>
    %593 = vector.extract_strided_slice %547 {offsets = [0, 5], sizes = [16, 16], strides = [1, 1]} : vector<16x128xf32> to vector<16x16xf32>
    %c61 = arith.constant 61 : index
    %594 = memref.load %arg2[%c61] : memref<196xf32, #tpu.memory_space<smem>>
    %595 = vector.broadcast %594 : f32 to vector<16x16xf32>
    %596 = arith.mulf %595, %593 : vector<16x16xf32>
    %597 = arith.addf %588, %596 : vector<16x16xf32>
    %c159 = arith.constant 159 : index
    %598 = memref.load %arg2[%c159] : memref<196xf32, #tpu.memory_space<smem>>
    %599 = vector.broadcast %598 : f32 to vector<16x16xf32>
    %600 = arith.mulf %599, %593 : vector<16x16xf32>
    %601 = arith.addf %592, %600 : vector<16x16xf32>
    %602 = vector.extract_strided_slice %547 {offsets = [0, 6], sizes = [16, 16], strides = [1, 1]} : vector<16x128xf32> to vector<16x16xf32>
    %c62 = arith.constant 62 : index
    %603 = memref.load %arg2[%c62] : memref<196xf32, #tpu.memory_space<smem>>
    %604 = vector.broadcast %603 : f32 to vector<16x16xf32>
    %605 = arith.mulf %604, %602 : vector<16x16xf32>
    %606 = arith.addf %597, %605 : vector<16x16xf32>
    %c160 = arith.constant 160 : index
    %607 = memref.load %arg2[%c160] : memref<196xf32, #tpu.memory_space<smem>>
    %608 = vector.broadcast %607 : f32 to vector<16x16xf32>
    %609 = arith.mulf %608, %602 : vector<16x16xf32>
    %610 = arith.addf %601, %609 : vector<16x16xf32>
    %c0_74 = arith.constant 0 : index
    %c1_75 = arith.constant 1 : index
    %c2_76 = arith.constant 2 : index
    %c0_77 = arith.constant 0 : index
    %611 = vector.load %arg7[%c0_74, %c1_75, %c2_76, %c0_77] : memref<1x2x22x128xf32, #tpu.memory_space<vmem>>, vector<1x1x16x128xf32>
    %612 = vector.shape_cast %611 : vector<1x1x16x128xf32> to vector<16x128xf32>
    %613 = vector.extract_strided_slice %612 {offsets = [0, 0], sizes = [16, 16], strides = [1, 1]} : vector<16x128xf32> to vector<16x16xf32>
    %c63 = arith.constant 63 : index
    %614 = memref.load %arg2[%c63] : memref<196xf32, #tpu.memory_space<smem>>
    %615 = vector.broadcast %614 : f32 to vector<16x16xf32>
    %616 = arith.mulf %615, %613 : vector<16x16xf32>
    %617 = arith.addf %606, %616 : vector<16x16xf32>
    %c161 = arith.constant 161 : index
    %618 = memref.load %arg2[%c161] : memref<196xf32, #tpu.memory_space<smem>>
    %619 = vector.broadcast %618 : f32 to vector<16x16xf32>
    %620 = arith.mulf %619, %613 : vector<16x16xf32>
    %621 = arith.addf %610, %620 : vector<16x16xf32>
    %622 = vector.extract_strided_slice %612 {offsets = [0, 1], sizes = [16, 16], strides = [1, 1]} : vector<16x128xf32> to vector<16x16xf32>
    %c64 = arith.constant 64 : index
    %623 = memref.load %arg2[%c64] : memref<196xf32, #tpu.memory_space<smem>>
    %624 = vector.broadcast %623 : f32 to vector<16x16xf32>
    %625 = arith.mulf %624, %622 : vector<16x16xf32>
    %626 = arith.addf %617, %625 : vector<16x16xf32>
    %c162 = arith.constant 162 : index
    %627 = memref.load %arg2[%c162] : memref<196xf32, #tpu.memory_space<smem>>
    %628 = vector.broadcast %627 : f32 to vector<16x16xf32>
    %629 = arith.mulf %628, %622 : vector<16x16xf32>
    %630 = arith.addf %621, %629 : vector<16x16xf32>
    %631 = vector.extract_strided_slice %612 {offsets = [0, 2], sizes = [16, 16], strides = [1, 1]} : vector<16x128xf32> to vector<16x16xf32>
    %c65 = arith.constant 65 : index
    %632 = memref.load %arg2[%c65] : memref<196xf32, #tpu.memory_space<smem>>
    %633 = vector.broadcast %632 : f32 to vector<16x16xf32>
    %634 = arith.mulf %633, %631 : vector<16x16xf32>
    %635 = arith.addf %626, %634 : vector<16x16xf32>
    %c163 = arith.constant 163 : index
    %636 = memref.load %arg2[%c163] : memref<196xf32, #tpu.memory_space<smem>>
    %637 = vector.broadcast %636 : f32 to vector<16x16xf32>
    %638 = arith.mulf %637, %631 : vector<16x16xf32>
    %639 = arith.addf %630, %638 : vector<16x16xf32>
    %640 = vector.extract_strided_slice %612 {offsets = [0, 3], sizes = [16, 16], strides = [1, 1]} : vector<16x128xf32> to vector<16x16xf32>
    %c66 = arith.constant 66 : index
    %641 = memref.load %arg2[%c66] : memref<196xf32, #tpu.memory_space<smem>>
    %642 = vector.broadcast %641 : f32 to vector<16x16xf32>
    %643 = arith.mulf %642, %640 : vector<16x16xf32>
    %644 = arith.addf %635, %643 : vector<16x16xf32>
    %c164 = arith.constant 164 : index
    %645 = memref.load %arg2[%c164] : memref<196xf32, #tpu.memory_space<smem>>
    %646 = vector.broadcast %645 : f32 to vector<16x16xf32>
    %647 = arith.mulf %646, %640 : vector<16x16xf32>
    %648 = arith.addf %639, %647 : vector<16x16xf32>
    %649 = vector.extract_strided_slice %612 {offsets = [0, 4], sizes = [16, 16], strides = [1, 1]} : vector<16x128xf32> to vector<16x16xf32>
    %c67 = arith.constant 67 : index
    %650 = memref.load %arg2[%c67] : memref<196xf32, #tpu.memory_space<smem>>
    %651 = vector.broadcast %650 : f32 to vector<16x16xf32>
    %652 = arith.mulf %651, %649 : vector<16x16xf32>
    %653 = arith.addf %644, %652 : vector<16x16xf32>
    %c165 = arith.constant 165 : index
    %654 = memref.load %arg2[%c165] : memref<196xf32, #tpu.memory_space<smem>>
    %655 = vector.broadcast %654 : f32 to vector<16x16xf32>
    %656 = arith.mulf %655, %649 : vector<16x16xf32>
    %657 = arith.addf %648, %656 : vector<16x16xf32>
    %658 = vector.extract_strided_slice %612 {offsets = [0, 5], sizes = [16, 16], strides = [1, 1]} : vector<16x128xf32> to vector<16x16xf32>
    %c68 = arith.constant 68 : index
    %659 = memref.load %arg2[%c68] : memref<196xf32, #tpu.memory_space<smem>>
    %660 = vector.broadcast %659 : f32 to vector<16x16xf32>
    %661 = arith.mulf %660, %658 : vector<16x16xf32>
    %662 = arith.addf %653, %661 : vector<16x16xf32>
    %c166 = arith.constant 166 : index
    %663 = memref.load %arg2[%c166] : memref<196xf32, #tpu.memory_space<smem>>
    %664 = vector.broadcast %663 : f32 to vector<16x16xf32>
    %665 = arith.mulf %664, %658 : vector<16x16xf32>
    %666 = arith.addf %657, %665 : vector<16x16xf32>
    %667 = vector.extract_strided_slice %612 {offsets = [0, 6], sizes = [16, 16], strides = [1, 1]} : vector<16x128xf32> to vector<16x16xf32>
    %c69 = arith.constant 69 : index
    %668 = memref.load %arg2[%c69] : memref<196xf32, #tpu.memory_space<smem>>
    %669 = vector.broadcast %668 : f32 to vector<16x16xf32>
    %670 = arith.mulf %669, %667 : vector<16x16xf32>
    %671 = arith.addf %662, %670 : vector<16x16xf32>
    %c167 = arith.constant 167 : index
    %672 = memref.load %arg2[%c167] : memref<196xf32, #tpu.memory_space<smem>>
    %673 = vector.broadcast %672 : f32 to vector<16x16xf32>
    %674 = arith.mulf %673, %667 : vector<16x16xf32>
    %675 = arith.addf %666, %674 : vector<16x16xf32>
    %c0_78 = arith.constant 0 : index
    %c1_79 = arith.constant 1 : index
    %c3_80 = arith.constant 3 : index
    %c0_81 = arith.constant 0 : index
    %676 = vector.load %arg7[%c0_78, %c1_79, %c3_80, %c0_81] : memref<1x2x22x128xf32, #tpu.memory_space<vmem>>, vector<1x1x16x128xf32>
    %677 = vector.shape_cast %676 : vector<1x1x16x128xf32> to vector<16x128xf32>
    %678 = vector.extract_strided_slice %677 {offsets = [0, 0], sizes = [16, 16], strides = [1, 1]} : vector<16x128xf32> to vector<16x16xf32>
    %c70 = arith.constant 70 : index
    %679 = memref.load %arg2[%c70] : memref<196xf32, #tpu.memory_space<smem>>
    %680 = vector.broadcast %679 : f32 to vector<16x16xf32>
    %681 = arith.mulf %680, %678 : vector<16x16xf32>
    %682 = arith.addf %671, %681 : vector<16x16xf32>
    %c168 = arith.constant 168 : index
    %683 = memref.load %arg2[%c168] : memref<196xf32, #tpu.memory_space<smem>>
    %684 = vector.broadcast %683 : f32 to vector<16x16xf32>
    %685 = arith.mulf %684, %678 : vector<16x16xf32>
    %686 = arith.addf %675, %685 : vector<16x16xf32>
    %687 = vector.extract_strided_slice %677 {offsets = [0, 1], sizes = [16, 16], strides = [1, 1]} : vector<16x128xf32> to vector<16x16xf32>
    %c71 = arith.constant 71 : index
    %688 = memref.load %arg2[%c71] : memref<196xf32, #tpu.memory_space<smem>>
    %689 = vector.broadcast %688 : f32 to vector<16x16xf32>
    %690 = arith.mulf %689, %687 : vector<16x16xf32>
    %691 = arith.addf %682, %690 : vector<16x16xf32>
    %c169 = arith.constant 169 : index
    %692 = memref.load %arg2[%c169] : memref<196xf32, #tpu.memory_space<smem>>
    %693 = vector.broadcast %692 : f32 to vector<16x16xf32>
    %694 = arith.mulf %693, %687 : vector<16x16xf32>
    %695 = arith.addf %686, %694 : vector<16x16xf32>
    %696 = vector.extract_strided_slice %677 {offsets = [0, 2], sizes = [16, 16], strides = [1, 1]} : vector<16x128xf32> to vector<16x16xf32>
    %c72 = arith.constant 72 : index
    %697 = memref.load %arg2[%c72] : memref<196xf32, #tpu.memory_space<smem>>
    %698 = vector.broadcast %697 : f32 to vector<16x16xf32>
    %699 = arith.mulf %698, %696 : vector<16x16xf32>
    %700 = arith.addf %691, %699 : vector<16x16xf32>
    %c170 = arith.constant 170 : index
    %701 = memref.load %arg2[%c170] : memref<196xf32, #tpu.memory_space<smem>>
    %702 = vector.broadcast %701 : f32 to vector<16x16xf32>
    %703 = arith.mulf %702, %696 : vector<16x16xf32>
    %704 = arith.addf %695, %703 : vector<16x16xf32>
    %705 = vector.extract_strided_slice %677 {offsets = [0, 3], sizes = [16, 16], strides = [1, 1]} : vector<16x128xf32> to vector<16x16xf32>
    %c73 = arith.constant 73 : index
    %706 = memref.load %arg2[%c73] : memref<196xf32, #tpu.memory_space<smem>>
    %707 = vector.broadcast %706 : f32 to vector<16x16xf32>
    %708 = arith.mulf %707, %705 : vector<16x16xf32>
    %709 = arith.addf %700, %708 : vector<16x16xf32>
    %c171 = arith.constant 171 : index
    %710 = memref.load %arg2[%c171] : memref<196xf32, #tpu.memory_space<smem>>
    %711 = vector.broadcast %710 : f32 to vector<16x16xf32>
    %712 = arith.mulf %711, %705 : vector<16x16xf32>
    %713 = arith.addf %704, %712 : vector<16x16xf32>
    %714 = vector.extract_strided_slice %677 {offsets = [0, 4], sizes = [16, 16], strides = [1, 1]} : vector<16x128xf32> to vector<16x16xf32>
    %c74 = arith.constant 74 : index
    %715 = memref.load %arg2[%c74] : memref<196xf32, #tpu.memory_space<smem>>
    %716 = vector.broadcast %715 : f32 to vector<16x16xf32>
    %717 = arith.mulf %716, %714 : vector<16x16xf32>
    %718 = arith.addf %709, %717 : vector<16x16xf32>
    %c172 = arith.constant 172 : index
    %719 = memref.load %arg2[%c172] : memref<196xf32, #tpu.memory_space<smem>>
    %720 = vector.broadcast %719 : f32 to vector<16x16xf32>
    %721 = arith.mulf %720, %714 : vector<16x16xf32>
    %722 = arith.addf %713, %721 : vector<16x16xf32>
    %723 = vector.extract_strided_slice %677 {offsets = [0, 5], sizes = [16, 16], strides = [1, 1]} : vector<16x128xf32> to vector<16x16xf32>
    %c75 = arith.constant 75 : index
    %724 = memref.load %arg2[%c75] : memref<196xf32, #tpu.memory_space<smem>>
    %725 = vector.broadcast %724 : f32 to vector<16x16xf32>
    %726 = arith.mulf %725, %723 : vector<16x16xf32>
    %727 = arith.addf %718, %726 : vector<16x16xf32>
    %c173 = arith.constant 173 : index
    %728 = memref.load %arg2[%c173] : memref<196xf32, #tpu.memory_space<smem>>
    %729 = vector.broadcast %728 : f32 to vector<16x16xf32>
    %730 = arith.mulf %729, %723 : vector<16x16xf32>
    %731 = arith.addf %722, %730 : vector<16x16xf32>
    %732 = vector.extract_strided_slice %677 {offsets = [0, 6], sizes = [16, 16], strides = [1, 1]} : vector<16x128xf32> to vector<16x16xf32>
    %c76 = arith.constant 76 : index
    %733 = memref.load %arg2[%c76] : memref<196xf32, #tpu.memory_space<smem>>
    %734 = vector.broadcast %733 : f32 to vector<16x16xf32>
    %735 = arith.mulf %734, %732 : vector<16x16xf32>
    %736 = arith.addf %727, %735 : vector<16x16xf32>
    %c174 = arith.constant 174 : index
    %737 = memref.load %arg2[%c174] : memref<196xf32, #tpu.memory_space<smem>>
    %738 = vector.broadcast %737 : f32 to vector<16x16xf32>
    %739 = arith.mulf %738, %732 : vector<16x16xf32>
    %740 = arith.addf %731, %739 : vector<16x16xf32>
    %c0_82 = arith.constant 0 : index
    %c1_83 = arith.constant 1 : index
    %c4_84 = arith.constant 4 : index
    %c0_85 = arith.constant 0 : index
    %741 = vector.load %arg7[%c0_82, %c1_83, %c4_84, %c0_85] : memref<1x2x22x128xf32, #tpu.memory_space<vmem>>, vector<1x1x16x128xf32>
    %742 = vector.shape_cast %741 : vector<1x1x16x128xf32> to vector<16x128xf32>
    %743 = vector.extract_strided_slice %742 {offsets = [0, 0], sizes = [16, 16], strides = [1, 1]} : vector<16x128xf32> to vector<16x16xf32>
    %c77 = arith.constant 77 : index
    %744 = memref.load %arg2[%c77] : memref<196xf32, #tpu.memory_space<smem>>
    %745 = vector.broadcast %744 : f32 to vector<16x16xf32>
    %746 = arith.mulf %745, %743 : vector<16x16xf32>
    %747 = arith.addf %736, %746 : vector<16x16xf32>
    %c175 = arith.constant 175 : index
    %748 = memref.load %arg2[%c175] : memref<196xf32, #tpu.memory_space<smem>>
    %749 = vector.broadcast %748 : f32 to vector<16x16xf32>
    %750 = arith.mulf %749, %743 : vector<16x16xf32>
    %751 = arith.addf %740, %750 : vector<16x16xf32>
    %752 = vector.extract_strided_slice %742 {offsets = [0, 1], sizes = [16, 16], strides = [1, 1]} : vector<16x128xf32> to vector<16x16xf32>
    %c78 = arith.constant 78 : index
    %753 = memref.load %arg2[%c78] : memref<196xf32, #tpu.memory_space<smem>>
    %754 = vector.broadcast %753 : f32 to vector<16x16xf32>
    %755 = arith.mulf %754, %752 : vector<16x16xf32>
    %756 = arith.addf %747, %755 : vector<16x16xf32>
    %c176 = arith.constant 176 : index
    %757 = memref.load %arg2[%c176] : memref<196xf32, #tpu.memory_space<smem>>
    %758 = vector.broadcast %757 : f32 to vector<16x16xf32>
    %759 = arith.mulf %758, %752 : vector<16x16xf32>
    %760 = arith.addf %751, %759 : vector<16x16xf32>
    %761 = vector.extract_strided_slice %742 {offsets = [0, 2], sizes = [16, 16], strides = [1, 1]} : vector<16x128xf32> to vector<16x16xf32>
    %c79 = arith.constant 79 : index
    %762 = memref.load %arg2[%c79] : memref<196xf32, #tpu.memory_space<smem>>
    %763 = vector.broadcast %762 : f32 to vector<16x16xf32>
    %764 = arith.mulf %763, %761 : vector<16x16xf32>
    %765 = arith.addf %756, %764 : vector<16x16xf32>
    %c177 = arith.constant 177 : index
    %766 = memref.load %arg2[%c177] : memref<196xf32, #tpu.memory_space<smem>>
    %767 = vector.broadcast %766 : f32 to vector<16x16xf32>
    %768 = arith.mulf %767, %761 : vector<16x16xf32>
    %769 = arith.addf %760, %768 : vector<16x16xf32>
    %770 = vector.extract_strided_slice %742 {offsets = [0, 3], sizes = [16, 16], strides = [1, 1]} : vector<16x128xf32> to vector<16x16xf32>
    %c80 = arith.constant 80 : index
    %771 = memref.load %arg2[%c80] : memref<196xf32, #tpu.memory_space<smem>>
    %772 = vector.broadcast %771 : f32 to vector<16x16xf32>
    %773 = arith.mulf %772, %770 : vector<16x16xf32>
    %774 = arith.addf %765, %773 : vector<16x16xf32>
    %c178 = arith.constant 178 : index
    %775 = memref.load %arg2[%c178] : memref<196xf32, #tpu.memory_space<smem>>
    %776 = vector.broadcast %775 : f32 to vector<16x16xf32>
    %777 = arith.mulf %776, %770 : vector<16x16xf32>
    %778 = arith.addf %769, %777 : vector<16x16xf32>
    %779 = vector.extract_strided_slice %742 {offsets = [0, 4], sizes = [16, 16], strides = [1, 1]} : vector<16x128xf32> to vector<16x16xf32>
    %c81 = arith.constant 81 : index
    %780 = memref.load %arg2[%c81] : memref<196xf32, #tpu.memory_space<smem>>
    %781 = vector.broadcast %780 : f32 to vector<16x16xf32>
    %782 = arith.mulf %781, %779 : vector<16x16xf32>
    %783 = arith.addf %774, %782 : vector<16x16xf32>
    %c179 = arith.constant 179 : index
    %784 = memref.load %arg2[%c179] : memref<196xf32, #tpu.memory_space<smem>>
    %785 = vector.broadcast %784 : f32 to vector<16x16xf32>
    %786 = arith.mulf %785, %779 : vector<16x16xf32>
    %787 = arith.addf %778, %786 : vector<16x16xf32>
    %788 = vector.extract_strided_slice %742 {offsets = [0, 5], sizes = [16, 16], strides = [1, 1]} : vector<16x128xf32> to vector<16x16xf32>
    %c82 = arith.constant 82 : index
    %789 = memref.load %arg2[%c82] : memref<196xf32, #tpu.memory_space<smem>>
    %790 = vector.broadcast %789 : f32 to vector<16x16xf32>
    %791 = arith.mulf %790, %788 : vector<16x16xf32>
    %792 = arith.addf %783, %791 : vector<16x16xf32>
    %c180 = arith.constant 180 : index
    %793 = memref.load %arg2[%c180] : memref<196xf32, #tpu.memory_space<smem>>
    %794 = vector.broadcast %793 : f32 to vector<16x16xf32>
    %795 = arith.mulf %794, %788 : vector<16x16xf32>
    %796 = arith.addf %787, %795 : vector<16x16xf32>
    %797 = vector.extract_strided_slice %742 {offsets = [0, 6], sizes = [16, 16], strides = [1, 1]} : vector<16x128xf32> to vector<16x16xf32>
    %c83 = arith.constant 83 : index
    %798 = memref.load %arg2[%c83] : memref<196xf32, #tpu.memory_space<smem>>
    %799 = vector.broadcast %798 : f32 to vector<16x16xf32>
    %800 = arith.mulf %799, %797 : vector<16x16xf32>
    %801 = arith.addf %792, %800 : vector<16x16xf32>
    %c181 = arith.constant 181 : index
    %802 = memref.load %arg2[%c181] : memref<196xf32, #tpu.memory_space<smem>>
    %803 = vector.broadcast %802 : f32 to vector<16x16xf32>
    %804 = arith.mulf %803, %797 : vector<16x16xf32>
    %805 = arith.addf %796, %804 : vector<16x16xf32>
    %c0_86 = arith.constant 0 : index
    %c1_87 = arith.constant 1 : index
    %c5_88 = arith.constant 5 : index
    %c0_89 = arith.constant 0 : index
    %806 = vector.load %arg7[%c0_86, %c1_87, %c5_88, %c0_89] : memref<1x2x22x128xf32, #tpu.memory_space<vmem>>, vector<1x1x16x128xf32>
    %807 = vector.shape_cast %806 : vector<1x1x16x128xf32> to vector<16x128xf32>
    %808 = vector.extract_strided_slice %807 {offsets = [0, 0], sizes = [16, 16], strides = [1, 1]} : vector<16x128xf32> to vector<16x16xf32>
    %c84 = arith.constant 84 : index
    %809 = memref.load %arg2[%c84] : memref<196xf32, #tpu.memory_space<smem>>
    %810 = vector.broadcast %809 : f32 to vector<16x16xf32>
    %811 = arith.mulf %810, %808 : vector<16x16xf32>
    %812 = arith.addf %801, %811 : vector<16x16xf32>
    %c182 = arith.constant 182 : index
    %813 = memref.load %arg2[%c182] : memref<196xf32, #tpu.memory_space<smem>>
    %814 = vector.broadcast %813 : f32 to vector<16x16xf32>
    %815 = arith.mulf %814, %808 : vector<16x16xf32>
    %816 = arith.addf %805, %815 : vector<16x16xf32>
    %817 = vector.extract_strided_slice %807 {offsets = [0, 1], sizes = [16, 16], strides = [1, 1]} : vector<16x128xf32> to vector<16x16xf32>
    %c85 = arith.constant 85 : index
    %818 = memref.load %arg2[%c85] : memref<196xf32, #tpu.memory_space<smem>>
    %819 = vector.broadcast %818 : f32 to vector<16x16xf32>
    %820 = arith.mulf %819, %817 : vector<16x16xf32>
    %821 = arith.addf %812, %820 : vector<16x16xf32>
    %c183 = arith.constant 183 : index
    %822 = memref.load %arg2[%c183] : memref<196xf32, #tpu.memory_space<smem>>
    %823 = vector.broadcast %822 : f32 to vector<16x16xf32>
    %824 = arith.mulf %823, %817 : vector<16x16xf32>
    %825 = arith.addf %816, %824 : vector<16x16xf32>
    %826 = vector.extract_strided_slice %807 {offsets = [0, 2], sizes = [16, 16], strides = [1, 1]} : vector<16x128xf32> to vector<16x16xf32>
    %c86 = arith.constant 86 : index
    %827 = memref.load %arg2[%c86] : memref<196xf32, #tpu.memory_space<smem>>
    %828 = vector.broadcast %827 : f32 to vector<16x16xf32>
    %829 = arith.mulf %828, %826 : vector<16x16xf32>
    %830 = arith.addf %821, %829 : vector<16x16xf32>
    %c184 = arith.constant 184 : index
    %831 = memref.load %arg2[%c184] : memref<196xf32, #tpu.memory_space<smem>>
    %832 = vector.broadcast %831 : f32 to vector<16x16xf32>
    %833 = arith.mulf %832, %826 : vector<16x16xf32>
    %834 = arith.addf %825, %833 : vector<16x16xf32>
    %835 = vector.extract_strided_slice %807 {offsets = [0, 3], sizes = [16, 16], strides = [1, 1]} : vector<16x128xf32> to vector<16x16xf32>
    %c87 = arith.constant 87 : index
    %836 = memref.load %arg2[%c87] : memref<196xf32, #tpu.memory_space<smem>>
    %837 = vector.broadcast %836 : f32 to vector<16x16xf32>
    %838 = arith.mulf %837, %835 : vector<16x16xf32>
    %839 = arith.addf %830, %838 : vector<16x16xf32>
    %c185 = arith.constant 185 : index
    %840 = memref.load %arg2[%c185] : memref<196xf32, #tpu.memory_space<smem>>
    %841 = vector.broadcast %840 : f32 to vector<16x16xf32>
    %842 = arith.mulf %841, %835 : vector<16x16xf32>
    %843 = arith.addf %834, %842 : vector<16x16xf32>
    %844 = vector.extract_strided_slice %807 {offsets = [0, 4], sizes = [16, 16], strides = [1, 1]} : vector<16x128xf32> to vector<16x16xf32>
    %c88 = arith.constant 88 : index
    %845 = memref.load %arg2[%c88] : memref<196xf32, #tpu.memory_space<smem>>
    %846 = vector.broadcast %845 : f32 to vector<16x16xf32>
    %847 = arith.mulf %846, %844 : vector<16x16xf32>
    %848 = arith.addf %839, %847 : vector<16x16xf32>
    %c186 = arith.constant 186 : index
    %849 = memref.load %arg2[%c186] : memref<196xf32, #tpu.memory_space<smem>>
    %850 = vector.broadcast %849 : f32 to vector<16x16xf32>
    %851 = arith.mulf %850, %844 : vector<16x16xf32>
    %852 = arith.addf %843, %851 : vector<16x16xf32>
    %853 = vector.extract_strided_slice %807 {offsets = [0, 5], sizes = [16, 16], strides = [1, 1]} : vector<16x128xf32> to vector<16x16xf32>
    %c89 = arith.constant 89 : index
    %854 = memref.load %arg2[%c89] : memref<196xf32, #tpu.memory_space<smem>>
    %855 = vector.broadcast %854 : f32 to vector<16x16xf32>
    %856 = arith.mulf %855, %853 : vector<16x16xf32>
    %857 = arith.addf %848, %856 : vector<16x16xf32>
    %c187 = arith.constant 187 : index
    %858 = memref.load %arg2[%c187] : memref<196xf32, #tpu.memory_space<smem>>
    %859 = vector.broadcast %858 : f32 to vector<16x16xf32>
    %860 = arith.mulf %859, %853 : vector<16x16xf32>
    %861 = arith.addf %852, %860 : vector<16x16xf32>
    %862 = vector.extract_strided_slice %807 {offsets = [0, 6], sizes = [16, 16], strides = [1, 1]} : vector<16x128xf32> to vector<16x16xf32>
    %c90 = arith.constant 90 : index
    %863 = memref.load %arg2[%c90] : memref<196xf32, #tpu.memory_space<smem>>
    %864 = vector.broadcast %863 : f32 to vector<16x16xf32>
    %865 = arith.mulf %864, %862 : vector<16x16xf32>
    %866 = arith.addf %857, %865 : vector<16x16xf32>
    %c188 = arith.constant 188 : index
    %867 = memref.load %arg2[%c188] : memref<196xf32, #tpu.memory_space<smem>>
    %868 = vector.broadcast %867 : f32 to vector<16x16xf32>
    %869 = arith.mulf %868, %862 : vector<16x16xf32>
    %870 = arith.addf %861, %869 : vector<16x16xf32>
    %c0_90 = arith.constant 0 : index
    %c1_91 = arith.constant 1 : index
    %c6_92 = arith.constant 6 : index
    %c0_93 = arith.constant 0 : index
    %871 = vector.load %arg7[%c0_90, %c1_91, %c6_92, %c0_93] : memref<1x2x22x128xf32, #tpu.memory_space<vmem>>, vector<1x1x16x128xf32>
    %872 = vector.shape_cast %871 : vector<1x1x16x128xf32> to vector<16x128xf32>
    %873 = vector.extract_strided_slice %872 {offsets = [0, 0], sizes = [16, 16], strides = [1, 1]} : vector<16x128xf32> to vector<16x16xf32>
    %c91 = arith.constant 91 : index
    %874 = memref.load %arg2[%c91] : memref<196xf32, #tpu.memory_space<smem>>
    %875 = vector.broadcast %874 : f32 to vector<16x16xf32>
    %876 = arith.mulf %875, %873 : vector<16x16xf32>
    %877 = arith.addf %866, %876 : vector<16x16xf32>
    %c189 = arith.constant 189 : index
    %878 = memref.load %arg2[%c189] : memref<196xf32, #tpu.memory_space<smem>>
    %879 = vector.broadcast %878 : f32 to vector<16x16xf32>
    %880 = arith.mulf %879, %873 : vector<16x16xf32>
    %881 = arith.addf %870, %880 : vector<16x16xf32>
    %882 = vector.extract_strided_slice %872 {offsets = [0, 1], sizes = [16, 16], strides = [1, 1]} : vector<16x128xf32> to vector<16x16xf32>
    %c92 = arith.constant 92 : index
    %883 = memref.load %arg2[%c92] : memref<196xf32, #tpu.memory_space<smem>>
    %884 = vector.broadcast %883 : f32 to vector<16x16xf32>
    %885 = arith.mulf %884, %882 : vector<16x16xf32>
    %886 = arith.addf %877, %885 : vector<16x16xf32>
    %c190 = arith.constant 190 : index
    %887 = memref.load %arg2[%c190] : memref<196xf32, #tpu.memory_space<smem>>
    %888 = vector.broadcast %887 : f32 to vector<16x16xf32>
    %889 = arith.mulf %888, %882 : vector<16x16xf32>
    %890 = arith.addf %881, %889 : vector<16x16xf32>
    %891 = vector.extract_strided_slice %872 {offsets = [0, 2], sizes = [16, 16], strides = [1, 1]} : vector<16x128xf32> to vector<16x16xf32>
    %c93 = arith.constant 93 : index
    %892 = memref.load %arg2[%c93] : memref<196xf32, #tpu.memory_space<smem>>
    %893 = vector.broadcast %892 : f32 to vector<16x16xf32>
    %894 = arith.mulf %893, %891 : vector<16x16xf32>
    %895 = arith.addf %886, %894 : vector<16x16xf32>
    %c191 = arith.constant 191 : index
    %896 = memref.load %arg2[%c191] : memref<196xf32, #tpu.memory_space<smem>>
    %897 = vector.broadcast %896 : f32 to vector<16x16xf32>
    %898 = arith.mulf %897, %891 : vector<16x16xf32>
    %899 = arith.addf %890, %898 : vector<16x16xf32>
    %900 = vector.extract_strided_slice %872 {offsets = [0, 3], sizes = [16, 16], strides = [1, 1]} : vector<16x128xf32> to vector<16x16xf32>
    %c94 = arith.constant 94 : index
    %901 = memref.load %arg2[%c94] : memref<196xf32, #tpu.memory_space<smem>>
    %902 = vector.broadcast %901 : f32 to vector<16x16xf32>
    %903 = arith.mulf %902, %900 : vector<16x16xf32>
    %904 = arith.addf %895, %903 : vector<16x16xf32>
    %c192 = arith.constant 192 : index
    %905 = memref.load %arg2[%c192] : memref<196xf32, #tpu.memory_space<smem>>
    %906 = vector.broadcast %905 : f32 to vector<16x16xf32>
    %907 = arith.mulf %906, %900 : vector<16x16xf32>
    %908 = arith.addf %899, %907 : vector<16x16xf32>
    %909 = vector.extract_strided_slice %872 {offsets = [0, 4], sizes = [16, 16], strides = [1, 1]} : vector<16x128xf32> to vector<16x16xf32>
    %c95 = arith.constant 95 : index
    %910 = memref.load %arg2[%c95] : memref<196xf32, #tpu.memory_space<smem>>
    %911 = vector.broadcast %910 : f32 to vector<16x16xf32>
    %912 = arith.mulf %911, %909 : vector<16x16xf32>
    %913 = arith.addf %904, %912 : vector<16x16xf32>
    %c193 = arith.constant 193 : index
    %914 = memref.load %arg2[%c193] : memref<196xf32, #tpu.memory_space<smem>>
    %915 = vector.broadcast %914 : f32 to vector<16x16xf32>
    %916 = arith.mulf %915, %909 : vector<16x16xf32>
    %917 = arith.addf %908, %916 : vector<16x16xf32>
    %918 = vector.extract_strided_slice %872 {offsets = [0, 5], sizes = [16, 16], strides = [1, 1]} : vector<16x128xf32> to vector<16x16xf32>
    %c96 = arith.constant 96 : index
    %919 = memref.load %arg2[%c96] : memref<196xf32, #tpu.memory_space<smem>>
    %920 = vector.broadcast %919 : f32 to vector<16x16xf32>
    %921 = arith.mulf %920, %918 : vector<16x16xf32>
    %922 = arith.addf %913, %921 : vector<16x16xf32>
    %c194 = arith.constant 194 : index
    %923 = memref.load %arg2[%c194] : memref<196xf32, #tpu.memory_space<smem>>
    %924 = vector.broadcast %923 : f32 to vector<16x16xf32>
    %925 = arith.mulf %924, %918 : vector<16x16xf32>
    %926 = arith.addf %917, %925 : vector<16x16xf32>
    %927 = vector.extract_strided_slice %872 {offsets = [0, 6], sizes = [16, 16], strides = [1, 1]} : vector<16x128xf32> to vector<16x16xf32>
    %c97 = arith.constant 97 : index
    %928 = memref.load %arg2[%c97] : memref<196xf32, #tpu.memory_space<smem>>
    %929 = vector.broadcast %928 : f32 to vector<16x16xf32>
    %930 = arith.mulf %929, %927 : vector<16x16xf32>
    %931 = arith.addf %922, %930 : vector<16x16xf32>
    %c195 = arith.constant 195 : index
    %932 = memref.load %arg2[%c195] : memref<196xf32, #tpu.memory_space<smem>>
    %933 = vector.broadcast %932 : f32 to vector<16x16xf32>
    %934 = arith.mulf %933, %927 : vector<16x16xf32>
    %935 = arith.addf %926, %934 : vector<16x16xf32>
    %c0_94 = arith.constant 0 : index
    %936 = memref.load %arg3[%c0_94] : memref<2xf32, #tpu.memory_space<smem>>
    %937 = vector.broadcast %936 : f32 to vector<16x16xf32>
    %938 = arith.addf %931, %937 : vector<16x16xf32>
    %cst_95 = arith.constant 0.000000e+00 : f32
    %939 = vector.broadcast %cst_95 : f32 to vector<16x16xf32>
    %940 = arith.maximumf %938, %939 : vector<16x16xf32>
    %c1_96 = arith.constant 1 : index
    %941 = memref.load %arg3[%c1_96] : memref<2xf32, #tpu.memory_space<smem>>
    %942 = vector.broadcast %941 : f32 to vector<16x16xf32>
    %943 = arith.addf %935, %942 : vector<16x16xf32>
    %cst_97 = arith.constant 0.000000e+00 : f32
    %944 = vector.broadcast %cst_97 : f32 to vector<16x16xf32>
    %945 = arith.maximumf %943, %944 : vector<16x16xf32>
    %c0_98 = arith.constant 0 : index
    %946 = memref.load %arg4[%c0_98] : memref<2xf32, #tpu.memory_space<smem>>
    %947 = vector.broadcast %946 : f32 to vector<16x16xf32>
    %948 = arith.mulf %947, %940 : vector<16x16xf32>
    %c1_99 = arith.constant 1 : index
    %949 = memref.load %arg4[%c1_99] : memref<2xf32, #tpu.memory_space<smem>>
    %950 = vector.broadcast %949 : f32 to vector<16x16xf32>
    %951 = arith.mulf %950, %945 : vector<16x16xf32>
    %952 = arith.addf %948, %951 : vector<16x16xf32>
    %c0_100 = arith.constant 0 : index
    %953 = memref.load %arg5[%c0_100] : memref<1xf32, #tpu.memory_space<smem>>
    %954 = vector.broadcast %953 : f32 to vector<16x16xf32>
    %955 = arith.addf %952, %954 : vector<16x16xf32>
    %cst_101 = arith.constant 5.000000e-01 : f32
    %956 = vector.broadcast %cst_101 : f32 to vector<16x16xf32>
    %957 = arith.mulf %956, %955 : vector<16x16xf32>
    %958 = math.tanh %957 : vector<16x16xf32>
    %cst_102 = arith.constant 5.000000e-01 : f32
    %959 = vector.broadcast %cst_102 : f32 to vector<16x16xf32>
    %960 = arith.mulf %959, %958 : vector<16x16xf32>
    %cst_103 = arith.constant 5.000000e-01 : f32
    %961 = vector.broadcast %cst_103 : f32 to vector<16x16xf32>
    %962 = arith.addf %960, %961 : vector<16x16xf32>
    %c0_104 = arith.constant 0 : index
    %c0_105 = arith.constant 0 : index
    %c0_106 = arith.constant 0 : index
    %c0_107 = arith.constant 0 : index
    %963 = vector.load %arg6[%c0_104, %c0_105, %c0_106, %c0_107] : memref<1x1x16x16xf32, #tpu.memory_space<vmem>>, vector<1x1x16x16xf32>
    %964 = vector.shape_cast %963 : vector<1x1x16x16xf32> to vector<16x16xf32>
    %965 = vector.shape_cast %962 : vector<16x16xf32> to vector<1x1x16x16xf32>
    tpu.vector_store %arg6[%c0_104, %c0_105, %c0_106, %c0_107], %965 {strides = array<i32>} : memref<1x1x16x16xf32, #tpu.memory_space<vmem>>, vector<1x1x16x16xf32>,
    return
  }
  func.func @transform_0(%arg0: i32) -> (i32, i32, i32, i32) {
    %c0_i32 = arith.constant 0 : i32
    %c0_i32_0 = arith.constant 0 : i32
    %c0_i32_1 = arith.constant 0 : i32
    %c0_i32_2 = arith.constant 0 : i32
    return %arg0, %c0_i32, %c0_i32_0, %c0_i32_1 : i32, i32, i32, i32
  }
  func.func @transform_1(%arg0: i32) -> i32 {
    %c0_i32 = arith.constant 0 : i32
    %c0_i32_0 = arith.constant 0 : i32
    return %c0_i32 : i32
  }
  func.func @transform_2(%arg0: i32) -> i32 {
    %c0_i32 = arith.constant 0 : i32
    %c0_i32_0 = arith.constant 0 : i32
    return %c0_i32 : i32
  }
  func.func @transform_3(%arg0: i32) -> i32 {
    %c0_i32 = arith.constant 0 : i32
    %c0_i32_0 = arith.constant 0 : i32
    return %c0_i32 : i32
  }
  func.func @transform_4(%arg0: i32) -> i32 {
    %c0_i32 = arith.constant 0 : i32
    %c0_i32_0 = arith.constant 0 : i32
    return %c0_i32 : i32
  }
  func.func @transform_5(%arg0: i32) -> (i32, i32, i32, i32) {
    %c0_i32 = arith.constant 0 : i32
    %c0_i32_0 = arith.constant 0 : i32
    %c0_i32_1 = arith.constant 0 : i32
    %c0_i32_2 = arith.constant 0 : i32
    return %arg0, %c0_i32, %c0_i32_0, %c0_i32_1 : i32, i32, i32, i32
  }
}

</mosaic_0001>

<llo_original>
// kernel: spatial_attention_forward.1
$region0: #{spatial_attention_forward.1}
  #allocation0 [shape = 'u32[]', space=smem, size = 0x4, offset = 0x4, fixed_abs, tag = 'smem constant byte address 0x4 - core index']
  #allocation1 [shape = 'u32[144,128]{1,0:T(1,128)}', space=vmem, size = 0x12000, scoped, tag = 'internal scratch']
  #allocation2 [shape = 'f32[1,2,22,128]{3,2,1,0:T(8,128)}', space=vmem, size = 0x6000, scoped, tag = 'scratch operand']
  #allocation3 [shape = 'f32[1]{0:T(128)S(6)}', space=smem, size = 0x200, scoped, tag = 'scoped memory for spatial_attention_forward.1']
  %s0 = inlined_call_operand.hbm [shape: f32[2,4,16,16], index: 0, kind: input, shape index: {}]
  %s1 = inlined_call_operand.vmem [shape: f32[196], index: 1, kind: input, shape index: {}]
  %s2 = inlined_call_operand.vmem [shape: f32[2], index: 2, kind: input, shape index: {}]
  %s3 = inlined_call_operand.vmem [shape: f32[2], index: 3, kind: input, shape index: {}]
  %s4 = inlined_call_operand.<no memory space> [shape: f32[1], index: 4, kind: input, shape index: {}]
  %s5 = inlined_call_operand.hbm [shape: f32[2,1,16,16], index: 5, kind: output, shape index: {}]
  %s6 = sld [smem:[#allocation0]]
  $region69: #{spatial_attention_forward.1} parent=0
    _
  %s8 = ssub.s32 1, %s6
  %s9 = scalar_select 0, %s8, %s6
  %10 = sst [smem:[#allocation3]] %s4
  $region1: #{spatial_attention_forward.1} parent=0
    #allocation4 [shape = 'u8[65536]{0}', space=vmem, size = 0x10000, scoped, tag = 'input window, operand 0']
    #allocation5 [shape = 's32[2]{0}', space=sflag, size = 0x8, scoped, tag = 'scoped memory for spatial_attention_forward.1']
    #allocation6 [shape = 's32[2]{0}', space=sflag, size = 0x8, scoped, tag = 'scoped memory for spatial_attention_forward.1']
    #allocation7 [shape = 's32[2]{0}', space=sflag, size = 0x8, scoped, tag = 'scoped memory for spatial_attention_forward.1']
    #allocation8 [shape = 'u8[1024]{0}', space=smem, size = 0x400, scoped, tag = 'input window, operand 1, single buffered']
    #allocation9 [shape = 'u8[512]{0}', space=smem, size = 0x200, scoped, tag = 'input window, operand 2, single buffered']
    #allocation10 [shape = 's32[1]{0}', space=sflag, size = 0x4, scoped, tag = 'scoped memory for spatial_attention_forward.1']
    #allocation11 [shape = 'u8[512]{0}', space=smem, size = 0x200, scoped, tag = 'input window, operand 3, single buffered']
    #allocation12 [shape = 'u8[16384]{0}', space=vmem, size = 0x4000, scoped, tag = 'output window, operand 0']
    %11 = vsyncpa [#allocation5], 0
    %s12 = scalar_lea.sflag [#allocation5], 1
    %13 = vsyncpa %s12, 0
    %14 = vsyncpa [#allocation7], 0
    %15 = vsyncpa [#allocation10], 0
    %16 = vsyncpa [#allocation6], 0
    %s17 = scalar_lea.sflag [#allocation6], 1
    %18 = vsyncpa %s17, 0
    loop: start=0, step=1, limit=4
    $region2: #{spatial_attention_forward.1} parent=1 // loop_pre_header
      _
    $region3: #{spatial_attention_forward.1} parent=1 // loop_header
      %s20 = sphi 0, %s24
      %p21 = scmp.ge.s32.totalorder %s20, 4
      %s30 = sphi 0, %s32
      %s33 = sphi 0, %s30
      %s34 = sphi 0, %s33
      %s50 = sphi 0, %s34
      %s54 = sphi 0, %s54
      %s56 = sphi 0, %s54
      %s57 = sphi 0, %s56
      %s71 = sphi 0, %s57
      %s75 = sphi 0, %s75
      %s77 = sphi 0, %s75
      %s78 = sphi 0, %s77
      %s92 = sphi 0, %s78
      %s96 = sphi 0, %s96
      %s98 = sphi 0, %s96
      %s99 = sphi 0, %s98
      %s113 = sphi 0, %s99
      %s117 = sphi 0, %s117
      %s119 = sphi 0, %s117
      %s120 = sphi 0, %s119
      %s134 = sphi 0, %s120
      %s140 = sphi 0, %s142
      %s143 = sphi 0, %s140
      %s144 = sphi 0, %s143
      %s160 = sphi 0, %s144
    $region4: #{spatial_attention_forward.1} parent=1 // loop_header_branch
      %23 = sbr.rel (%p21) target = $region8
    $region5: #{spatial_attention_forward.1} parent=1 // loop_body
      %s25 = ssub.s32 %s20, 1
      %s26 = ssub.s32 %s20, 2
      %s27 = sadd.s32 %s20, 1
      %s28 = ssub.s32 %s20, %s27
      %p29 = scmp.eq.s32.totalorder %s28, 0
      %s31 = sadd.s32 %s30, 1
      %s32 = scalar_select %p29, %s30, %s31
      %p35 = pneg %p29
      %p36 = scmp.eq.s32.totalorder %s20, 1
      %p37 = por %p35, %p36
      %p38 = scmp.ne.s32.totalorder %s30, %s33
      %p39 = scmp.eq.s32.totalorder %s20, 0
      %p40 = por %p38, %p39
      %p41 = scmp.ne.s32.totalorder %s30, %s33
      %p42 = scmp.eq.s32.totalorder %s25, 1
      %p43 = por %p41, %p42
      %p44 = scmp.ne.s32.totalorder %s33, %s34
      %p45 = scmp.eq.s32.totalorder %s25, 0
      %p46 = por %p44, %p45
      %p47 = scmp.ne.s32.totalorder %s33, %s34
      %p48 = scmp.eq.s32.totalorder %s26, 1
      %p49 = por %p47, %p48
      %p51 = scmp.ne.s32.totalorder %s34, %s50
      %p52 = scmp.eq.s32.totalorder %s26, 0
      %p53 = por %p51, %p52
      %s55 = sadd.s32 %s54, 1
      %p58 = scmp.eq.s32.totalorder %s20, 1
      %p59 = scmp.ne.s32.totalorder %s54, %s56
      %p60 = scmp.eq.s32.totalorder %s20, 0
      %p61 = por %p59, %p60
      %p62 = scmp.ne.s32.totalorder %s54, %s56
      %p63 = scmp.eq.s32.totalorder %s25, 1
      %p64 = por %p62, %p63
      %p65 = scmp.ne.s32.totalorder %s56, %s57
      %p66 = scmp.eq.s32.totalorder %s25, 0
      %p67 = por %p65, %p66
      %p68 = scmp.ne.s32.totalorder %s56, %s57
      %p69 = scmp.eq.s32.totalorder %s26, 1
      %p70 = por %p68, %p69
      %p72 = scmp.ne.s32.totalorder %s57, %s71
      %p73 = scmp.eq.s32.totalorder %s26, 0
      %p74 = por %p72, %p73
      %s76 = sadd.s32 %s75, 1
      %p79 = scmp.eq.s32.totalorder %s20, 1
      %p80 = scmp.ne.s32.totalorder %s75, %s77
      %p81 = scmp.eq.s32.totalorder %s20, 0
      %p82 = por %p80, %p81
      %p83 = scmp.ne.s32.totalorder %s75, %s77
      %p84 = scmp.eq.s32.totalorder %s25, 1
      %p85 = por %p83, %p84
      %p86 = scmp.ne.s32.totalorder %s77, %s78
      %p87 = scmp.eq.s32.totalorder %s25, 0
      %p88 = por %p86, %p87
      %p89 = scmp.ne.s32.totalorder %s77, %s78
      %p90 = scmp.eq.s32.totalorder %s26, 1
      %p91 = por %p89, %p90
      %p93 = scmp.ne.s32.totalorder %s78, %s92
      %p94 = scmp.eq.s32.totalorder %s26, 0
      %p95 = por %p93, %p94
      %s97 = sadd.s32 %s96, 1
      %p100 = scmp.eq.s32.totalorder %s20, 1
      %p101 = scmp.ne.s32.totalorder %s96, %s98
      %p102 = scmp.eq.s32.totalorder %s20, 0
      %p103 = por %p101, %p102
      %p104 = scmp.ne.s32.totalorder %s96, %s98
      %p105 = scmp.eq.s32.totalorder %s25, 1
      %p106 = por %p104, %p105
      %p107 = scmp.ne.s32.totalorder %s98, %s99
      %p108 = scmp.eq.s32.totalorder %s25, 0
      %p109 = por %p107, %p108
      %p110 = scmp.ne.s32.totalorder %s98, %s99
      %p111 = scmp.eq.s32.totalorder %s26, 1
      %p112 = por %p110, %p111
      %p114 = scmp.ne.s32.totalorder %s99, %s113
      %p115 = scmp.eq.s32.totalorder %s26, 0
      %p116 = por %p114, %p115
      %s118 = sadd.s32 %s117, 1
      %p121 = scmp.eq.s32.totalorder %s20, 1
      %p122 = scmp.ne.s32.totalorder %s117, %s119
      %p123 = scmp.eq.s32.totalorder %s20, 0
      %p124 = por %p122, %p123
      %p125 = scmp.ne.s32.totalorder %s117, %s119
      %p126 = scmp.eq.s32.totalorder %s25, 1
      %p127 = por %p125, %p126
      %p128 = scmp.ne.s32.totalorder %s119, %s120
      %p129 = scmp.eq.s32.totalorder %s25, 0
      %p130 = por %p128, %p129
      %p131 = scmp.ne.s32.totalorder %s119, %s120
      %p132 = scmp.eq.s32.totalorder %s26, 1
      %p133 = por %p131, %p132
      %p135 = scmp.ne.s32.totalorder %s120, %s134
      %p136 = scmp.eq.s32.totalorder %s26, 0
      %p137 = por %p135, %p136
      %s138 = ssub.s32 %s20, %s27
      %p139 = scmp.eq.s32.totalorder %s138, 0
      %s141 = sadd.s32 %s140, 1
      %s142 = scalar_select %p139, %s140, %s141
      %p145 = pneg %p139
      %p146 = scmp.eq.s32.totalorder %s20, 1
      %p147 = por %p145, %p146
      %p148 = scmp.ne.s32.totalorder %s140, %s143
      %p149 = scmp.eq.s32.totalorder %s20, 0
      %p150 = por %p148, %p149
      %p151 = scmp.ne.s32.totalorder %s140, %s143
      %p152 = scmp.eq.s32.totalorder %s25, 1
      %p153 = por %p151, %p152
      %p154 = scmp.ne.s32.totalorder %s143, %s144
      %p155 = scmp.eq.s32.totalorder %s25, 0
      %p156 = por %p154, %p155
      %p157 = scmp.ne.s32.totalorder %s143, %s144
      %p158 = scmp.eq.s32.totalorder %s26, 1
      %p159 = por %p157, %p158
      %p161 = scmp.ne.s32.totalorder %s144, %s160
      %p162 = scmp.eq.s32.totalorder %s26, 0
      %p163 = por %p161, %p162
      %p164 = scmp.le.s32.totalorder 1, %s20
      %p165 = scmp.lt.s32.totalorder %s20, 3
      %p166 = pnand %p164, %p165
      %p167 = pneg %p166
      // Predicated region
      $region9: #{spatial_attention_forward.1} parent=5 // pred_check
        _
      $region10: #{spatial_attention_forward.1} parent=5 // pred_check_branch
        %169 = sbr.rel (%p166) target = $region12
      $region11: #{spatial_attention_forward.1} parent=5 // pred_region
        %s170 = ssub.s32 %s20, 1
        // Predicated region
        $region13: #{spatial_attention_forward.1} parent=11 // pred_check
          %p171 = pneg %p67
        $region14: #{spatial_attention_forward.1} parent=11 // pred_check_branch
          %173 = sbr.rel (%p171) target = $region16
        $region15: #{spatial_attention_forward.1} parent=11 // pred_region
          %s175 = ssub.s32 32, 32
          %176 = vsyncadd [#allocation7], %s175
          %s178 = sshll.u32 %s1, 4
          %s179 = int_to_ptr.vmem [resolvable:$true] %s178
          %181 = dma.vmem_to_smem %s179, 32, [#allocation8], [#allocation7]
        $region16: #{spatial_attention_forward.1} parent=11 // pred_fallthru
          _
        // Predicated region
        $region17: #{spatial_attention_forward.1} parent=11 // pred_check
          %p182 = pneg %p88
        $region18: #{spatial_attention_forward.1} parent=11 // pred_check_branch
          %184 = sbr.rel (%p182) target = $region20
        $region19: #{spatial_attention_forward.1} parent=11 // pred_region
          %s186 = ssub.s32 16, 16
          %187 = vsyncadd [#allocation10], %s186
          %s189 = sshll.u32 %s2, 4
          %s190 = int_to_ptr.vmem [resolvable:$true] %s189
          %192 = dma.vmem_to_smem %s190, 16, [#allocation9], [#allocation10]
        $region20: #{spatial_attention_forward.1} parent=11 // pred_fallthru
          _
        // Predicated region
        $region21: #{spatial_attention_forward.1} parent=11 // pred_check
          %p193 = pneg %p109
        $region22: #{spatial_attention_forward.1} parent=11 // pred_check_branch
          %195 = sbr.rel (%p193) target = $region24
        $region23: #{spatial_attention_forward.1} parent=11 // pred_region
          %s197 = ssub.s32 16, 16
          %198 = vsyncadd [#allocation10], %s197
          %s200 = sshll.u32 %s3, 4
          %s201 = int_to_ptr.vmem [resolvable:$true] %s200
          %203 = dma.vmem_to_smem %s201, 16, [#allocation11], [#allocation10]
        $region24: #{spatial_attention_forward.1} parent=11 // pred_fallthru
          _
        // Predicated region
        $region25: #{spatial_attention_forward.1} parent=11 // pred_check
          %p204 = pneg %p130
        $region26: #{spatial_attention_forward.1} parent=11 // pred_check_branch
          %206 = sbr.rel (%p204) target = $region28
        $region27: #{spatial_attention_forward.1} parent=11 // pred_region
          _
        $region28: #{spatial_attention_forward.1} parent=11 // pred_fallthru
          _
      $region12: #{spatial_attention_forward.1} parent=5 // pred_fallthru
        _
      %p207 = scmp.lt.s32.totalorder %s20, 2
      // Predicated region
      $region29: #{spatial_attention_forward.1} parent=5 // pred_check
        %p208 = pneg %p207
      $region30: #{spatial_attention_forward.1} parent=5 // pred_check_branch
        %210 = sbr.rel (%p208) target = $region32
      $region31: #{spatial_attention_forward.1} parent=5 // pred_region
        // Predicated region
        $region33: #{spatial_attention_forward.1} parent=31 // pred_check
          %p211 = pneg %p40
        $region34: #{spatial_attention_forward.1} parent=31 // pred_check_branch
          %213 = sbr.rel (%p211) target = $region36
        $region35: #{spatial_attention_forward.1} parent=31 // pred_region
          %s214 = sand.u32 %s30, 1
          %s215 = scalar_lea.sflag [#allocation5], %s214
          %s216 = sand.u32 %s30, 1
          %s217 = smul.addr %s216, 64
          %s218 = scalar_lea.vmem [#allocation4], %s217
          %s220 = ssub.s32 1024, 1024
          %221 = vsyncadd %s215, %s220
          %s222 = smul.addr %s20, 8
          %s223 = smul.addr %s222, 128
          %s224 = scalar_lea.hbm %s0, %s223
          %s225 = sshll.u32 %s218, 4
          %s226 = int_to_ptr.vmem [resolvable:$true] %s225
          %231 = dma.hbm_to_vmem [thread:$0]  %s224, 1024, %s226, %s215, 128, 128, 8
        $region36: #{spatial_attention_forward.1} parent=31 // pred_fallthru
          _
      $region32: #{spatial_attention_forward.1} parent=5 // pred_fallthru
        _
      %p232 = scmp.le.s32.totalorder 1, %s20
      %p233 = scmp.lt.s32.totalorder %s20, 3
      %p234 = pnand %p232, %p233
      %p235 = pneg %p234
      // Predicated region
      $region37: #{spatial_attention_forward.1} parent=5 // pred_check
        _
      $region38: #{spatial_attention_forward.1} parent=5 // pred_check_branch
        %237 = sbr.rel (%p234) target = $region40
      $region39: #{spatial_attention_forward.1} parent=5 // pred_region
        %s238 = ssub.s32 %s20, 1
        %s239 = sand.u32 %s33, 1
        %s240 = scalar_lea.sflag [#allocation5], %s239
        %s241 = sand.u32 %s33, 1
        %s242 = smul.addr %s241, 64
        %s243 = scalar_lea.vmem [#allocation4], %s242
        // Predicated region
        $region41: #{spatial_attention_forward.1} parent=39 // pred_check
          %p244 = pneg %p46
        $region42: #{spatial_attention_forward.1} parent=39 // pred_check_branch
          %246 = sbr.rel (%p244) target = $region44
        $region43: #{spatial_attention_forward.1} parent=39 // pred_region
          %247 = dma.done %s240, 1024
        $region44: #{spatial_attention_forward.1} parent=39 // pred_fallthru
          _
        // Predicated region
        $region45: #{spatial_attention_forward.1} parent=39 // pred_check
          %p248 = pneg %p67
        $region46: #{spatial_attention_forward.1} parent=39 // pred_check_branch
          %250 = sbr.rel (%p248) target = $region48
        $region47: #{spatial_attention_forward.1} parent=39 // pred_region
          %251 = dma.done [#allocation7], 32
        $region48: #{spatial_attention_forward.1} parent=39 // pred_fallthru
          _
        // Predicated region
        $region49: #{spatial_attention_forward.1} parent=39 // pred_check
          %p252 = pneg %p88
        $region50: #{spatial_attention_forward.1} parent=39 // pred_check_branch
          %254 = sbr.rel (%p252) target = $region52
        $region51: #{spatial_attention_forward.1} parent=39 // pred_region
          %255 = dma.done [#allocation10], 16
        $region52: #{spatial_attention_forward.1} parent=39 // pred_fallthru
          _
        // Predicated region
        $region53: #{spatial_attention_forward.1} parent=39 // pred_check
          %p256 = pneg %p109
        $region54: #{spatial_attention_forward.1} parent=39 // pred_check_branch
          %258 = sbr.rel (%p256) target = $region56
        $region55: #{spatial_attention_forward.1} parent=39 // pred_region
          %259 = dma.done [#allocation10], 16
        $region56: #{spatial_attention_forward.1} parent=39 // pred_fallthru
          _
        %260 = sfence
        %s261 = sand.u32 %s33, 1
        %s262 = scalar_lea.sflag [#allocation5], %s261
        %s263 = sand.u32 %s33, 1
        %s264 = smul.addr %s263, 64
        %s265 = scalar_lea.vmem [#allocation4], %s264
        %p266 = pneg %p46
        %p267 = pneg %p43
        %p268 = pneg %p67
        %p269 = pneg %p64
        %p270 = pneg %p88
        %p271 = pneg %p85
        %p272 = pneg %p109
        %p273 = pneg %p106
        %p274 = pneg %p130
        %p275 = pneg %p127
        %p276 = pneg %p156
        %p277 = pneg %p153
        %s278 = sand.u32 %s143, 1
        %s279 = scalar_lea.sflag [#allocation6], %s278
        %s280 = sand.u32 %s143, 1
        %s281 = smul.addr %s280, 16
        %s282 = scalar_lea.vmem [#allocation12], %s281
        %283 = vst [vmem:[#allocation2] sm:$0x7] 0.0
        %284 = vst [vmem:[#allocation2 + $0x18] sm:$0x7] 0.0
        %285 = vst [vmem:[#allocation2 + $0x13] sm:$0x7] 0.0
        %286 = vst [vmem:[#allocation2 + $0x2b] sm:$0x7] 0.0
        %vm287 = vcmask 23552
        %288 = vst.msk [vmem:[#allocation2 + $0x3] sm:$0xff] %vm287, 0.0
        %289 = vst.msk [vmem:[#allocation2 + $0xb] sm:$0xff] %vm287, 0.0
        %290 = vst.msk [vmem:[#allocation2 + $0x1b] sm:$0xff] %vm287, 0.0
        %291 = vst.msk [vmem:[#allocation2 + $0x23] sm:$0xff] %vm287, 0.0
        %vm292 = vcmask 179352
        %293 = vst.msk [vmem:[#allocation2 + $0x3] sm:$0xff] %vm292, 0.0
        %294 = vst.msk [vmem:[#allocation2 + $0xb] sm:$0xff] %vm292, 0.0
        %295 = vst.msk [vmem:[#allocation2 + $0x1b] sm:$0xff] %vm292, 0.0
        %296 = vst.msk [vmem:[#allocation2 + $0x23] sm:$0xff] %vm292, 0.0
        %v297 = vld [vmem:[%s243] sm:$0xff]
        %v298 = vld [vmem:[%s243 + $0x8] sm:$0xff]
        %v299 = vld [vmem:[%s243 + $0x10] sm:$0xff]
        %v300 = vld [vmem:[%s243 + $0x18] sm:$0xff]
        %v301 = vld [vmem:[%s243 + $0x20] sm:$0xff]
        %v302 = vld [vmem:[%s243 + $0x28] sm:$0xff]
        %v303 = vld [vmem:[%s243 + $0x30] sm:$0xff]
        %v304 = vld [vmem:[%s243 + $0x38] sm:$0xff]
        %vm305 = vcmask 130048
        %v306 = vsel %vm305, %v297, -inf
        %v307 = vsel %vm305, %v299, -inf
        %v308 = vsel %vm305, %v301, -inf
        %v309 = vmax.f32 %v306, %v308
        %v310 = vsel %vm305, %v303, -inf
        %v311 = vmax.f32 %v307, %v310
        %v312 = vmax.f32 %v309, %v311
        %v313 = vsel %vm305, %v298, -inf
        %v314 = vsel %vm305, %v300, -inf
        %v315 = vsel %vm305, %v302, -inf
        %v316 = vmax.f32 %v313, %v315
        %v317 = vsel %vm305, %v304, -inf
        %v318 = vmax.f32 %v314, %v317
        %v319 = vmax.f32 %v316, %v318
        %v320 = vsel %vm305, %v297, 0.0
        %v321 = vsel %vm305, %v299, 0.0
        %v322 = vadd.f32 %v320, %v321
        %v323 = vsel %vm305, %v301, 0.0
        %v324 = vadd.f32 %v322, %v323
        %v325 = vsel %vm305, %v303, 0.0
        %v326 = vadd.f32 %v324, %v325
        %v327 = vsel %vm305, %v298, 0.0
        %v328 = vsel %vm305, %v300, 0.0
        %v329 = vadd.f32 %v327, %v328
        %v330 = vsel %vm305, %v302, 0.0
        %v331 = vadd.f32 %v329, %v330
        %v332 = vsel %vm305, %v304, 0.0
        %v333 = vadd.f32 %v331, %v332
        %v334 = vadd.f32 %v326, 0.0
        %v335 = vadd.f32 %v333, 0.0
        %v336 = vmul.f32 %v334, 0.25
        %v337 = vmul.f32 %v335, 0.25
        %340 = vrot.lane.b32.xlu0 %v312, 3
        %v341 = vpop.permute.xlu0 %340
        %342 = vrot.lane.b32.xlu0 %v319, 3
        %v343 = vpop.permute.xlu0 %342
        %vm346 = vcmask 154648
        %347 = vst.msk [vmem:[#allocation2 + $0x3] sm:$0xff] %vm346, %v341
        %348 = vst.msk [vmem:[#allocation2 + $0xb] sm:$0xff] %vm346, %v343
        %351 = vrot.lane.b32.xlu0 %v336, 3
        %v352 = vpop.permute.xlu0 %351
        %353 = vrot.lane.b32.xlu0 %v337, 3
        %v354 = vpop.permute.xlu0 %353
        %s357 = scalar_lea.vmem [#allocation2], 24
        %358 = vst.msk [vmem:[%s357 + $0x3] sm:$0xff] %vm346, %v352
        %359 = vst.msk [vmem:[%s357 + $0xb] sm:$0xff] %vm346, %v354
        %v360 = vld [vmem:[#allocation2] sm:$0xff]
        %v361 = vld [vmem:[#allocation2 + $0x8] sm:$0xff]
        %s362 = sld [smem:[#allocation8]]
        %v363 = vstv %s362
        %v364 = vmul.f32 %v363, %v360
        %v365 = vmul.f32 %v363, %v361
        %v366 = vadd.f32 %v364, 0.0
        %v367 = vadd.f32 %v365, 0.0
        %s368 = sld [smem:[#allocation8 + $0x62]]
        %v369 = vstv %s368
        %v370 = vmul.f32 %v369, %v360
        %v371 = vmul.f32 %v369, %v361
        %v372 = vadd.f32 %v370, 0.0
        %v373 = vadd.f32 %v371, 0.0
        %s374 = sld [smem:[#allocation8 + $0x1]]
        %v375 = vstv %s374
        %v376 = vmul.f32 %v375, %v360
        %v377 = vmul.f32 %v375, %v361
        %380 = vrot.lane.b32.xlu0 %v376, 127
        %v381 = vpop.permute.xlu0 %380
        %382 = vrot.lane.b32.xlu0 %v377, 127
        %v383 = vpop.permute.xlu0 %382
        %v386 = vadd.f32 %v366, %v381
        %v387 = vadd.f32 %v367, %v383
        %s388 = sld [smem:[#allocation8 + $0x63]]
        %v389 = vstv %s388
        %v390 = vmul.f32 %v389, %v360
        %v391 = vmul.f32 %v389, %v361
        %394 = vrot.lane.b32.xlu0 %v390, 127
        %v395 = vpop.permute.xlu0 %394
        %396 = vrot.lane.b32.xlu0 %v391, 127
        %v397 = vpop.permute.xlu0 %396
        %v400 = vadd.f32 %v372, %v395
        %v401 = vadd.f32 %v373, %v397
        %s402 = sld [smem:[#allocation8 + $0x2]]
        %v403 = vstv %s402
        %v404 = vmul.f32 %v403, %v360
        %v405 = vmul.f32 %v403, %v361
        %408 = vrot.lane.b32.xlu0 %v404, 126
        %v409 = vpop.permute.xlu0 %408
        %410 = vrot.lane.b32.xlu0 %v405, 126
        %v411 = vpop.permute.xlu0 %410
        %v414 = vadd.f32 %v386, %v409
        %v415 = vadd.f32 %v387, %v411
        %s416 = sld [smem:[#allocation8 + $0x64]]
        %v417 = vstv %s416
        %v418 = vmul.f32 %v417, %v360
        %v419 = vmul.f32 %v417, %v361
        %422 = vrot.lane.b32.xlu0 %v418, 126
        %v423 = vpop.permute.xlu0 %422
        %424 = vrot.lane.b32.xlu0 %v419, 126
        %v425 = vpop.permute.xlu0 %424
        %v428 = vadd.f32 %v400, %v423
        %v429 = vadd.f32 %v401, %v425
        %s430 = sld [smem:[#allocation8 + $0x3]]
        %v431 = vstv %s430
        %v432 = vmul.f32 %v431, %v360
        %v433 = vmul.f32 %v431, %v361
        %436 = vrot.lane.b32.xlu0 %v432, 125
        %v437 = vpop.permute.xlu0 %436
        %438 = vrot.lane.b32.xlu0 %v433, 125
        %v439 = vpop.permute.xlu0 %438
        %v442 = vadd.f32 %v414, %v437
        %v443 = vadd.f32 %v415, %v439
        %s444 = sld [smem:[#allocation8 + $0x65]]
        %v445 = vstv %s444
        %v446 = vmul.f32 %v445, %v360
        %v447 = vmul.f32 %v445, %v361
        %450 = vrot.lane.b32.xlu0 %v446, 125
        %v451 = vpop.permute.xlu0 %450
        %452 = vrot.lane.b32.xlu0 %v447, 125
        %v453 = vpop.permute.xlu0 %452
        %v456 = vadd.f32 %v428, %v451
        %v457 = vadd.f32 %v429, %v453
        %s458 = sld [smem:[#allocation8 + $0x4]]
        %v459 = vstv %s458
        %v460 = vmul.f32 %v459, %v360
        %v461 = vmul.f32 %v459, %v361
        %464 = vrot.lane.b32.xlu0 %v460, 124
        %v465 = vpop.permute.xlu0 %464
        %466 = vrot.lane.b32.xlu0 %v461, 124
        %v467 = vpop.permute.xlu0 %466
        %v470 = vadd.f32 %v442, %v465
        %v471 = vadd.f32 %v443, %v467
        %s472 = sld [smem:[#allocation8 + $0x66]]
        %v473 = vstv %s472
        %v474 = vmul.f32 %v473, %v360
        %v475 = vmul.f32 %v473, %v361
        %478 = vrot.lane.b32.xlu0 %v474, 124
        %v479 = vpop.permute.xlu0 %478
        %480 = vrot.lane.b32.xlu0 %v475, 124
        %v481 = vpop.permute.xlu0 %480
        %v484 = vadd.f32 %v456, %v479
        %v485 = vadd.f32 %v457, %v481
        %s486 = sld [smem:[#allocation8 + $0x5]]
        %v487 = vstv %s486
        %v488 = vmul.f32 %v487, %v360
        %v489 = vmul.f32 %v487, %v361
        %492 = vrot.lane.b32.xlu0 %v488, 123
        %v493 = vpop.permute.xlu0 %492
        %494 = vrot.lane.b32.xlu0 %v489, 123
        %v495 = vpop.permute.xlu0 %494
        %v498 = vadd.f32 %v470, %v493
        %v499 = vadd.f32 %v471, %v495
        %s500 = sld [smem:[#allocation8 + $0x67]]
        %v501 = vstv %s500
        %v502 = vmul.f32 %v501, %v360
        %v503 = vmul.f32 %v501, %v361
        %506 = vrot.lane.b32.xlu0 %v502, 123
        %v507 = vpop.permute.xlu0 %506
        %508 = vrot.lane.b32.xlu0 %v503, 123
        %v509 = vpop.permute.xlu0 %508
        %v512 = vadd.f32 %v484, %v507
        %v513 = vadd.f32 %v485, %v509
        %s514 = sld [smem:[#allocation8 + $0x6]]
        %v515 = vstv %s514
        %v516 = vmul.f32 %v515, %v360
        %v517 = vmul.f32 %v515, %v361
        %520 = vrot.lane.b32.xlu0 %v516, 122
        %v521 = vpop.permute.xlu0 %520
        %522 = vrot.lane.b32.xlu0 %v517, 122
        %v523 = vpop.permute.xlu0 %522
        %v526 = vadd.f32 %v498, %v521
        %v527 = vadd.f32 %v499, %v523
        %s528 = sld [smem:[#allocation8 + $0x68]]
        %v529 = vstv %s528
        %v530 = vmul.f32 %v529, %v360
        %v531 = vmul.f32 %v529, %v361
        %534 = vrot.lane.b32.xlu0 %v530, 122
        %v535 = vpop.permute.xlu0 %534
        %536 = vrot.lane.b32.xlu0 %v531, 122
        %v537 = vpop.permute.xlu0 %536
        %v540 = vadd.f32 %v512, %v535
        %v541 = vadd.f32 %v513, %v537
        %v542 = vld [vmem:[#allocation2 + $0x1] sm:$0xff]
        %v543 = vld [vmem:[#allocation2 + $0x9] sm:$0xff]
        %s544 = sld [smem:[#allocation8 + $0x7]]
        %v545 = vstv %s544
        %v546 = vmul.f32 %v545, %v542
        %v547 = vmul.f32 %v545, %v543
        %v548 = vadd.f32 %v526, %v546
        %v549 = vadd.f32 %v527, %v547
        %s550 = sld [smem:[#allocation8 + $0x69]]
        %v551 = vstv %s550
        %v552 = vmul.f32 %v551, %v542
        %v553 = vmul.f32 %v551, %v543
        %v554 = vadd.f32 %v540, %v552
        %v555 = vadd.f32 %v541, %v553
        %s556 = sld [smem:[#allocation8 + $0x8]]
        %v557 = vstv %s556
        %v558 = vmul.f32 %v557, %v542
        %v559 = vmul.f32 %v557, %v543
        %562 = vrot.lane.b32.xlu0 %v558, 127
        %v563 = vpop.permute.xlu0 %562
        %564 = vrot.lane.b32.xlu0 %v559, 127
        %v565 = vpop.permute.xlu0 %564
        %v568 = vadd.f32 %v548, %v563
        %v569 = vadd.f32 %v549, %v565
        %s570 = sld [smem:[#allocation8 + $0x6a]]
        %v571 = vstv %s570
        %v572 = vmul.f32 %v571, %v542
        %v573 = vmul.f32 %v571, %v543
        %576 = vrot.lane.b32.xlu0 %v572, 127
        %v577 = vpop.permute.xlu0 %576
        %578 = vrot.lane.b32.xlu0 %v573, 127
        %v579 = vpop.permute.xlu0 %578
        %v582 = vadd.f32 %v554, %v577
        %v583 = vadd.f32 %v555, %v579
        %s584 = sld [smem:[#allocation8 + $0x9]]
        %v585 = vstv %s584
        %v586 = vmul.f32 %v585, %v542
        %v587 = vmul.f32 %v585, %v543
        %590 = vrot.lane.b32.xlu0 %v586, 126
        %v591 = vpop.permute.xlu0 %590
        %592 = vrot.lane.b32.xlu0 %v587, 126
        %v593 = vpop.permute.xlu0 %592
        %v596 = vadd.f32 %v568, %v591
        %v597 = vadd.f32 %v569, %v593
        %s598 = sld [smem:[#allocation8 + $0x6b]]
        %v599 = vstv %s598
        %v600 = vmul.f32 %v599, %v542
        %v601 = vmul.f32 %v599, %v543
        %604 = vrot.lane.b32.xlu0 %v600, 126
        %v605 = vpop.permute.xlu0 %604
        %606 = vrot.lane.b32.xlu0 %v601, 126
        %v607 = vpop.permute.xlu0 %606
        %v610 = vadd.f32 %v582, %v605
        %v611 = vadd.f32 %v583, %v607
        %s612 = sld [smem:[#allocation8 + $0xa]]
        %v613 = vstv %s612
        %v614 = vmul.f32 %v613, %v542
        %v615 = vmul.f32 %v613, %v543
        %618 = vrot.lane.b32.xlu0 %v614, 125
        %v619 = vpop.permute.xlu0 %618
        %620 = vrot.lane.b32.xlu0 %v615, 125
        %v621 = vpop.permute.xlu0 %620
        %v624 = vadd.f32 %v596, %v619
        %v625 = vadd.f32 %v597, %v621
        %s626 = sld [smem:[#allocation8 + $0x6c]]
        %v627 = vstv %s626
        %v628 = vmul.f32 %v627, %v542
        %v629 = vmul.f32 %v627, %v543
        %632 = vrot.lane.b32.xlu0 %v628, 125
        %v633 = vpop.permute.xlu0 %632
        %634 = vrot.lane.b32.xlu0 %v629, 125
        %v635 = vpop.permute.xlu0 %634
        %v638 = vadd.f32 %v610, %v633
        %v639 = vadd.f32 %v611, %v635
        %s640 = sld [smem:[#allocation8 + $0xb]]
        %v641 = vstv %s640
        %v642 = vmul.f32 %v641, %v542
        %v643 = vmul.f32 %v641, %v543
        %646 = vrot.lane.b32.xlu0 %v642, 124
        %v647 = vpop.permute.xlu0 %646
        %648 = vrot.lane.b32.xlu0 %v643, 124
        %v649 = vpop.permute.xlu0 %648
        %v652 = vadd.f32 %v624, %v647
        %v653 = vadd.f32 %v625, %v649
        %s654 = sld [smem:[#allocation8 + $0x6d]]
        %v655 = vstv %s654
        %v656 = vmul.f32 %v655, %v542
        %v657 = vmul.f32 %v655, %v543
        %660 = vrot.lane.b32.xlu0 %v656, 124
        %v661 = vpop.permute.xlu0 %660
        %662 = vrot.lane.b32.xlu0 %v657, 124
        %v663 = vpop.permute.xlu0 %662
        %v666 = vadd.f32 %v638, %v661
        %v667 = vadd.f32 %v639, %v663
        %s668 = sld [smem:[#allocation8 + $0xc]]
        %v669 = vstv %s668
        %v670 = vmul.f32 %v669, %v542
        %v671 = vmul.f32 %v669, %v543
        %674 = vrot.lane.b32.xlu0 %v670, 123
        %v675 = vpop.permute.xlu0 %674
        %676 = vrot.lane.b32.xlu0 %v671, 123
        %v677 = vpop.permute.xlu0 %676
        %v680 = vadd.f32 %v652, %v675
        %v681 = vadd.f32 %v653, %v677
        %s682 = sld [smem:[#allocation8 + $0x6e]]
        %v683 = vstv %s682
        %v684 = vmul.f32 %v683, %v542
        %v685 = vmul.f32 %v683, %v543
        %688 = vrot.lane.b32.xlu0 %v684, 123
        %v689 = vpop.permute.xlu0 %688
        %690 = vrot.lane.b32.xlu0 %v685, 123
        %v691 = vpop.permute.xlu0 %690
        %v694 = vadd.f32 %v666, %v689
        %v695 = vadd.f32 %v667, %v691
        %s696 = sld [smem:[#allocation8 + $0xd]]
        %v697 = vstv %s696
        %v698 = vmul.f32 %v697, %v542
        %v699 = vmul.f32 %v697, %v543
        %702 = vrot.lane.b32.xlu0 %v698, 122
        %v703 = vpop.permute.xlu0 %702
        %704 = vrot.lane.b32.xlu0 %v699, 122
        %v705 = vpop.permute.xlu0 %704
        %v708 = vadd.f32 %v680, %v703
        %v709 = vadd.f32 %v681, %v705
        %s710 = sld [smem:[#allocation8 + $0x6f]]
        %v711 = vstv %s710
        %v712 = vmul.f32 %v711, %v542
        %v713 = vmul.f32 %v711, %v543
        %716 = vrot.lane.b32.xlu0 %v712, 122
        %v717 = vpop.permute.xlu0 %716
        %718 = vrot.lane.b32.xlu0 %v713, 122
        %v719 = vpop.permute.xlu0 %718
        %v722 = vadd.f32 %v694, %v717
        %v723 = vadd.f32 %v695, %v719
        %v724 = vld [vmem:[#allocation2 + $0x2] sm:$0xff]
        %v725 = vld [vmem:[#allocation2 + $0xa] sm:$0xff]
        %s726 = sld [smem:[#allocation8 + $0xe]]
        %v727 = vstv %s726
        %v728 = vmul.f32 %v727, %v724
        %v729 = vmul.f32 %v727, %v725
        %v730 = vadd.f32 %v708, %v728
        %v731 = vadd.f32 %v709, %v729
        %s732 = sld [smem:[#allocation8 + $0x70]]
        %v733 = vstv %s732
        %v734 = vmul.f32 %v733, %v724
        %v735 = vmul.f32 %v733, %v725
        %v736 = vadd.f32 %v722, %v734
        %v737 = vadd.f32 %v723, %v735
        %s738 = sld [smem:[#allocation8 + $0xf]]
        %v739 = vstv %s738
        %v740 = vmul.f32 %v739, %v724
        %v741 = vmul.f32 %v739, %v725
        %744 = vrot.lane.b32.xlu0 %v740, 127
        %v745 = vpop.permute.xlu0 %744
        %746 = vrot.lane.b32.xlu0 %v741, 127
        %v747 = vpop.permute.xlu0 %746
        %v750 = vadd.f32 %v730, %v745
        %v751 = vadd.f32 %v731, %v747
        %s752 = sld [smem:[#allocation8 + $0x71]]
        %v753 = vstv %s752
        %v754 = vmul.f32 %v753, %v724
        %v755 = vmul.f32 %v753, %v725
        %758 = vrot.lane.b32.xlu0 %v754, 127
        %v759 = vpop.permute.xlu0 %758
        %760 = vrot.lane.b32.xlu0 %v755, 127
        %v761 = vpop.permute.xlu0 %760
        %v764 = vadd.f32 %v736, %v759
        %v765 = vadd.f32 %v737, %v761
        %s766 = sld [smem:[#allocation8 + $0x10]]
        %v767 = vstv %s766
        %v768 = vmul.f32 %v767, %v724
        %v769 = vmul.f32 %v767, %v725
        %772 = vrot.lane.b32.xlu0 %v768, 126
        %v773 = vpop.permute.xlu0 %772
        %774 = vrot.lane.b32.xlu0 %v769, 126
        %v775 = vpop.permute.xlu0 %774
        %v778 = vadd.f32 %v750, %v773
        %v779 = vadd.f32 %v751, %v775
        %s780 = sld [smem:[#allocation8 + $0x72]]
        %v781 = vstv %s780
        %v782 = vmul.f32 %v781, %v724
        %v783 = vmul.f32 %v781, %v725
        %786 = vrot.lane.b32.xlu0 %v782, 126
        %v787 = vpop.permute.xlu0 %786
        %788 = vrot.lane.b32.xlu0 %v783, 126
        %v789 = vpop.permute.xlu0 %788
        %v792 = vadd.f32 %v764, %v787
        %v793 = vadd.f32 %v765, %v789
        %s794 = sld [smem:[#allocation8 + $0x11]]
        %v795 = vstv %s794
        %v796 = vmul.f32 %v795, %v724
        %v797 = vmul.f32 %v795, %v725
        %800 = vrot.lane.b32.xlu0 %v796, 125
        %v801 = vpop.permute.xlu0 %800
        %802 = vrot.lane.b32.xlu0 %v797, 125
        %v803 = vpop.permute.xlu0 %802
        %v806 = vadd.f32 %v778, %v801
        %v807 = vadd.f32 %v779, %v803
        %s808 = sld [smem:[#allocation8 + $0x73]]
        %v809 = vstv %s808
        %v810 = vmul.f32 %v809, %v724
        %v811 = vmul.f32 %v809, %v725
        %814 = vrot.lane.b32.xlu0 %v810, 125
        %v815 = vpop.permute.xlu0 %814
        %816 = vrot.lane.b32.xlu0 %v811, 125
        %v817 = vpop.permute.xlu0 %816
        %v820 = vadd.f32 %v792, %v815
        %v821 = vadd.f32 %v793, %v817
        %s822 = sld [smem:[#allocation8 + $0x12]]
        %v823 = vstv %s822
        %v824 = vmul.f32 %v823, %v724
        %v825 = vmul.f32 %v823, %v725
        %828 = vrot.lane.b32.xlu0 %v824, 124
        %v829 = vpop.permute.xlu0 %828
        %830 = vrot.lane.b32.xlu0 %v825, 124
        %v831 = vpop.permute.xlu0 %830
        %v834 = vadd.f32 %v806, %v829
        %v835 = vadd.f32 %v807, %v831
        %s836 = sld [smem:[#allocation8 + $0x74]]
        %v837 = vstv %s836
        %v838 = vmul.f32 %v837, %v724
        %v839 = vmul.f32 %v837, %v725
        %842 = vrot.lane.b32.xlu0 %v838, 124
        %v843 = vpop.permute.xlu0 %842
        %844 = vrot.lane.b32.xlu0 %v839, 124
        %v845 = vpop.permute.xlu0 %844
        %v848 = vadd.f32 %v820, %v843
        %v849 = vadd.f32 %v821, %v845
        %s850 = sld [smem:[#allocation8 + $0x13]]
        %v851 = vstv %s850
        %v852 = vmul.f32 %v851, %v724
        %v853 = vmul.f32 %v851, %v725
        %856 = vrot.lane.b32.xlu0 %v852, 123
        %v857 = vpop.permute.xlu0 %856
        %858 = vrot.lane.b32.xlu0 %v853, 123
        %v859 = vpop.permute.xlu0 %858
        %v862 = vadd.f32 %v834, %v857
        %v863 = vadd.f32 %v835, %v859
        %s864 = sld [smem:[#allocation8 + $0x75]]
        %v865 = vstv %s864
        %v866 = vmul.f32 %v865, %v724
        %v867 = vmul.f32 %v865, %v725
        %870 = vrot.lane.b32.xlu0 %v866, 123
        %v871 = vpop.permute.xlu0 %870
        %872 = vrot.lane.b32.xlu0 %v867, 123
        %v873 = vpop.permute.xlu0 %872
        %v876 = vadd.f32 %v848, %v871
        %v877 = vadd.f32 %v849, %v873
        %s878 = sld [smem:[#allocation8 + $0x14]]
        %v879 = vstv %s878
        %v880 = vmul.f32 %v879, %v724
        %v881 = vmul.f32 %v879, %v725
        %884 = vrot.lane.b32.xlu0 %v880, 122
        %v885 = vpop.permute.xlu0 %884
        %886 = vrot.lane.b32.xlu0 %v881, 122
        %v887 = vpop.permute.xlu0 %886
        %v890 = vadd.f32 %v862, %v885
        %v891 = vadd.f32 %v863, %v887
        %s892 = sld [smem:[#allocation8 + $0x76]]
        %v893 = vstv %s892
        %v894 = vmul.f32 %v893, %v724
        %v895 = vmul.f32 %v893, %v725
        %898 = vrot.lane.b32.xlu0 %v894, 122
        %v899 = vpop.permute.xlu0 %898
        %900 = vrot.lane.b32.xlu0 %v895, 122
        %v901 = vpop.permute.xlu0 %900
        %v904 = vadd.f32 %v876, %v899
        %v905 = vadd.f32 %v877, %v901
        %v906 = vld [vmem:[#allocation2 + $0x3] sm:$0xff]
        %v907 = vld [vmem:[#allocation2 + $0xb] sm:$0xff]
        %s908 = sld [smem:[#allocation8 + $0x15]]
        %v909 = vstv %s908
        %v910 = vmul.f32 %v909, %v906
        %v911 = vmul.f32 %v909, %v907
        %v912 = vadd.f32 %v890, %v910
        %v913 = vadd.f32 %v891, %v911
        %s914 = sld [smem:[#allocation8 + $0x77]]
        %v915 = vstv %s914
        %v916 = vmul.f32 %v915, %v906
        %v917 = vmul.f32 %v915, %v907
        %v918 = vadd.f32 %v904, %v916
        %v919 = vadd.f32 %v905, %v917
        %s920 = sld [smem:[#allocation8 + $0x16]]
        %v921 = vstv %s920
        %v922 = vmul.f32 %v921, %v906
        %v923 = vmul.f32 %v921, %v907
        %926 = vrot.lane.b32.xlu0 %v922, 127
        %v927 = vpop.permute.xlu0 %926
        %928 = vrot.lane.b32.xlu0 %v923, 127
        %v929 = vpop.permute.xlu0 %928
        %v932 = vadd.f32 %v912, %v927
        %v933 = vadd.f32 %v913, %v929
        %s934 = sld [smem:[#allocation8 + $0x78]]
        %v935 = vstv %s934
        %v936 = vmul.f32 %v935, %v906
        %v937 = vmul.f32 %v935, %v907
        %940 = vrot.lane.b32.xlu0 %v936, 127
        %v941 = vpop.permute.xlu0 %940
        %942 = vrot.lane.b32.xlu0 %v937, 127
        %v943 = vpop.permute.xlu0 %942
        %v946 = vadd.f32 %v918, %v941
        %v947 = vadd.f32 %v919, %v943
        %s948 = sld [smem:[#allocation8 + $0x17]]
        %v949 = vstv %s948
        %v950 = vmul.f32 %v949, %v906
        %v951 = vmul.f32 %v949, %v907
        %954 = vrot.lane.b32.xlu0 %v950, 126
        %v955 = vpop.permute.xlu0 %954
        %956 = vrot.lane.b32.xlu0 %v951, 126
        %v957 = vpop.permute.xlu0 %956
        %v960 = vadd.f32 %v932, %v955
        %v961 = vadd.f32 %v933, %v957
        %s962 = sld [smem:[#allocation8 + $0x79]]
        %v963 = vstv %s962
        %v964 = vmul.f32 %v963, %v906
        %v965 = vmul.f32 %v963, %v907
        %968 = vrot.lane.b32.xlu0 %v964, 126
        %v969 = vpop.permute.xlu0 %968
        %970 = vrot.lane.b32.xlu0 %v965, 126
        %v971 = vpop.permute.xlu0 %970
        %v974 = vadd.f32 %v946, %v969
        %v975 = vadd.f32 %v947, %v971
        %s976 = sld [smem:[#allocation8 + $0x18]]
        %v977 = vstv %s976
        %v978 = vmul.f32 %v977, %v906
        %v979 = vmul.f32 %v977, %v907
        %982 = vrot.lane.b32.xlu0 %v978, 125
        %v983 = vpop.permute.xlu0 %982
        %984 = vrot.lane.b32.xlu0 %v979, 125
        %v985 = vpop.permute.xlu0 %984
        %v988 = vadd.f32 %v960, %v983
        %v989 = vadd.f32 %v961, %v985
        %s990 = sld [smem:[#allocation8 + $0x7a]]
        %v991 = vstv %s990
        %v992 = vmul.f32 %v991, %v906
        %v993 = vmul.f32 %v991, %v907
        %996 = vrot.lane.b32.xlu0 %v992, 125
        %v997 = vpop.permute.xlu0 %996
        %998 = vrot.lane.b32.xlu0 %v993, 125
        %v999 = vpop.permute.xlu0 %998
        %v1002 = vadd.f32 %v974, %v997
        %v1003 = vadd.f32 %v975, %v999
        %s1004 = sld [smem:[#allocation8 + $0x19]]
        %v1005 = vstv %s1004
        %v1006 = vmul.f32 %v1005, %v906
        %v1007 = vmul.f32 %v1005, %v907
        %1010 = vrot.lane.b32.xlu0 %v1006, 124
        %v1011 = vpop.permute.xlu0 %1010
        %1012 = vrot.lane.b32.xlu0 %v1007, 124
        %v1013 = vpop.permute.xlu0 %1012
        %v1016 = vadd.f32 %v988, %v1011
        %v1017 = vadd.f32 %v989, %v1013
        %s1018 = sld [smem:[#allocation8 + $0x7b]]
        %v1019 = vstv %s1018
        %v1020 = vmul.f32 %v1019, %v906
        %v1021 = vmul.f32 %v1019, %v907
        %1024 = vrot.lane.b32.xlu0 %v1020, 124
        %v1025 = vpop.permute.xlu0 %1024
        %1026 = vrot.lane.b32.xlu0 %v1021, 124
        %v1027 = vpop.permute.xlu0 %1026
        %v1030 = vadd.f32 %v1002, %v1025
        %v1031 = vadd.f32 %v1003, %v1027
        %s1032 = sld [smem:[#allocation8 + $0x1a]]
        %v1033 = vstv %s1032
        %v1034 = vmul.f32 %v1033, %v906
        %v1035 = vmul.f32 %v1033, %v907
        %1038 = vrot.lane.b32.xlu0 %v1034, 123
        %v1039 = vpop.permute.xlu0 %1038
        %1040 = vrot.lane.b32.xlu0 %v1035, 123
        %v1041 = vpop.permute.xlu0 %1040
        %v1044 = vadd.f32 %v1016, %v1039
        %v1045 = vadd.f32 %v1017, %v1041
        %s1046 = sld [smem:[#allocation8 + $0x7c]]
        %v1047 = vstv %s1046
        %v1048 = vmul.f32 %v1047, %v906
        %v1049 = vmul.f32 %v1047, %v907
        %1052 = vrot.lane.b32.xlu0 %v1048, 123
        %v1053 = vpop.permute.xlu0 %1052
        %1054 = vrot.lane.b32.xlu0 %v1049, 123
        %v1055 = vpop.permute.xlu0 %1054
        %v1058 = vadd.f32 %v1030, %v1053
        %v1059 = vadd.f32 %v1031, %v1055
        %s1060 = sld [smem:[#allocation8 + $0x1b]]
        %v1061 = vstv %s1060
        %v1062 = vmul.f32 %v1061, %v906
        %v1063 = vmul.f32 %v1061, %v907
        %1066 = vrot.lane.b32.xlu0 %v1062, 122
        %v1067 = vpop.permute.xlu0 %1066
        %1068 = vrot.lane.b32.xlu0 %v1063, 122
        %v1069 = vpop.permute.xlu0 %1068
        %v1072 = vadd.f32 %v1044, %v1067
        %v1073 = vadd.f32 %v1045, %v1069
        %s1074 = sld [smem:[#allocation8 + $0x7d]]
        %v1075 = vstv %s1074
        %v1076 = vmul.f32 %v1075, %v906
        %v1077 = vmul.f32 %v1075, %v907
        %1080 = vrot.lane.b32.xlu0 %v1076, 122
        %v1081 = vpop.permute.xlu0 %1080
        %1082 = vrot.lane.b32.xlu0 %v1077, 122
        %v1083 = vpop.permute.xlu0 %1082
        %v1086 = vadd.f32 %v1058, %v1081
        %v1087 = vadd.f32 %v1059, %v1083
        %v1088 = vld [vmem:[#allocation2 + $0x4] sm:$0xff]
        %v1089 = vld [vmem:[#allocation2 + $0xc] sm:$0xff]
        %s1090 = sld [smem:[#allocation8 + $0x1c]]
        %v1091 = vstv %s1090
        %v1092 = vmul.f32 %v1091, %v1088
        %v1093 = vmul.f32 %v1091, %v1089
        %v1094 = vadd.f32 %v1072, %v1092
        %v1095 = vadd.f32 %v1073, %v1093
        %s1096 = sld [smem:[#allocation8 + $0x7e]]
        %v1097 = vstv %s1096
        %v1098 = vmul.f32 %v1097, %v1088
        %v1099 = vmul.f32 %v1097, %v1089
        %v1100 = vadd.f32 %v1086, %v1098
        %v1101 = vadd.f32 %v1087, %v1099
        %s1102 = sld [smem:[#allocation8 + $0x1d]]
        %v1103 = vstv %s1102
        %v1104 = vmul.f32 %v1103, %v1088
        %v1105 = vmul.f32 %v1103, %v1089
        %1108 = vrot.lane.b32.xlu0 %v1104, 127
        %v1109 = vpop.permute.xlu0 %1108
        %1110 = vrot.lane.b32.xlu0 %v1105, 127
        %v1111 = vpop.permute.xlu0 %1110
        %v1114 = vadd.f32 %v1094, %v1109
        %v1115 = vadd.f32 %v1095, %v1111
        %s1116 = sld [smem:[#allocation8 + $0x7f]]
        %v1117 = vstv %s1116
        %v1118 = vmul.f32 %v1117, %v1088
        %v1119 = vmul.f32 %v1117, %v1089
        %1122 = vrot.lane.b32.xlu0 %v1118, 127
        %v1123 = vpop.permute.xlu0 %1122
        %1124 = vrot.lane.b32.xlu0 %v1119, 127
        %v1125 = vpop.permute.xlu0 %1124
        %v1128 = vadd.f32 %v1100, %v1123
        %v1129 = vadd.f32 %v1101, %v1125
        %s1130 = sld [smem:[#allocation8 + $0x1e]]
        %v1131 = vstv %s1130
        %v1132 = vmul.f32 %v1131, %v1088
        %v1133 = vmul.f32 %v1131, %v1089
        %1136 = vrot.lane.b32.xlu0 %v1132, 126
        %v1137 = vpop.permute.xlu0 %1136
        %1138 = vrot.lane.b32.xlu0 %v1133, 126
        %v1139 = vpop.permute.xlu0 %1138
        %v1142 = vadd.f32 %v1114, %v1137
        %v1143 = vadd.f32 %v1115, %v1139
        %s1144 = sld [smem:[#allocation8 + $0x80]]
        %v1145 = vstv %s1144
        %v1146 = vmul.f32 %v1145, %v1088
        %v1147 = vmul.f32 %v1145, %v1089
        %1150 = vrot.lane.b32.xlu0 %v1146, 126
        %v1151 = vpop.permute.xlu0 %1150
        %1152 = vrot.lane.b32.xlu0 %v1147, 126
        %v1153 = vpop.permute.xlu0 %1152
        %v1156 = vadd.f32 %v1128, %v1151
        %v1157 = vadd.f32 %v1129, %v1153
        %s1158 = sld [smem:[#allocation8 + $0x1f]]
        %v1159 = vstv %s1158
        %v1160 = vmul.f32 %v1159, %v1088
        %v1161 = vmul.f32 %v1159, %v1089
        %1164 = vrot.lane.b32.xlu0 %v1160, 125
        %v1165 = vpop.permute.xlu0 %1164
        %1166 = vrot.lane.b32.xlu0 %v1161, 125
        %v1167 = vpop.permute.xlu0 %1166
        %v1170 = vadd.f32 %v1142, %v1165
        %v1171 = vadd.f32 %v1143, %v1167
        %s1172 = sld [smem:[#allocation8 + $0x81]]
        %v1173 = vstv %s1172
        %v1174 = vmul.f32 %v1173, %v1088
        %v1175 = vmul.f32 %v1173, %v1089
        %1178 = vrot.lane.b32.xlu0 %v1174, 125
        %v1179 = vpop.permute.xlu0 %1178
        %1180 = vrot.lane.b32.xlu0 %v1175, 125
        %v1181 = vpop.permute.xlu0 %1180
        %v1184 = vadd.f32 %v1156, %v1179
        %v1185 = vadd.f32 %v1157, %v1181
        %s1186 = sld [smem:[#allocation8 + $0x20]]
        %v1187 = vstv %s1186
        %v1188 = vmul.f32 %v1187, %v1088
        %v1189 = vmul.f32 %v1187, %v1089
        %1192 = vrot.lane.b32.xlu0 %v1188, 124
        %v1193 = vpop.permute.xlu0 %1192
        %1194 = vrot.lane.b32.xlu0 %v1189, 124
        %v1195 = vpop.permute.xlu0 %1194
        %v1198 = vadd.f32 %v1170, %v1193
        %v1199 = vadd.f32 %v1171, %v1195
        %s1200 = sld [smem:[#allocation8 + $0x82]]
        %v1201 = vstv %s1200
        %v1202 = vmul.f32 %v1201, %v1088
        %v1203 = vmul.f32 %v1201, %v1089
        %1206 = vrot.lane.b32.xlu0 %v1202, 124
        %v1207 = vpop.permute.xlu0 %1206
        %1208 = vrot.lane.b32.xlu0 %v1203, 124
        %v1209 = vpop.permute.xlu0 %1208
        %v1212 = vadd.f32 %v1184, %v1207
        %v1213 = vadd.f32 %v1185, %v1209
        %s1214 = sld [smem:[#allocation8 + $0x21]]
        %v1215 = vstv %s1214
        %v1216 = vmul.f32 %v1215, %v1088
        %v1217 = vmul.f32 %v1215, %v1089
        %1220 = vrot.lane.b32.xlu0 %v1216, 123
        %v1221 = vpop.permute.xlu0 %1220
        %1222 = vrot.lane.b32.xlu0 %v1217, 123
        %v1223 = vpop.permute.xlu0 %1222
        %v1226 = vadd.f32 %v1198, %v1221
        %v1227 = vadd.f32 %v1199, %v1223
        %s1228 = sld [smem:[#allocation8 + $0x83]]
        %v1229 = vstv %s1228
        %v1230 = vmul.f32 %v1229, %v1088
        %v1231 = vmul.f32 %v1229, %v1089
        %1234 = vrot.lane.b32.xlu0 %v1230, 123
        %v1235 = vpop.permute.xlu0 %1234
        %1236 = vrot.lane.b32.xlu0 %v1231, 123
        %v1237 = vpop.permute.xlu0 %1236
        %v1240 = vadd.f32 %v1212, %v1235
        %v1241 = vadd.f32 %v1213, %v1237
        %s1242 = sld [smem:[#allocation8 + $0x22]]
        %v1243 = vstv %s1242
        %v1244 = vmul.f32 %v1243, %v1088
        %v1245 = vmul.f32 %v1243, %v1089
        %1248 = vrot.lane.b32.xlu0 %v1244, 122
        %v1249 = vpop.permute.xlu0 %1248
        %1250 = vrot.lane.b32.xlu0 %v1245, 122
        %v1251 = vpop.permute.xlu0 %1250
        %v1254 = vadd.f32 %v1226, %v1249
        %v1255 = vadd.f32 %v1227, %v1251
        %s1256 = sld [smem:[#allocation8 + $0x84]]
        %v1257 = vstv %s1256
        %v1258 = vmul.f32 %v1257, %v1088
        %v1259 = vmul.f32 %v1257, %v1089
        %1262 = vrot.lane.b32.xlu0 %v1258, 122
        %v1263 = vpop.permute.xlu0 %1262
        %1264 = vrot.lane.b32.xlu0 %v1259, 122
        %v1265 = vpop.permute.xlu0 %1264
        %v1268 = vadd.f32 %v1240, %v1263
        %v1269 = vadd.f32 %v1241, %v1265
        %v1270 = vld [vmem:[#allocation2 + $0x5] sm:$0xff]
        %v1271 = vld [vmem:[#allocation2 + $0xd] sm:$0xff]
        %s1272 = sld [smem:[#allocation8 + $0x23]]
        %v1273 = vstv %s1272
        %v1274 = vmul.f32 %v1273, %v1270
        %v1275 = vmul.f32 %v1273, %v1271
        %v1276 = vadd.f32 %v1254, %v1274
        %v1277 = vadd.f32 %v1255, %v1275
        %s1278 = sld [smem:[#allocation8 + $0x85]]
        %v1279 = vstv %s1278
        %v1280 = vmul.f32 %v1279, %v1270
        %v1281 = vmul.f32 %v1279, %v1271
        %v1282 = vadd.f32 %v1268, %v1280
        %v1283 = vadd.f32 %v1269, %v1281
        %s1284 = sld [smem:[#allocation8 + $0x24]]
        %v1285 = vstv %s1284
        %v1286 = vmul.f32 %v1285, %v1270
        %v1287 = vmul.f32 %v1285, %v1271
        %1290 = vrot.lane.b32.xlu0 %v1286, 127
        %v1291 = vpop.permute.xlu0 %1290
        %1292 = vrot.lane.b32.xlu0 %v1287, 127
        %v1293 = vpop.permute.xlu0 %1292
        %v1296 = vadd.f32 %v1276, %v1291
        %v1297 = vadd.f32 %v1277, %v1293
        %s1298 = sld [smem:[#allocation8 + $0x86]]
        %v1299 = vstv %s1298
        %v1300 = vmul.f32 %v1299, %v1270
        %v1301 = vmul.f32 %v1299, %v1271
        %1304 = vrot.lane.b32.xlu0 %v1300, 127
        %v1305 = vpop.permute.xlu0 %1304
        %1306 = vrot.lane.b32.xlu0 %v1301, 127
        %v1307 = vpop.permute.xlu0 %1306
        %v1310 = vadd.f32 %v1282, %v1305
        %v1311 = vadd.f32 %v1283, %v1307
        %s1312 = sld [smem:[#allocation8 + $0x25]]
        %v1313 = vstv %s1312
        %v1314 = vmul.f32 %v1313, %v1270
        %v1315 = vmul.f32 %v1313, %v1271
        %1318 = vrot.lane.b32.xlu0 %v1314, 126
        %v1319 = vpop.permute.xlu0 %1318
        %1320 = vrot.lane.b32.xlu0 %v1315, 126
        %v1321 = vpop.permute.xlu0 %1320
        %v1324 = vadd.f32 %v1296, %v1319
        %v1325 = vadd.f32 %v1297, %v1321
        %s1326 = sld [smem:[#allocation8 + $0x87]]
        %v1327 = vstv %s1326
        %v1328 = vmul.f32 %v1327, %v1270
        %v1329 = vmul.f32 %v1327, %v1271
        %1332 = vrot.lane.b32.xlu0 %v1328, 126
        %v1333 = vpop.permute.xlu0 %1332
        %1334 = vrot.lane.b32.xlu0 %v1329, 126
        %v1335 = vpop.permute.xlu0 %1334
        %v1338 = vadd.f32 %v1310, %v1333
        %v1339 = vadd.f32 %v1311, %v1335
        %s1340 = sld [smem:[#allocation8 + $0x26]]
        %v1341 = vstv %s1340
        %v1342 = vmul.f32 %v1341, %v1270
        %v1343 = vmul.f32 %v1341, %v1271
        %1346 = vrot.lane.b32.xlu0 %v1342, 125
        %v1347 = vpop.permute.xlu0 %1346
        %1348 = vrot.lane.b32.xlu0 %v1343, 125
        %v1349 = vpop.permute.xlu0 %1348
        %v1352 = vadd.f32 %v1324, %v1347
        %v1353 = vadd.f32 %v1325, %v1349
        %s1354 = sld [smem:[#allocation8 + $0x88]]
        %v1355 = vstv %s1354
        %v1356 = vmul.f32 %v1355, %v1270
        %v1357 = vmul.f32 %v1355, %v1271
        %1360 = vrot.lane.b32.xlu0 %v1356, 125
        %v1361 = vpop.permute.xlu0 %1360
        %1362 = vrot.lane.b32.xlu0 %v1357, 125
        %v1363 = vpop.permute.xlu0 %1362
        %v1366 = vadd.f32 %v1338, %v1361
        %v1367 = vadd.f32 %v1339, %v1363
        %s1368 = sld [smem:[#allocation8 + $0x27]]
        %v1369 = vstv %s1368
        %v1370 = vmul.f32 %v1369, %v1270
        %v1371 = vmul.f32 %v1369, %v1271
        %1374 = vrot.lane.b32.xlu0 %v1370, 124
        %v1375 = vpop.permute.xlu0 %1374
        %1376 = vrot.lane.b32.xlu0 %v1371, 124
        %v1377 = vpop.permute.xlu0 %1376
        %v1380 = vadd.f32 %v1352, %v1375
        %v1381 = vadd.f32 %v1353, %v1377
        %s1382 = sld [smem:[#allocation8 + $0x89]]
        %v1383 = vstv %s1382
        %v1384 = vmul.f32 %v1383, %v1270
        %v1385 = vmul.f32 %v1383, %v1271
        %1388 = vrot.lane.b32.xlu0 %v1384, 124
        %v1389 = vpop.permute.xlu0 %1388
        %1390 = vrot.lane.b32.xlu0 %v1385, 124
        %v1391 = vpop.permute.xlu0 %1390
        %v1394 = vadd.f32 %v1366, %v1389
        %v1395 = vadd.f32 %v1367, %v1391
        %s1396 = sld [smem:[#allocation8 + $0x28]]
        %v1397 = vstv %s1396
        %v1398 = vmul.f32 %v1397, %v1270
        %v1399 = vmul.f32 %v1397, %v1271
        %1402 = vrot.lane.b32.xlu0 %v1398, 123
        %v1403 = vpop.permute.xlu0 %1402
        %1404 = vrot.lane.b32.xlu0 %v1399, 123
        %v1405 = vpop.permute.xlu0 %1404
        %v1408 = vadd.f32 %v1380, %v1403
        %v1409 = vadd.f32 %v1381, %v1405
        %s1410 = sld [smem:[#allocation8 + $0x8a]]
        %v1411 = vstv %s1410
        %v1412 = vmul.f32 %v1411, %v1270
        %v1413 = vmul.f32 %v1411, %v1271
        %1416 = vrot.lane.b32.xlu0 %v1412, 123
        %v1417 = vpop.permute.xlu0 %1416
        %1418 = vrot.lane.b32.xlu0 %v1413, 123
        %v1419 = vpop.permute.xlu0 %1418
        %v1422 = vadd.f32 %v1394, %v1417
        %v1423 = vadd.f32 %v1395, %v1419
        %s1424 = sld [smem:[#allocation8 + $0x29]]
        %v1425 = vstv %s1424
        %v1426 = vmul.f32 %v1425, %v1270
        %v1427 = vmul.f32 %v1425, %v1271
        %1430 = vrot.lane.b32.xlu0 %v1426, 122
        %v1431 = vpop.permute.xlu0 %1430
        %1432 = vrot.lane.b32.xlu0 %v1427, 122
        %v1433 = vpop.permute.xlu0 %1432
        %v1436 = vadd.f32 %v1408, %v1431
        %v1437 = vadd.f32 %v1409, %v1433
        %s1438 = sld [smem:[#allocation8 + $0x8b]]
        %v1439 = vstv %s1438
        %v1440 = vmul.f32 %v1439, %v1270
        %v1441 = vmul.f32 %v1439, %v1271
        %1444 = vrot.lane.b32.xlu0 %v1440, 122
        %v1445 = vpop.permute.xlu0 %1444
        %1446 = vrot.lane.b32.xlu0 %v1441, 122
        %v1447 = vpop.permute.xlu0 %1446
        %v1450 = vadd.f32 %v1422, %v1445
        %v1451 = vadd.f32 %v1423, %v1447
        %v1452 = vld [vmem:[#allocation2 + $0x6] sm:$0xff]
        %v1453 = vld [vmem:[#allocation2 + $0xe] sm:$0xff]
        %s1454 = sld [smem:[#allocation8 + $0x2a]]
        %v1455 = vstv %s1454
        %v1456 = vmul.f32 %v1455, %v1452
        %v1457 = vmul.f32 %v1455, %v1453
        %v1458 = vadd.f32 %v1436, %v1456
        %v1459 = vadd.f32 %v1437, %v1457
        %s1460 = sld [smem:[#allocation8 + $0x8c]]
        %v1461 = vstv %s1460
        %v1462 = vmul.f32 %v1461, %v1452
        %v1463 = vmul.f32 %v1461, %v1453
        %v1464 = vadd.f32 %v1450, %v1462
        %v1465 = vadd.f32 %v1451, %v1463
        %s1466 = sld [smem:[#allocation8 + $0x2b]]
        %v1467 = vstv %s1466
        %v1468 = vmul.f32 %v1467, %v1452
        %v1469 = vmul.f32 %v1467, %v1453
        %1472 = vrot.lane.b32.xlu0 %v1468, 127
        %v1473 = vpop.permute.xlu0 %1472
        %1474 = vrot.lane.b32.xlu0 %v1469, 127
        %v1475 = vpop.permute.xlu0 %1474
        %v1478 = vadd.f32 %v1458, %v1473
        %v1479 = vadd.f32 %v1459, %v1475
        %s1480 = sld [smem:[#allocation8 + $0x8d]]
        %v1481 = vstv %s1480
        %v1482 = vmul.f32 %v1481, %v1452
        %v1483 = vmul.f32 %v1481, %v1453
        %1486 = vrot.lane.b32.xlu0 %v1482, 127
        %v1487 = vpop.permute.xlu0 %1486
        %1488 = vrot.lane.b32.xlu0 %v1483, 127
        %v1489 = vpop.permute.xlu0 %1488
        %v1492 = vadd.f32 %v1464, %v1487
        %v1493 = vadd.f32 %v1465, %v1489
        %s1494 = sld [smem:[#allocation8 + $0x2c]]
        %v1495 = vstv %s1494
        %v1496 = vmul.f32 %v1495, %v1452
        %v1497 = vmul.f32 %v1495, %v1453
        %1500 = vrot.lane.b32.xlu0 %v1496, 126
        %v1501 = vpop.permute.xlu0 %1500
        %1502 = vrot.lane.b32.xlu0 %v1497, 126
        %v1503 = vpop.permute.xlu0 %1502
        %v1506 = vadd.f32 %v1478, %v1501
        %v1507 = vadd.f32 %v1479, %v1503
        %s1508 = sld [smem:[#allocation8 + $0x8e]]
        %v1509 = vstv %s1508
        %v1510 = vmul.f32 %v1509, %v1452
        %v1511 = vmul.f32 %v1509, %v1453
        %1514 = vrot.lane.b32.xlu0 %v1510, 126
        %v1515 = vpop.permute.xlu0 %1514
        %1516 = vrot.lane.b32.xlu0 %v1511, 126
        %v1517 = vpop.permute.xlu0 %1516
        %v1520 = vadd.f32 %v1492, %v1515
        %v1521 = vadd.f32 %v1493, %v1517
        %s1522 = sld [smem:[#allocation8 + $0x2d]]
        %v1523 = vstv %s1522
        %v1524 = vmul.f32 %v1523, %v1452
        %v1525 = vmul.f32 %v1523, %v1453
        %1528 = vrot.lane.b32.xlu0 %v1524, 125
        %v1529 = vpop.permute.xlu0 %1528
        %1530 = vrot.lane.b32.xlu0 %v1525, 125
        %v1531 = vpop.permute.xlu0 %1530
        %v1534 = vadd.f32 %v1506, %v1529
        %v1535 = vadd.f32 %v1507, %v1531
        %s1536 = sld [smem:[#allocation8 + $0x8f]]
        %v1537 = vstv %s1536
        %v1538 = vmul.f32 %v1537, %v1452
        %v1539 = vmul.f32 %v1537, %v1453
        %1542 = vrot.lane.b32.xlu0 %v1538, 125
        %v1543 = vpop.permute.xlu0 %1542
        %1544 = vrot.lane.b32.xlu0 %v1539, 125
        %v1545 = vpop.permute.xlu0 %1544
        %v1548 = vadd.f32 %v1520, %v1543
        %v1549 = vadd.f32 %v1521, %v1545
        %s1550 = sld [smem:[#allocation8 + $0x2e]]
        %v1551 = vstv %s1550
        %v1552 = vmul.f32 %v1551, %v1452
        %v1553 = vmul.f32 %v1551, %v1453
        %1556 = vrot.lane.b32.xlu0 %v1552, 124
        %v1557 = vpop.permute.xlu0 %1556
        %1558 = vrot.lane.b32.xlu0 %v1553, 124
        %v1559 = vpop.permute.xlu0 %1558
        %v1562 = vadd.f32 %v1534, %v1557
        %v1563 = vadd.f32 %v1535, %v1559
        %s1564 = sld [smem:[#allocation8 + $0x90]]
        %v1565 = vstv %s1564
        %v1566 = vmul.f32 %v1565, %v1452
        %v1567 = vmul.f32 %v1565, %v1453
        %1570 = vrot.lane.b32.xlu0 %v1566, 124
        %v1571 = vpop.permute.xlu0 %1570
        %1572 = vrot.lane.b32.xlu0 %v1567, 124
        %v1573 = vpop.permute.xlu0 %1572
        %v1576 = vadd.f32 %v1548, %v1571
        %v1577 = vadd.f32 %v1549, %v1573
        %s1578 = sld [smem:[#allocation8 + $0x2f]]
        %v1579 = vstv %s1578
        %v1580 = vmul.f32 %v1579, %v1452
        %v1581 = vmul.f32 %v1579, %v1453
        %1584 = vrot.lane.b32.xlu0 %v1580, 123
        %v1585 = vpop.permute.xlu0 %1584
        %1586 = vrot.lane.b32.xlu0 %v1581, 123
        %v1587 = vpop.permute.xlu0 %1586
        %v1590 = vadd.f32 %v1562, %v1585
        %v1591 = vadd.f32 %v1563, %v1587
        %s1592 = sld [smem:[#allocation8 + $0x91]]
        %v1593 = vstv %s1592
        %v1594 = vmul.f32 %v1593, %v1452
        %v1595 = vmul.f32 %v1593, %v1453
        %1598 = vrot.lane.b32.xlu0 %v1594, 123
        %v1599 = vpop.permute.xlu0 %1598
        %1600 = vrot.lane.b32.xlu0 %v1595, 123
        %v1601 = vpop.permute.xlu0 %1600
        %v1604 = vadd.f32 %v1576, %v1599
        %v1605 = vadd.f32 %v1577, %v1601
        %s1606 = sld [smem:[#allocation8 + $0x30]]
        %v1607 = vstv %s1606
        %v1608 = vmul.f32 %v1607, %v1452
        %v1609 = vmul.f32 %v1607, %v1453
        %1612 = vrot.lane.b32.xlu0 %v1608, 122
        %v1613 = vpop.permute.xlu0 %1612
        %1614 = vrot.lane.b32.xlu0 %v1609, 122
        %v1615 = vpop.permute.xlu0 %1614
        %v1618 = vadd.f32 %v1590, %v1613
        %v1619 = vadd.f32 %v1591, %v1615
        %s1620 = sld [smem:[#allocation8 + $0x92]]
        %v1621 = vstv %s1620
        %v1622 = vmul.f32 %v1621, %v1452
        %v1623 = vmul.f32 %v1621, %v1453
        %1626 = vrot.lane.b32.xlu0 %v1622, 122
        %v1627 = vpop.permute.xlu0 %1626
        %1628 = vrot.lane.b32.xlu0 %v1623, 122
        %v1629 = vpop.permute.xlu0 %1628
        %v1632 = vadd.f32 %v1604, %v1627
        %v1633 = vadd.f32 %v1605, %v1629
        %v1634 = vld [vmem:[%s357] sm:$0xff]
        %v1635 = vld [vmem:[%s357 + $0x8] sm:$0xff]
        %s1636 = sld [smem:[#allocation8 + $0x31]]
        %v1637 = vstv %s1636
        %v1638 = vmul.f32 %v1637, %v1634
        %v1639 = vmul.f32 %v1637, %v1635
        %v1640 = vadd.f32 %v1618, %v1638
        %v1641 = vadd.f32 %v1619, %v1639
        %s1642 = sld [smem:[#allocation8 + $0x93]]
        %v1643 = vstv %s1642
        %v1644 = vmul.f32 %v1643, %v1634
        %v1645 = vmul.f32 %v1643, %v1635
        %v1646 = vadd.f32 %v1632, %v1644
        %v1647 = vadd.f32 %v1633, %v1645
        %s1648 = sld [smem:[#allocation8 + $0x32]]
        %v1649 = vstv %s1648
        %v1650 = vmul.f32 %v1649, %v1634
        %v1651 = vmul.f32 %v1649, %v1635
        %1654 = vrot.lane.b32.xlu0 %v1650, 127
        %v1655 = vpop.permute.xlu0 %1654
        %1656 = vrot.lane.b32.xlu0 %v1651, 127
        %v1657 = vpop.permute.xlu0 %1656
        %v1660 = vadd.f32 %v1640, %v1655
        %v1661 = vadd.f32 %v1641, %v1657
        %s1662 = sld [smem:[#allocation8 + $0x94]]
        %v1663 = vstv %s1662
        %v1664 = vmul.f32 %v1663, %v1634
        %v1665 = vmul.f32 %v1663, %v1635
        %1668 = vrot.lane.b32.xlu0 %v1664, 127
        %v1669 = vpop.permute.xlu0 %1668
        %1670 = vrot.lane.b32.xlu0 %v1665, 127
        %v1671 = vpop.permute.xlu0 %1670
        %v1674 = vadd.f32 %v1646, %v1669
        %v1675 = vadd.f32 %v1647, %v1671
        %s1676 = sld [smem:[#allocation8 + $0x33]]
        %v1677 = vstv %s1676
        %v1678 = vmul.f32 %v1677, %v1634
        %v1679 = vmul.f32 %v1677, %v1635
        %1682 = vrot.lane.b32.xlu0 %v1678, 126
        %v1683 = vpop.permute.xlu0 %1682
        %1684 = vrot.lane.b32.xlu0 %v1679, 126
        %v1685 = vpop.permute.xlu0 %1684
        %v1688 = vadd.f32 %v1660, %v1683
        %v1689 = vadd.f32 %v1661, %v1685
        %s1690 = sld [smem:[#allocation8 + $0x95]]
        %v1691 = vstv %s1690
        %v1692 = vmul.f32 %v1691, %v1634
        %v1693 = vmul.f32 %v1691, %v1635
        %1696 = vrot.lane.b32.xlu0 %v1692, 126
        %v1697 = vpop.permute.xlu0 %1696
        %1698 = vrot.lane.b32.xlu0 %v1693, 126
        %v1699 = vpop.permute.xlu0 %1698
        %v1702 = vadd.f32 %v1674, %v1697
        %v1703 = vadd.f32 %v1675, %v1699
        %s1704 = sld [smem:[#allocation8 + $0x34]]
        %v1705 = vstv %s1704
        %v1706 = vmul.f32 %v1705, %v1634
        %v1707 = vmul.f32 %v1705, %v1635
        %1710 = vrot.lane.b32.xlu0 %v1706, 125
        %v1711 = vpop.permute.xlu0 %1710
        %1712 = vrot.lane.b32.xlu0 %v1707, 125
        %v1713 = vpop.permute.xlu0 %1712
        %v1716 = vadd.f32 %v1688, %v1711
        %v1717 = vadd.f32 %v1689, %v1713
        %s1718 = sld [smem:[#allocation8 + $0x96]]
        %v1719 = vstv %s1718
        %v1720 = vmul.f32 %v1719, %v1634
        %v1721 = vmul.f32 %v1719, %v1635
        %1724 = vrot.lane.b32.xlu0 %v1720, 125
        %v1725 = vpop.permute.xlu0 %1724
        %1726 = vrot.lane.b32.xlu0 %v1721, 125
        %v1727 = vpop.permute.xlu0 %1726
        %v1730 = vadd.f32 %v1702, %v1725
        %v1731 = vadd.f32 %v1703, %v1727
        %s1732 = sld [smem:[#allocation8 + $0x35]]
        %v1733 = vstv %s1732
        %v1734 = vmul.f32 %v1733, %v1634
        %v1735 = vmul.f32 %v1733, %v1635
        %1738 = vrot.lane.b32.xlu0 %v1734, 124
        %v1739 = vpop.permute.xlu0 %1738
        %1740 = vrot.lane.b32.xlu0 %v1735, 124
        %v1741 = vpop.permute.xlu0 %1740
        %v1744 = vadd.f32 %v1716, %v1739
        %v1745 = vadd.f32 %v1717, %v1741
        %s1746 = sld [smem:[#allocation8 + $0x97]]
        %v1747 = vstv %s1746
        %v1748 = vmul.f32 %v1747, %v1634
        %v1749 = vmul.f32 %v1747, %v1635
        %1752 = vrot.lane.b32.xlu0 %v1748, 124
        %v1753 = vpop.permute.xlu0 %1752
        %1754 = vrot.lane.b32.xlu0 %v1749, 124
        %v1755 = vpop.permute.xlu0 %1754
        %v1758 = vadd.f32 %v1730, %v1753
        %v1759 = vadd.f32 %v1731, %v1755
        %s1760 = sld [smem:[#allocation8 + $0x36]]
        %v1761 = vstv %s1760
        %v1762 = vmul.f32 %v1761, %v1634
        %v1763 = vmul.f32 %v1761, %v1635
        %1766 = vrot.lane.b32.xlu0 %v1762, 123
        %v1767 = vpop.permute.xlu0 %1766
        %1768 = vrot.lane.b32.xlu0 %v1763, 123
        %v1769 = vpop.permute.xlu0 %1768
        %v1772 = vadd.f32 %v1744, %v1767
        %v1773 = vadd.f32 %v1745, %v1769
        %s1774 = sld [smem:[#allocation8 + $0x98]]
        %v1775 = vstv %s1774
        %v1776 = vmul.f32 %v1775, %v1634
        %v1777 = vmul.f32 %v1775, %v1635
        %1780 = vrot.lane.b32.xlu0 %v1776, 123
        %v1781 = vpop.permute.xlu0 %1780
        %1782 = vrot.lane.b32.xlu0 %v1777, 123
        %v1783 = vpop.permute.xlu0 %1782
        %v1786 = vadd.f32 %v1758, %v1781
        %v1787 = vadd.f32 %v1759, %v1783
        %s1788 = sld [smem:[#allocation8 + $0x37]]
        %v1789 = vstv %s1788
        %v1790 = vmul.f32 %v1789, %v1634
        %v1791 = vmul.f32 %v1789, %v1635
        %1794 = vrot.lane.b32.xlu0 %v1790, 122
        %v1795 = vpop.permute.xlu0 %1794
        %1796 = vrot.lane.b32.xlu0 %v1791, 122
        %v1797 = vpop.permute.xlu0 %1796
        %v1800 = vadd.f32 %v1772, %v1795
        %v1801 = vadd.f32 %v1773, %v1797
        %s1802 = sld [smem:[#allocation8 + $0x99]]
        %v1803 = vstv %s1802
        %v1804 = vmul.f32 %v1803, %v1634
        %v1805 = vmul.f32 %v1803, %v1635
        %1808 = vrot.lane.b32.xlu0 %v1804, 122
        %v1809 = vpop.permute.xlu0 %1808
        %1810 = vrot.lane.b32.xlu0 %v1805, 122
        %v1811 = vpop.permute.xlu0 %1810
        %v1814 = vadd.f32 %v1786, %v1809
        %v1815 = vadd.f32 %v1787, %v1811
        %v1816 = vld [vmem:[%s357 + $0x1] sm:$0xff]
        %v1817 = vld [vmem:[%s357 + $0x9] sm:$0xff]
        %s1818 = sld [smem:[#allocation8 + $0x38]]
        %v1819 = vstv %s1818
        %v1820 = vmul.f32 %v1819, %v1816
        %v1821 = vmul.f32 %v1819, %v1817
        %v1822 = vadd.f32 %v1800, %v1820
        %v1823 = vadd.f32 %v1801, %v1821
        %s1824 = sld [smem:[#allocation8 + $0x9a]]
        %v1825 = vstv %s1824
        %v1826 = vmul.f32 %v1825, %v1816
        %v1827 = vmul.f32 %v1825, %v1817
        %v1828 = vadd.f32 %v1814, %v1826
        %v1829 = vadd.f32 %v1815, %v1827
        %s1830 = sld [smem:[#allocation8 + $0x39]]
        %v1831 = vstv %s1830
        %v1832 = vmul.f32 %v1831, %v1816
        %v1833 = vmul.f32 %v1831, %v1817
        %1836 = vrot.lane.b32.xlu0 %v1832, 127
        %v1837 = vpop.permute.xlu0 %1836
        %1838 = vrot.lane.b32.xlu0 %v1833, 127
        %v1839 = vpop.permute.xlu0 %1838
        %v1842 = vadd.f32 %v1822, %v1837
        %v1843 = vadd.f32 %v1823, %v1839
        %s1844 = sld [smem:[#allocation8 + $0x9b]]
        %v1845 = vstv %s1844
        %v1846 = vmul.f32 %v1845, %v1816
        %v1847 = vmul.f32 %v1845, %v1817
        %1850 = vrot.lane.b32.xlu0 %v1846, 127
        %v1851 = vpop.permute.xlu0 %1850
        %1852 = vrot.lane.b32.xlu0 %v1847, 127
        %v1853 = vpop.permute.xlu0 %1852
        %v1856 = vadd.f32 %v1828, %v1851
        %v1857 = vadd.f32 %v1829, %v1853
        %s1858 = sld [smem:[#allocation8 + $0x3a]]
        %v1859 = vstv %s1858
        %v1860 = vmul.f32 %v1859, %v1816
        %v1861 = vmul.f32 %v1859, %v1817
        %1864 = vrot.lane.b32.xlu0 %v1860, 126
        %v1865 = vpop.permute.xlu0 %1864
        %1866 = vrot.lane.b32.xlu0 %v1861, 126
        %v1867 = vpop.permute.xlu0 %1866
        %v1870 = vadd.f32 %v1842, %v1865
        %v1871 = vadd.f32 %v1843, %v1867
        %s1872 = sld [smem:[#allocation8 + $0x9c]]
        %v1873 = vstv %s1872
        %v1874 = vmul.f32 %v1873, %v1816
        %v1875 = vmul.f32 %v1873, %v1817
        %1878 = vrot.lane.b32.xlu0 %v1874, 126
        %v1879 = vpop.permute.xlu0 %1878
        %1880 = vrot.lane.b32.xlu0 %v1875, 126
        %v1881 = vpop.permute.xlu0 %1880
        %v1884 = vadd.f32 %v1856, %v1879
        %v1885 = vadd.f32 %v1857, %v1881
        %s1886 = sld [smem:[#allocation8 + $0x3b]]
        %v1887 = vstv %s1886
        %v1888 = vmul.f32 %v1887, %v1816
        %v1889 = vmul.f32 %v1887, %v1817
        %1892 = vrot.lane.b32.xlu0 %v1888, 125
        %v1893 = vpop.permute.xlu0 %1892
        %1894 = vrot.lane.b32.xlu0 %v1889, 125
        %v1895 = vpop.permute.xlu0 %1894
        %v1898 = vadd.f32 %v1870, %v1893
        %v1899 = vadd.f32 %v1871, %v1895
        %s1900 = sld [smem:[#allocation8 + $0x9d]]
        %v1901 = vstv %s1900
        %v1902 = vmul.f32 %v1901, %v1816
        %v1903 = vmul.f32 %v1901, %v1817
        %1906 = vrot.lane.b32.xlu0 %v1902, 125
        %v1907 = vpop.permute.xlu0 %1906
        %1908 = vrot.lane.b32.xlu0 %v1903, 125
        %v1909 = vpop.permute.xlu0 %1908
        %v1912 = vadd.f32 %v1884, %v1907
        %v1913 = vadd.f32 %v1885, %v1909
        %s1914 = sld [smem:[#allocation8 + $0x3c]]
        %v1915 = vstv %s1914
        %v1916 = vmul.f32 %v1915, %v1816
        %v1917 = vmul.f32 %v1915, %v1817
        %1920 = vrot.lane.b32.xlu0 %v1916, 124
        %v1921 = vpop.permute.xlu0 %1920
        %1922 = vrot.lane.b32.xlu0 %v1917, 124
        %v1923 = vpop.permute.xlu0 %1922
        %v1926 = vadd.f32 %v1898, %v1921
        %v1927 = vadd.f32 %v1899, %v1923
        %s1928 = sld [smem:[#allocation8 + $0x9e]]
        %v1929 = vstv %s1928
        %v1930 = vmul.f32 %v1929, %v1816
        %v1931 = vmul.f32 %v1929, %v1817
        %1934 = vrot.lane.b32.xlu0 %v1930, 124
        %v1935 = vpop.permute.xlu0 %1934
        %1936 = vrot.lane.b32.xlu0 %v1931, 124
        %v1937 = vpop.permute.xlu0 %1936
        %v1940 = vadd.f32 %v1912, %v1935
        %v1941 = vadd.f32 %v1913, %v1937
        %s1942 = sld [smem:[#allocation8 + $0x3d]]
        %v1943 = vstv %s1942
        %v1944 = vmul.f32 %v1943, %v1816
        %v1945 = vmul.f32 %v1943, %v1817
        %1948 = vrot.lane.b32.xlu0 %v1944, 123
        %v1949 = vpop.permute.xlu0 %1948
        %1950 = vrot.lane.b32.xlu0 %v1945, 123
        %v1951 = vpop.permute.xlu0 %1950
        %v1954 = vadd.f32 %v1926, %v1949
        %v1955 = vadd.f32 %v1927, %v1951
        %s1956 = sld [smem:[#allocation8 + $0x9f]]
        %v1957 = vstv %s1956
        %v1958 = vmul.f32 %v1957, %v1816
        %v1959 = vmul.f32 %v1957, %v1817
        %1962 = vrot.lane.b32.xlu0 %v1958, 123
        %v1963 = vpop.permute.xlu0 %1962
        %1964 = vrot.lane.b32.xlu0 %v1959, 123
        %v1965 = vpop.permute.xlu0 %1964
        %v1968 = vadd.f32 %v1940, %v1963
        %v1969 = vadd.f32 %v1941, %v1965
        %s1970 = sld [smem:[#allocation8 + $0x3e]]
        %v1971 = vstv %s1970
        %v1972 = vmul.f32 %v1971, %v1816
        %v1973 = vmul.f32 %v1971, %v1817
        %1976 = vrot.lane.b32.xlu0 %v1972, 122
        %v1977 = vpop.permute.xlu0 %1976
        %1978 = vrot.lane.b32.xlu0 %v1973, 122
        %v1979 = vpop.permute.xlu0 %1978
        %v1982 = vadd.f32 %v1954, %v1977
        %v1983 = vadd.f32 %v1955, %v1979
        %s1984 = sld [smem:[#allocation8 + $0xa0]]
        %v1985 = vstv %s1984
        %v1986 = vmul.f32 %v1985, %v1816
        %v1987 = vmul.f32 %v1985, %v1817
        %1990 = vrot.lane.b32.xlu0 %v1986, 122
        %v1991 = vpop.permute.xlu0 %1990
        %1992 = vrot.lane.b32.xlu0 %v1987, 122
        %v1993 = vpop.permute.xlu0 %1992
        %v1996 = vadd.f32 %v1968, %v1991
        %v1997 = vadd.f32 %v1969, %v1993
        %v1998 = vld [vmem:[%s357 + $0x2] sm:$0xff]
        %v1999 = vld [vmem:[%s357 + $0xa] sm:$0xff]
        %s2000 = sld [smem:[#allocation8 + $0x3f]]
        %v2001 = vstv %s2000
        %v2002 = vmul.f32 %v2001, %v1998
        %v2003 = vmul.f32 %v2001, %v1999
        %v2004 = vadd.f32 %v1982, %v2002
        %v2005 = vadd.f32 %v1983, %v2003
        %s2006 = sld [smem:[#allocation8 + $0xa1]]
        %v2007 = vstv %s2006
        %v2008 = vmul.f32 %v2007, %v1998
        %v2009 = vmul.f32 %v2007, %v1999
        %v2010 = vadd.f32 %v1996, %v2008
        %v2011 = vadd.f32 %v1997, %v2009
        %s2012 = sld [smem:[#allocation8 + $0x40]]
        %v2013 = vstv %s2012
        %v2014 = vmul.f32 %v2013, %v1998
        %v2015 = vmul.f32 %v2013, %v1999
        %2018 = vrot.lane.b32.xlu0 %v2014, 127
        %v2019 = vpop.permute.xlu0 %2018
        %2020 = vrot.lane.b32.xlu0 %v2015, 127
        %v2021 = vpop.permute.xlu0 %2020
        %v2024 = vadd.f32 %v2004, %v2019
        %v2025 = vadd.f32 %v2005, %v2021
        %s2026 = sld [smem:[#allocation8 + $0xa2]]
        %v2027 = vstv %s2026
        %v2028 = vmul.f32 %v2027, %v1998
        %v2029 = vmul.f32 %v2027, %v1999
        %2032 = vrot.lane.b32.xlu0 %v2028, 127
        %v2033 = vpop.permute.xlu0 %2032
        %2034 = vrot.lane.b32.xlu0 %v2029, 127
        %v2035 = vpop.permute.xlu0 %2034
        %v2038 = vadd.f32 %v2010, %v2033
        %v2039 = vadd.f32 %v2011, %v2035
        %s2040 = sld [smem:[#allocation8 + $0x41]]
        %v2041 = vstv %s2040
        %v2042 = vmul.f32 %v2041, %v1998
        %v2043 = vmul.f32 %v2041, %v1999
        %2046 = vrot.lane.b32.xlu0 %v2042, 126
        %v2047 = vpop.permute.xlu0 %2046
        %2048 = vrot.lane.b32.xlu0 %v2043, 126
        %v2049 = vpop.permute.xlu0 %2048
        %v2052 = vadd.f32 %v2024, %v2047
        %v2053 = vadd.f32 %v2025, %v2049
        %s2054 = sld [smem:[#allocation8 + $0xa3]]
        %v2055 = vstv %s2054
        %v2056 = vmul.f32 %v2055, %v1998
        %v2057 = vmul.f32 %v2055, %v1999
        %2060 = vrot.lane.b32.xlu0 %v2056, 126
        %v2061 = vpop.permute.xlu0 %2060
        %2062 = vrot.lane.b32.xlu0 %v2057, 126
        %v2063 = vpop.permute.xlu0 %2062
        %v2066 = vadd.f32 %v2038, %v2061
        %v2067 = vadd.f32 %v2039, %v2063
        %s2068 = sld [smem:[#allocation8 + $0x42]]
        %v2069 = vstv %s2068
        %v2070 = vmul.f32 %v2069, %v1998
        %v2071 = vmul.f32 %v2069, %v1999
        %2074 = vrot.lane.b32.xlu0 %v2070, 125
        %v2075 = vpop.permute.xlu0 %2074
        %2076 = vrot.lane.b32.xlu0 %v2071, 125
        %v2077 = vpop.permute.xlu0 %2076
        %v2080 = vadd.f32 %v2052, %v2075
        %v2081 = vadd.f32 %v2053, %v2077
        %s2082 = sld [smem:[#allocation8 + $0xa4]]
        %v2083 = vstv %s2082
        %v2084 = vmul.f32 %v2083, %v1998
        %v2085 = vmul.f32 %v2083, %v1999
        %2088 = vrot.lane.b32.xlu0 %v2084, 125
        %v2089 = vpop.permute.xlu0 %2088
        %2090 = vrot.lane.b32.xlu0 %v2085, 125
        %v2091 = vpop.permute.xlu0 %2090
        %v2094 = vadd.f32 %v2066, %v2089
        %v2095 = vadd.f32 %v2067, %v2091
        %s2096 = sld [smem:[#allocation8 + $0x43]]
        %v2097 = vstv %s2096
        %v2098 = vmul.f32 %v2097, %v1998
        %v2099 = vmul.f32 %v2097, %v1999
        %2102 = vrot.lane.b32.xlu0 %v2098, 124
        %v2103 = vpop.permute.xlu0 %2102
        %2104 = vrot.lane.b32.xlu0 %v2099, 124
        %v2105 = vpop.permute.xlu0 %2104
        %v2108 = vadd.f32 %v2080, %v2103
        %v2109 = vadd.f32 %v2081, %v2105
        %s2110 = sld [smem:[#allocation8 + $0xa5]]
        %v2111 = vstv %s2110
        %v2112 = vmul.f32 %v2111, %v1998
        %v2113 = vmul.f32 %v2111, %v1999
        %2116 = vrot.lane.b32.xlu0 %v2112, 124
        %v2117 = vpop.permute.xlu0 %2116
        %2118 = vrot.lane.b32.xlu0 %v2113, 124
        %v2119 = vpop.permute.xlu0 %2118
        %v2122 = vadd.f32 %v2094, %v2117
        %v2123 = vadd.f32 %v2095, %v2119
        %s2124 = sld [smem:[#allocation8 + $0x44]]
        %v2125 = vstv %s2124
        %v2126 = vmul.f32 %v2125, %v1998
        %v2127 = vmul.f32 %v2125, %v1999
        %2130 = vrot.lane.b32.xlu0 %v2126, 123
        %v2131 = vpop.permute.xlu0 %2130
        %2132 = vrot.lane.b32.xlu0 %v2127, 123
        %v2133 = vpop.permute.xlu0 %2132
        %v2136 = vadd.f32 %v2108, %v2131
        %v2137 = vadd.f32 %v2109, %v2133
        %s2138 = sld [smem:[#allocation8 + $0xa6]]
        %v2139 = vstv %s2138
        %v2140 = vmul.f32 %v2139, %v1998
        %v2141 = vmul.f32 %v2139, %v1999
        %2144 = vrot.lane.b32.xlu0 %v2140, 123
        %v2145 = vpop.permute.xlu0 %2144
        %2146 = vrot.lane.b32.xlu0 %v2141, 123
        %v2147 = vpop.permute.xlu0 %2146
        %v2150 = vadd.f32 %v2122, %v2145
        %v2151 = vadd.f32 %v2123, %v2147
        %s2152 = sld [smem:[#allocation8 + $0x45]]
        %v2153 = vstv %s2152
        %v2154 = vmul.f32 %v2153, %v1998
        %v2155 = vmul.f32 %v2153, %v1999
        %2158 = vrot.lane.b32.xlu0 %v2154, 122
        %v2159 = vpop.permute.xlu0 %2158
        %2160 = vrot.lane.b32.xlu0 %v2155, 122
        %v2161 = vpop.permute.xlu0 %2160
        %v2164 = vadd.f32 %v2136, %v2159
        %v2165 = vadd.f32 %v2137, %v2161
        %s2166 = sld [smem:[#allocation8 + $0xa7]]
        %v2167 = vstv %s2166
        %v2168 = vmul.f32 %v2167, %v1998
        %v2169 = vmul.f32 %v2167, %v1999
        %2172 = vrot.lane.b32.xlu0 %v2168, 122
        %v2173 = vpop.permute.xlu0 %2172
        %2174 = vrot.lane.b32.xlu0 %v2169, 122
        %v2175 = vpop.permute.xlu0 %2174
        %v2178 = vadd.f32 %v2150, %v2173
        %v2179 = vadd.f32 %v2151, %v2175
        %v2180 = vld [vmem:[%s357 + $0x3] sm:$0xff]
        %v2181 = vld [vmem:[%s357 + $0xb] sm:$0xff]
        %s2182 = sld [smem:[#allocation8 + $0x46]]
        %v2183 = vstv %s2182
        %v2184 = vmul.f32 %v2183, %v2180
        %v2185 = vmul.f32 %v2183, %v2181
        %v2186 = vadd.f32 %v2164, %v2184
        %v2187 = vadd.f32 %v2165, %v2185
        %s2188 = sld [smem:[#allocation8 + $0xa8]]
        %v2189 = vstv %s2188
        %v2190 = vmul.f32 %v2189, %v2180
        %v2191 = vmul.f32 %v2189, %v2181
        %v2192 = vadd.f32 %v2178, %v2190
        %v2193 = vadd.f32 %v2179, %v2191
        %s2194 = sld [smem:[#allocation8 + $0x47]]
        %v2195 = vstv %s2194
        %v2196 = vmul.f32 %v2195, %v2180
        %v2197 = vmul.f32 %v2195, %v2181
        %2200 = vrot.lane.b32.xlu0 %v2196, 127
        %v2201 = vpop.permute.xlu0 %2200
        %2202 = vrot.lane.b32.xlu0 %v2197, 127
        %v2203 = vpop.permute.xlu0 %2202
        %v2206 = vadd.f32 %v2186, %v2201
        %v2207 = vadd.f32 %v2187, %v2203
        %s2208 = sld [smem:[#allocation8 + $0xa9]]
        %v2209 = vstv %s2208
        %v2210 = vmul.f32 %v2209, %v2180
        %v2211 = vmul.f32 %v2209, %v2181
        %2214 = vrot.lane.b32.xlu0 %v2210, 127
        %v2215 = vpop.permute.xlu0 %2214
        %2216 = vrot.lane.b32.xlu0 %v2211, 127
        %v2217 = vpop.permute.xlu0 %2216
        %v2220 = vadd.f32 %v2192, %v2215
        %v2221 = vadd.f32 %v2193, %v2217
        %s2222 = sld [smem:[#allocation8 + $0x48]]
        %v2223 = vstv %s2222
        %v2224 = vmul.f32 %v2223, %v2180
        %v2225 = vmul.f32 %v2223, %v2181
        %2228 = vrot.lane.b32.xlu0 %v2224, 126
        %v2229 = vpop.permute.xlu0 %2228
        %2230 = vrot.lane.b32.xlu0 %v2225, 126
        %v2231 = vpop.permute.xlu0 %2230
        %v2234 = vadd.f32 %v2206, %v2229
        %v2235 = vadd.f32 %v2207, %v2231
        %s2236 = sld [smem:[#allocation8 + $0xaa]]
        %v2237 = vstv %s2236
        %v2238 = vmul.f32 %v2237, %v2180
        %v2239 = vmul.f32 %v2237, %v2181
        %2242 = vrot.lane.b32.xlu0 %v2238, 126
        %v2243 = vpop.permute.xlu0 %2242
        %2244 = vrot.lane.b32.xlu0 %v2239, 126
        %v2245 = vpop.permute.xlu0 %2244
        %v2248 = vadd.f32 %v2220, %v2243
        %v2249 = vadd.f32 %v2221, %v2245
        %s2250 = sld [smem:[#allocation8 + $0x49]]
        %v2251 = vstv %s2250
        %v2252 = vmul.f32 %v2251, %v2180
        %v2253 = vmul.f32 %v2251, %v2181
        %2256 = vrot.lane.b32.xlu0 %v2252, 125
        %v2257 = vpop.permute.xlu0 %2256
        %2258 = vrot.lane.b32.xlu0 %v2253, 125
        %v2259 = vpop.permute.xlu0 %2258
        %v2262 = vadd.f32 %v2234, %v2257
        %v2263 = vadd.f32 %v2235, %v2259
        %s2264 = sld [smem:[#allocation8 + $0xab]]
        %v2265 = vstv %s2264
        %v2266 = vmul.f32 %v2265, %v2180
        %v2267 = vmul.f32 %v2265, %v2181
        %2270 = vrot.lane.b32.xlu0 %v2266, 125
        %v2271 = vpop.permute.xlu0 %2270
        %2272 = vrot.lane.b32.xlu0 %v2267, 125
        %v2273 = vpop.permute.xlu0 %2272
        %v2276 = vadd.f32 %v2248, %v2271
        %v2277 = vadd.f32 %v2249, %v2273
        %s2278 = sld [smem:[#allocation8 + $0x4a]]
        %v2279 = vstv %s2278
        %v2280 = vmul.f32 %v2279, %v2180
        %v2281 = vmul.f32 %v2279, %v2181
        %2284 = vrot.lane.b32.xlu0 %v2280, 124
        %v2285 = vpop.permute.xlu0 %2284
        %2286 = vrot.lane.b32.xlu0 %v2281, 124
        %v2287 = vpop.permute.xlu0 %2286
        %v2290 = vadd.f32 %v2262, %v2285
        %v2291 = vadd.f32 %v2263, %v2287
        %s2292 = sld [smem:[#allocation8 + $0xac]]
        %v2293 = vstv %s2292
        %v2294 = vmul.f32 %v2293, %v2180
        %v2295 = vmul.f32 %v2293, %v2181
        %2298 = vrot.lane.b32.xlu0 %v2294, 124
        %v2299 = vpop.permute.xlu0 %2298
        %2300 = vrot.lane.b32.xlu0 %v2295, 124
        %v2301 = vpop.permute.xlu0 %2300
        %v2304 = vadd.f32 %v2276, %v2299
        %v2305 = vadd.f32 %v2277, %v2301
        %s2306 = sld [smem:[#allocation8 + $0x4b]]
        %v2307 = vstv %s2306
        %v2308 = vmul.f32 %v2307, %v2180
        %v2309 = vmul.f32 %v2307, %v2181
        %2312 = vrot.lane.b32.xlu0 %v2308, 123
        %v2313 = vpop.permute.xlu0 %2312
        %2314 = vrot.lane.b32.xlu0 %v2309, 123
        %v2315 = vpop.permute.xlu0 %2314
        %v2318 = vadd.f32 %v2290, %v2313
        %v2319 = vadd.f32 %v2291, %v2315
        %s2320 = sld [smem:[#allocation8 + $0xad]]
        %v2321 = vstv %s2320
        %v2322 = vmul.f32 %v2321, %v2180
        %v2323 = vmul.f32 %v2321, %v2181
        %2326 = vrot.lane.b32.xlu0 %v2322, 123
        %v2327 = vpop.permute.xlu0 %2326
        %2328 = vrot.lane.b32.xlu0 %v2323, 123
        %v2329 = vpop.permute.xlu0 %2328
        %v2332 = vadd.f32 %v2304, %v2327
        %v2333 = vadd.f32 %v2305, %v2329
        %s2334 = sld [smem:[#allocation8 + $0x4c]]
        %v2335 = vstv %s2334
        %v2336 = vmul.f32 %v2335, %v2180
        %v2337 = vmul.f32 %v2335, %v2181
        %2340 = vrot.lane.b32.xlu0 %v2336, 122
        %v2341 = vpop.permute.xlu0 %2340
        %2342 = vrot.lane.b32.xlu0 %v2337, 122
        %v2343 = vpop.permute.xlu0 %2342
        %v2346 = vadd.f32 %v2318, %v2341
        %v2347 = vadd.f32 %v2319, %v2343
        %s2348 = sld [smem:[#allocation8 + $0xae]]
        %v2349 = vstv %s2348
        %v2350 = vmul.f32 %v2349, %v2180
        %v2351 = vmul.f32 %v2349, %v2181
        %2354 = vrot.lane.b32.xlu0 %v2350, 122
        %v2355 = vpop.permute.xlu0 %2354
        %2356 = vrot.lane.b32.xlu0 %v2351, 122
        %v2357 = vpop.permute.xlu0 %2356
        %v2360 = vadd.f32 %v2332, %v2355
        %v2361 = vadd.f32 %v2333, %v2357
        %v2362 = vld [vmem:[%s357 + $0x4] sm:$0xff]
        %v2363 = vld [vmem:[%s357 + $0xc] sm:$0xff]
        %s2364 = sld [smem:[#allocation8 + $0x4d]]
        %v2365 = vstv %s2364
        %v2366 = vmul.f32 %v2365, %v2362
        %v2367 = vmul.f32 %v2365, %v2363
        %v2368 = vadd.f32 %v2346, %v2366
        %v2369 = vadd.f32 %v2347, %v2367
        %s2370 = sld [smem:[#allocation8 + $0xaf]]
        %v2371 = vstv %s2370
        %v2372 = vmul.f32 %v2371, %v2362
        %v2373 = vmul.f32 %v2371, %v2363
        %v2374 = vadd.f32 %v2360, %v2372
        %v2375 = vadd.f32 %v2361, %v2373
        %s2376 = sld [smem:[#allocation8 + $0x4e]]
        %v2377 = vstv %s2376
        %v2378 = vmul.f32 %v2377, %v2362
        %v2379 = vmul.f32 %v2377, %v2363
        %2382 = vrot.lane.b32.xlu0 %v2378, 127
        %v2383 = vpop.permute.xlu0 %2382
        %2384 = vrot.lane.b32.xlu0 %v2379, 127
        %v2385 = vpop.permute.xlu0 %2384
        %v2388 = vadd.f32 %v2368, %v2383
        %v2389 = vadd.f32 %v2369, %v2385
        %s2390 = sld [smem:[#allocation8 + $0xb0]]
        %v2391 = vstv %s2390
        %v2392 = vmul.f32 %v2391, %v2362
        %v2393 = vmul.f32 %v2391, %v2363
        %2396 = vrot.lane.b32.xlu0 %v2392, 127
        %v2397 = vpop.permute.xlu0 %2396
        %2398 = vrot.lane.b32.xlu0 %v2393, 127
        %v2399 = vpop.permute.xlu0 %2398
        %v2402 = vadd.f32 %v2374, %v2397
        %v2403 = vadd.f32 %v2375, %v2399
        %s2404 = sld [smem:[#allocation8 + $0x4f]]
        %v2405 = vstv %s2404
        %v2406 = vmul.f32 %v2405, %v2362
        %v2407 = vmul.f32 %v2405, %v2363
        %2410 = vrot.lane.b32.xlu0 %v2406, 126
        %v2411 = vpop.permute.xlu0 %2410
        %2412 = vrot.lane.b32.xlu0 %v2407, 126
        %v2413 = vpop.permute.xlu0 %2412
        %v2416 = vadd.f32 %v2388, %v2411
        %v2417 = vadd.f32 %v2389, %v2413
        %s2418 = sld [smem:[#allocation8 + $0xb1]]
        %v2419 = vstv %s2418
        %v2420 = vmul.f32 %v2419, %v2362
        %v2421 = vmul.f32 %v2419, %v2363
        %2424 = vrot.lane.b32.xlu0 %v2420, 126
        %v2425 = vpop.permute.xlu0 %2424
        %2426 = vrot.lane.b32.xlu0 %v2421, 126
        %v2427 = vpop.permute.xlu0 %2426
        %v2430 = vadd.f32 %v2402, %v2425
        %v2431 = vadd.f32 %v2403, %v2427
        %s2432 = sld [smem:[#allocation8 + $0x50]]
        %v2433 = vstv %s2432
        %v2434 = vmul.f32 %v2433, %v2362
        %v2435 = vmul.f32 %v2433, %v2363
        %2438 = vrot.lane.b32.xlu0 %v2434, 125
        %v2439 = vpop.permute.xlu0 %2438
        %2440 = vrot.lane.b32.xlu0 %v2435, 125
        %v2441 = vpop.permute.xlu0 %2440
        %v2444 = vadd.f32 %v2416, %v2439
        %v2445 = vadd.f32 %v2417, %v2441
        %s2446 = sld [smem:[#allocation8 + $0xb2]]
        %v2447 = vstv %s2446
        %v2448 = vmul.f32 %v2447, %v2362
        %v2449 = vmul.f32 %v2447, %v2363
        %2452 = vrot.lane.b32.xlu0 %v2448, 125
        %v2453 = vpop.permute.xlu0 %2452
        %2454 = vrot.lane.b32.xlu0 %v2449, 125
        %v2455 = vpop.permute.xlu0 %2454
        %v2458 = vadd.f32 %v2430, %v2453
        %v2459 = vadd.f32 %v2431, %v2455
        %s2460 = sld [smem:[#allocation8 + $0x51]]
        %v2461 = vstv %s2460
        %v2462 = vmul.f32 %v2461, %v2362
        %v2463 = vmul.f32 %v2461, %v2363
        %2466 = vrot.lane.b32.xlu0 %v2462, 124
        %v2467 = vpop.permute.xlu0 %2466
        %2468 = vrot.lane.b32.xlu0 %v2463, 124
        %v2469 = vpop.permute.xlu0 %2468
        %v2472 = vadd.f32 %v2444, %v2467
        %v2473 = vadd.f32 %v2445, %v2469
        %s2474 = sld [smem:[#allocation8 + $0xb3]]
        %v2475 = vstv %s2474
        %v2476 = vmul.f32 %v2475, %v2362
        %v2477 = vmul.f32 %v2475, %v2363
        %2480 = vrot.lane.b32.xlu0 %v2476, 124
        %v2481 = vpop.permute.xlu0 %2480
        %2482 = vrot.lane.b32.xlu0 %v2477, 124
        %v2483 = vpop.permute.xlu0 %2482
        %v2486 = vadd.f32 %v2458, %v2481
        %v2487 = vadd.f32 %v2459, %v2483
        %s2488 = sld [smem:[#allocation8 + $0x52]]
        %v2489 = vstv %s2488
        %v2490 = vmul.f32 %v2489, %v2362
        %v2491 = vmul.f32 %v2489, %v2363
        %2494 = vrot.lane.b32.xlu0 %v2490, 123
        %v2495 = vpop.permute.xlu0 %2494
        %2496 = vrot.lane.b32.xlu0 %v2491, 123
        %v2497 = vpop.permute.xlu0 %2496
        %v2500 = vadd.f32 %v2472, %v2495
        %v2501 = vadd.f32 %v2473, %v2497
        %s2502 = sld [smem:[#allocation8 + $0xb4]]
        %v2503 = vstv %s2502
        %v2504 = vmul.f32 %v2503, %v2362
        %v2505 = vmul.f32 %v2503, %v2363
        %2508 = vrot.lane.b32.xlu0 %v2504, 123
        %v2509 = vpop.permute.xlu0 %2508
        %2510 = vrot.lane.b32.xlu0 %v2505, 123
        %v2511 = vpop.permute.xlu0 %2510
        %v2514 = vadd.f32 %v2486, %v2509
        %v2515 = vadd.f32 %v2487, %v2511
        %s2516 = sld [smem:[#allocation8 + $0x53]]
        %v2517 = vstv %s2516
        %v2518 = vmul.f32 %v2517, %v2362
        %v2519 = vmul.f32 %v2517, %v2363
        %2522 = vrot.lane.b32.xlu0 %v2518, 122
        %v2523 = vpop.permute.xlu0 %2522
        %2524 = vrot.lane.b32.xlu0 %v2519, 122
        %v2525 = vpop.permute.xlu0 %2524
        %v2528 = vadd.f32 %v2500, %v2523
        %v2529 = vadd.f32 %v2501, %v2525
        %s2530 = sld [smem:[#allocation8 + $0xb5]]
        %v2531 = vstv %s2530
        %v2532 = vmul.f32 %v2531, %v2362
        %v2533 = vmul.f32 %v2531, %v2363
        %2536 = vrot.lane.b32.xlu0 %v2532, 122
        %v2537 = vpop.permute.xlu0 %2536
        %2538 = vrot.lane.b32.xlu0 %v2533, 122
        %v2539 = vpop.permute.xlu0 %2538
        %v2542 = vadd.f32 %v2514, %v2537
        %v2543 = vadd.f32 %v2515, %v2539
        %v2544 = vld [vmem:[%s357 + $0x5] sm:$0xff]
        %v2545 = vld [vmem:[%s357 + $0xd] sm:$0xff]
        %s2546 = sld [smem:[#allocation8 + $0x54]]
        %v2547 = vstv %s2546
        %v2548 = vmul.f32 %v2547, %v2544
        %v2549 = vmul.f32 %v2547, %v2545
        %v2550 = vadd.f32 %v2528, %v2548
        %v2551 = vadd.f32 %v2529, %v2549
        %s2552 = sld [smem:[#allocation8 + $0xb6]]
        %v2553 = vstv %s2552
        %v2554 = vmul.f32 %v2553, %v2544
        %v2555 = vmul.f32 %v2553, %v2545
        %v2556 = vadd.f32 %v2542, %v2554
        %v2557 = vadd.f32 %v2543, %v2555
        %s2558 = sld [smem:[#allocation8 + $0x55]]
        %v2559 = vstv %s2558
        %v2560 = vmul.f32 %v2559, %v2544
        %v2561 = vmul.f32 %v2559, %v2545
        %2564 = vrot.lane.b32.xlu0 %v2560, 127
        %v2565 = vpop.permute.xlu0 %2564
        %2566 = vrot.lane.b32.xlu0 %v2561, 127
        %v2567 = vpop.permute.xlu0 %2566
        %v2570 = vadd.f32 %v2550, %v2565
        %v2571 = vadd.f32 %v2551, %v2567
        %s2572 = sld [smem:[#allocation8 + $0xb7]]
        %v2573 = vstv %s2572
        %v2574 = vmul.f32 %v2573, %v2544
        %v2575 = vmul.f32 %v2573, %v2545
        %2578 = vrot.lane.b32.xlu0 %v2574, 127
        %v2579 = vpop.permute.xlu0 %2578
        %2580 = vrot.lane.b32.xlu0 %v2575, 127
        %v2581 = vpop.permute.xlu0 %2580
        %v2584 = vadd.f32 %v2556, %v2579
        %v2585 = vadd.f32 %v2557, %v2581
        %s2586 = sld [smem:[#allocation8 + $0x56]]
        %v2587 = vstv %s2586
        %v2588 = vmul.f32 %v2587, %v2544
        %v2589 = vmul.f32 %v2587, %v2545
        %2592 = vrot.lane.b32.xlu0 %v2588, 126
        %v2593 = vpop.permute.xlu0 %2592
        %2594 = vrot.lane.b32.xlu0 %v2589, 126
        %v2595 = vpop.permute.xlu0 %2594
        %v2598 = vadd.f32 %v2570, %v2593
        %v2599 = vadd.f32 %v2571, %v2595
        %s2600 = sld [smem:[#allocation8 + $0xb8]]
        %v2601 = vstv %s2600
        %v2602 = vmul.f32 %v2601, %v2544
        %v2603 = vmul.f32 %v2601, %v2545
        %2606 = vrot.lane.b32.xlu0 %v2602, 126
        %v2607 = vpop.permute.xlu0 %2606
        %2608 = vrot.lane.b32.xlu0 %v2603, 126
        %v2609 = vpop.permute.xlu0 %2608
        %v2612 = vadd.f32 %v2584, %v2607
        %v2613 = vadd.f32 %v2585, %v2609
        %s2614 = sld [smem:[#allocation8 + $0x57]]
        %v2615 = vstv %s2614
        %v2616 = vmul.f32 %v2615, %v2544
        %v2617 = vmul.f32 %v2615, %v2545
        %2620 = vrot.lane.b32.xlu0 %v2616, 125
        %v2621 = vpop.permute.xlu0 %2620
        %2622 = vrot.lane.b32.xlu0 %v2617, 125
        %v2623 = vpop.permute.xlu0 %2622
        %v2626 = vadd.f32 %v2598, %v2621
        %v2627 = vadd.f32 %v2599, %v2623
        %s2628 = sld [smem:[#allocation8 + $0xb9]]
        %v2629 = vstv %s2628
        %v2630 = vmul.f32 %v2629, %v2544
        %v2631 = vmul.f32 %v2629, %v2545
        %2634 = vrot.lane.b32.xlu0 %v2630, 125
        %v2635 = vpop.permute.xlu0 %2634
        %2636 = vrot.lane.b32.xlu0 %v2631, 125
        %v2637 = vpop.permute.xlu0 %2636
        %v2640 = vadd.f32 %v2612, %v2635
        %v2641 = vadd.f32 %v2613, %v2637
        %s2642 = sld [smem:[#allocation8 + $0x58]]
        %v2643 = vstv %s2642
        %v2644 = vmul.f32 %v2643, %v2544
        %v2645 = vmul.f32 %v2643, %v2545
        %2648 = vrot.lane.b32.xlu0 %v2644, 124
        %v2649 = vpop.permute.xlu0 %2648
        %2650 = vrot.lane.b32.xlu0 %v2645, 124
        %v2651 = vpop.permute.xlu0 %2650
        %v2654 = vadd.f32 %v2626, %v2649
        %v2655 = vadd.f32 %v2627, %v2651
        %s2656 = sld [smem:[#allocation8 + $0xba]]
        %v2657 = vstv %s2656
        %v2658 = vmul.f32 %v2657, %v2544
        %v2659 = vmul.f32 %v2657, %v2545
        %2662 = vrot.lane.b32.xlu0 %v2658, 124
        %v2663 = vpop.permute.xlu0 %2662
        %2664 = vrot.lane.b32.xlu0 %v2659, 124
        %v2665 = vpop.permute.xlu0 %2664
        %v2668 = vadd.f32 %v2640, %v2663
        %v2669 = vadd.f32 %v2641, %v2665
        %s2670 = sld [smem:[#allocation8 + $0x59]]
        %v2671 = vstv %s2670
        %v2672 = vmul.f32 %v2671, %v2544
        %v2673 = vmul.f32 %v2671, %v2545
        %2676 = vrot.lane.b32.xlu0 %v2672, 123
        %v2677 = vpop.permute.xlu0 %2676
        %2678 = vrot.lane.b32.xlu0 %v2673, 123
        %v2679 = vpop.permute.xlu0 %2678
        %v2682 = vadd.f32 %v2654, %v2677
        %v2683 = vadd.f32 %v2655, %v2679
        %s2684 = sld [smem:[#allocation8 + $0xbb]]
        %v2685 = vstv %s2684
        %v2686 = vmul.f32 %v2685, %v2544
        %v2687 = vmul.f32 %v2685, %v2545
        %2690 = vrot.lane.b32.xlu0 %v2686, 123
        %v2691 = vpop.permute.xlu0 %2690
        %2692 = vrot.lane.b32.xlu0 %v2687, 123
        %v2693 = vpop.permute.xlu0 %2692
        %v2696 = vadd.f32 %v2668, %v2691
        %v2697 = vadd.f32 %v2669, %v2693
        %s2698 = sld [smem:[#allocation8 + $0x5a]]
        %v2699 = vstv %s2698
        %v2700 = vmul.f32 %v2699, %v2544
        %v2701 = vmul.f32 %v2699, %v2545
        %2704 = vrot.lane.b32.xlu0 %v2700, 122
        %v2705 = vpop.permute.xlu0 %2704
        %2706 = vrot.lane.b32.xlu0 %v2701, 122
        %v2707 = vpop.permute.xlu0 %2706
        %v2710 = vadd.f32 %v2682, %v2705
        %v2711 = vadd.f32 %v2683, %v2707
        %s2712 = sld [smem:[#allocation8 + $0xbc]]
        %v2713 = vstv %s2712
        %v2714 = vmul.f32 %v2713, %v2544
        %v2715 = vmul.f32 %v2713, %v2545
        %2718 = vrot.lane.b32.xlu0 %v2714, 122
        %v2719 = vpop.permute.xlu0 %2718
        %2720 = vrot.lane.b32.xlu0 %v2715, 122
        %v2721 = vpop.permute.xlu0 %2720
        %v2724 = vadd.f32 %v2696, %v2719
        %v2725 = vadd.f32 %v2697, %v2721
        %v2726 = vld [vmem:[%s357 + $0x6] sm:$0xff]
        %v2727 = vld [vmem:[%s357 + $0xe] sm:$0xff]
        %s2728 = sld [smem:[#allocation8 + $0x5b]]
        %v2729 = vstv %s2728
        %v2730 = vmul.f32 %v2729, %v2726
        %v2731 = vmul.f32 %v2729, %v2727
        %v2732 = vadd.f32 %v2710, %v2730
        %v2733 = vadd.f32 %v2711, %v2731
        %s2734 = sld [smem:[#allocation8 + $0xbd]]
        %v2735 = vstv %s2734
        %v2736 = vmul.f32 %v2735, %v2726
        %v2737 = vmul.f32 %v2735, %v2727
        %v2738 = vadd.f32 %v2724, %v2736
        %v2739 = vadd.f32 %v2725, %v2737
        %s2740 = sld [smem:[#allocation8 + $0x5c]]
        %v2741 = vstv %s2740
        %v2742 = vmul.f32 %v2741, %v2726
        %v2743 = vmul.f32 %v2741, %v2727
        %2746 = vrot.lane.b32.xlu0 %v2742, 127
        %v2747 = vpop.permute.xlu0 %2746
        %2748 = vrot.lane.b32.xlu0 %v2743, 127
        %v2749 = vpop.permute.xlu0 %2748
        %v2752 = vadd.f32 %v2732, %v2747
        %v2753 = vadd.f32 %v2733, %v2749
        %s2754 = sld [smem:[#allocation8 + $0xbe]]
        %v2755 = vstv %s2754
        %v2756 = vmul.f32 %v2755, %v2726
        %v2757 = vmul.f32 %v2755, %v2727
        %2760 = vrot.lane.b32.xlu0 %v2756, 127
        %v2761 = vpop.permute.xlu0 %2760
        %2762 = vrot.lane.b32.xlu0 %v2757, 127
        %v2763 = vpop.permute.xlu0 %2762
        %v2766 = vadd.f32 %v2738, %v2761
        %v2767 = vadd.f32 %v2739, %v2763
        %s2768 = sld [smem:[#allocation8 + $0x5d]]
        %v2769 = vstv %s2768
        %v2770 = vmul.f32 %v2769, %v2726
        %v2771 = vmul.f32 %v2769, %v2727
        %2774 = vrot.lane.b32.xlu0 %v2770, 126
        %v2775 = vpop.permute.xlu0 %2774
        %2776 = vrot.lane.b32.xlu0 %v2771, 126
        %v2777 = vpop.permute.xlu0 %2776
        %v2780 = vadd.f32 %v2752, %v2775
        %v2781 = vadd.f32 %v2753, %v2777
        %s2782 = sld [smem:[#allocation8 + $0xbf]]
        %v2783 = vstv %s2782
        %v2784 = vmul.f32 %v2783, %v2726
        %v2785 = vmul.f32 %v2783, %v2727
        %2788 = vrot.lane.b32.xlu0 %v2784, 126
        %v2789 = vpop.permute.xlu0 %2788
        %2790 = vrot.lane.b32.xlu0 %v2785, 126
        %v2791 = vpop.permute.xlu0 %2790
        %v2794 = vadd.f32 %v2766, %v2789
        %v2795 = vadd.f32 %v2767, %v2791
        %s2796 = sld [smem:[#allocation8 + $0x5e]]
        %v2797 = vstv %s2796
        %v2798 = vmul.f32 %v2797, %v2726
        %v2799 = vmul.f32 %v2797, %v2727
        %2802 = vrot.lane.b32.xlu0 %v2798, 125
        %v2803 = vpop.permute.xlu0 %2802
        %2804 = vrot.lane.b32.xlu0 %v2799, 125
        %v2805 = vpop.permute.xlu0 %2804
        %v2808 = vadd.f32 %v2780, %v2803
        %v2809 = vadd.f32 %v2781, %v2805
        %s2810 = sld [smem:[#allocation8 + $0xc0]]
        %v2811 = vstv %s2810
        %v2812 = vmul.f32 %v2811, %v2726
        %v2813 = vmul.f32 %v2811, %v2727
        %2816 = vrot.lane.b32.xlu0 %v2812, 125
        %v2817 = vpop.permute.xlu0 %2816
        %2818 = vrot.lane.b32.xlu0 %v2813, 125
        %v2819 = vpop.permute.xlu0 %2818
        %v2822 = vadd.f32 %v2794, %v2817
        %v2823 = vadd.f32 %v2795, %v2819
        %s2824 = sld [smem:[#allocation8 + $0x5f]]
        %v2825 = vstv %s2824
        %v2826 = vmul.f32 %v2825, %v2726
        %v2827 = vmul.f32 %v2825, %v2727
        %2830 = vrot.lane.b32.xlu0 %v2826, 124
        %v2831 = vpop.permute.xlu0 %2830
        %2832 = vrot.lane.b32.xlu0 %v2827, 124
        %v2833 = vpop.permute.xlu0 %2832
        %v2836 = vadd.f32 %v2808, %v2831
        %v2837 = vadd.f32 %v2809, %v2833
        %s2838 = sld [smem:[#allocation8 + $0xc1]]
        %v2839 = vstv %s2838
        %v2840 = vmul.f32 %v2839, %v2726
        %v2841 = vmul.f32 %v2839, %v2727
        %2844 = vrot.lane.b32.xlu0 %v2840, 124
        %v2845 = vpop.permute.xlu0 %2844
        %2846 = vrot.lane.b32.xlu0 %v2841, 124
        %v2847 = vpop.permute.xlu0 %2846
        %v2850 = vadd.f32 %v2822, %v2845
        %v2851 = vadd.f32 %v2823, %v2847
        %s2852 = sld [smem:[#allocation8 + $0x60]]
        %v2853 = vstv %s2852
        %v2854 = vmul.f32 %v2853, %v2726
        %v2855 = vmul.f32 %v2853, %v2727
        %2858 = vrot.lane.b32.xlu0 %v2854, 123
        %v2859 = vpop.permute.xlu0 %2858
        %2860 = vrot.lane.b32.xlu0 %v2855, 123
        %v2861 = vpop.permute.xlu0 %2860
        %v2864 = vadd.f32 %v2836, %v2859
        %v2865 = vadd.f32 %v2837, %v2861
        %s2866 = sld [smem:[#allocation8 + $0xc2]]
        %v2867 = vstv %s2866
        %v2868 = vmul.f32 %v2867, %v2726
        %v2869 = vmul.f32 %v2867, %v2727
        %2872 = vrot.lane.b32.xlu0 %v2868, 123
        %v2873 = vpop.permute.xlu0 %2872
        %2874 = vrot.lane.b32.xlu0 %v2869, 123
        %v2875 = vpop.permute.xlu0 %2874
        %v2878 = vadd.f32 %v2850, %v2873
        %v2879 = vadd.f32 %v2851, %v2875
        %s2880 = sld [smem:[#allocation8 + $0x61]]
        %v2881 = vstv %s2880
        %v2882 = vmul.f32 %v2881, %v2726
        %v2883 = vmul.f32 %v2881, %v2727
        %2886 = vrot.lane.b32.xlu0 %v2882, 122
        %v2887 = vpop.permute.xlu0 %2886
        %2888 = vrot.lane.b32.xlu0 %v2883, 122
        %v2889 = vpop.permute.xlu0 %2888
        %v2892 = vadd.f32 %v2864, %v2887
        %v2893 = vadd.f32 %v2865, %v2889
        %s2894 = sld [smem:[#allocation8 + $0xc3]]
        %v2895 = vstv %s2894
        %v2896 = vmul.f32 %v2895, %v2726
        %v2897 = vmul.f32 %v2895, %v2727
        %2900 = vrot.lane.b32.xlu0 %v2896, 122
        %v2901 = vpop.permute.xlu0 %2900
        %2902 = vrot.lane.b32.xlu0 %v2897, 122
        %v2903 = vpop.permute.xlu0 %2902
        %v2906 = vadd.f32 %v2878, %v2901
        %v2907 = vadd.f32 %v2879, %v2903
        %s2908 = sld [smem:[#allocation9]]
        %v2909 = vstv %s2908
        %v2910 = vadd.f32 %v2892, %v2909
        %v2911 = vadd.f32 %v2893, %v2909
        %v2912 = vmax.f32 %v2910, 0.0
        %v2913 = vmax.f32 %v2911, 0.0
        %s2914 = sld [smem:[#allocation9 + $0x1]]
        %v2915 = vstv %s2914
        %v2916 = vadd.f32 %v2906, %v2915
        %v2917 = vadd.f32 %v2907, %v2915
        %v2918 = vmax.f32 %v2916, 0.0
        %v2919 = vmax.f32 %v2917, 0.0
        %s2920 = sld [smem:[#allocation11]]
        %v2921 = vstv %s2920
        %v2922 = vmul.f32 %v2921, %v2912
        %v2923 = vmul.f32 %v2921, %v2913
        %s2924 = sld [smem:[#allocation11 + $0x1]]
        %v2925 = vstv %s2924
        %v2926 = vmul.f32 %v2925, %v2918
        %v2927 = vmul.f32 %v2925, %v2919
        %v2928 = vadd.f32 %v2922, %v2926
        %v2929 = vadd.f32 %v2923, %v2927
        %s2930 = sld [smem:[#allocation3]]
        %v2931 = vstv %s2930
        %v2932 = vadd.f32 %v2928, %v2931
        %v2933 = vadd.f32 %v2929, %v2931
        %v2934 = vmul.f32 %v2932, 0.5
        %v2935 = vmul.f32 %v2933, 0.5
        %v2936 = vtanh.pop %v2934
        %v2937 = vtanh.pop %v2935
        %v2938 = vmul.f32 %v2936, 0.5
        %v2939 = vmul.f32 %v2937, 0.5
        %v2940 = vadd.f32 %v2938, 0.5
        %v2941 = vadd.f32 %v2939, 0.5
        %2942 = vst.msk [vmem:[%s282] sm:$0xff] %vm305, %v2940
        %2943 = vst.msk [vmem:[%s282 + $0x8] sm:$0xff] %vm305, %v2941
        %s2944 = sand.u32 %s143, 1
        %s2945 = scalar_lea.sflag [#allocation6], %s2944
        %s2946 = sand.u32 %s143, 1
        %s2947 = smul.addr %s2946, 16
        %s2948 = scalar_lea.vmem [#allocation12], %s2947
        // Predicated region
        $region57: #{spatial_attention_forward.1} parent=39 // pred_check
          %p2949 = pneg %p153
        $region58: #{spatial_attention_forward.1} parent=39 // pred_check_branch
          %2951 = sbr.rel (%p2949) target = $region60
        $region59: #{spatial_attention_forward.1} parent=39 // pred_region
          %s2953 = ssub.s32 256, 256
          %2954 = vsyncadd %s2945, %s2953
          %s2955 = smul.addr %s25, 2
          %s2956 = smul.addr %s2955, 128
          %s2957 = scalar_lea.hbm %s5, %s2956
          %s2958 = sshll.u32 %s2948, 4
          %s2959 = int_to_ptr.vmem [resolvable:$true] %s2958
          %2964 = dma.vmem_to_hbm [thread:$0]  %s2959, 256, %s2957, %s2945, 128, 128, 8
        $region60: #{spatial_attention_forward.1} parent=39 // pred_fallthru
          _
      $region40: #{spatial_attention_forward.1} parent=5 // pred_fallthru
        _
      %p2965 = scmp.le.s32.totalorder 2, %s20
      // Predicated region
      $region61: #{spatial_attention_forward.1} parent=5 // pred_check
        %p2966 = pneg %p2965
      $region62: #{spatial_attention_forward.1} parent=5 // pred_check_branch
        %2968 = sbr.rel (%p2966) target = $region64
      $region63: #{spatial_attention_forward.1} parent=5 // pred_region
        %s2969 = ssub.s32 %s20, 2
        // Predicated region
        $region65: #{spatial_attention_forward.1} parent=63 // pred_check
          %p2970 = pneg %p159
        $region66: #{spatial_attention_forward.1} parent=63 // pred_check_branch
          %2972 = sbr.rel (%p2970) target = $region68
        $region67: #{spatial_attention_forward.1} parent=63 // pred_region
          %s2973 = sand.u32 %s144, 1
          %s2974 = scalar_lea.sflag [#allocation6], %s2973
          %s2975 = sand.u32 %s144, 1
          %s2976 = smul.addr %s2975, 16
          %s2977 = scalar_lea.vmem [#allocation12], %s2976
          %2978 = dma.done %s2974, 256
        $region68: #{spatial_attention_forward.1} parent=63 // pred_fallthru
          _
      $region64: #{spatial_attention_forward.1} parent=5 // pred_fallthru
        _
    $region6: #{spatial_attention_forward.1} parent=1 // loop_footer
      %s24 = sadd.s32 1, %s20
    $region7: #{spatial_attention_forward.1} parent=1 // loop_footer_branch
      %19 = sbr.rel target = $region3
    $region8: #{spatial_attention_forward.1} parent=1 // loop_exit
      _
    %2979 = vsyncpa [#allocation5], 1
    %s2980 = scalar_lea.sflag [#allocation5], 1
    %2981 = vsyncpa %s2980, 1
    %2982 = vsyncpa [#allocation6], 1
    %s2983 = scalar_lea.sflag [#allocation6], 1
    %2984 = vsyncpa %s2983, 1
    %2985 = vsyncpa [#allocation7], 1
    %s2986 = scalar_lea.sflag [#allocation7], 1
    %2987 = vsyncpa %s2986, 1
    %2988 = vsyncpa [#allocation10], 1

</llo_original>
